<compile_context>
chip_gen: v7x
topology: tpu7x:2x2x1
jax: 0.10.0
libtpu: 0.0.40
codegen_flags: <defaults>
</compile_context>

<pallas_src>
import functools
import math

import jax
import jax.numpy as jnp
from jax.experimental import pallas as pl
from jax.experimental.pallas import tpu as pltpu

# ------------------------- hyper-parameters (module defaults) ----------------
M_PIX = 200          # m
DZ = 10              # dz
CH = 96              # ch
NUM_LAYERS = 3
NOISE_SCALE = 1.0
THRESHOLD = 0.1
SAMPLE_SIZE = 1
IMG = 28


# ============================ Pallas kernels ==================================
def _emlp_orbit_kernel(*refs, n_layers, batch):
    """Fused EMLP (ReLU between layers, none on last) + orbit-distance epilogue.

    refs = (x, w1, b1, ..., wL, bL, gs_out, dist_out).
    """
    x_ref = refs[0]
    gs_ref = refs[1 + 2 * n_layers]
    dist_ref = refs[2 + 2 * n_layers]

    h = x_ref[...]
    for li in range(n_layers):
        w_ref = refs[1 + 2 * li]
        b_ref = refs[2 + 2 * li]
        h = jnp.dot(h.astype(jnp.bfloat16), w_ref[...],
                    preferred_element_type=jnp.float32) + b_ref[...]
        if li < n_layers - 1:
            h = jnp.maximum(h, 0.0)
    gs_ref[...] = h                         # raw network output (B, 4)

    # Orbit distance on the RAW columns r0..r3.  This equals torch's
    # InvariantPoly applied to gs.reshape(B,2,2).transpose(-1,-2):
    #   M11=r0, M12=r2, M21=r1, M22=r3  =>  s1=r0^2+r1^2, s2=r2^2+r3^2,
    #   s3=r0*r2+r1*r3, s4=r0*r3-r2*r1 ; target (1,1,0,1); L1 mean over (B,4).
    r0, r1, r2, r3 = h[:, 0:1], h[:, 1:2], h[:, 2:3], h[:, 3:4]
    s1 = r0 * r0 + r1 * r1
    s2 = r2 * r2 + r3 * r3
    s3 = r0 * r2 + r1 * r3
    s4 = r0 * r3 - r2 * r1
    err = (jnp.abs(s1 - 1.0) + jnp.abs(s2 - 1.0)
           + jnp.abs(s3) + jnp.abs(s4 - 1.0))          # (B, 1)
    dist_ref[...] = (jnp.sum(err) / (4.0 * batch)).reshape(1, 1)


def emlp_orbit_pallas(emlp_params, x):
    """x: (B, 3m+2dz) f32; emlp_params: list of (w_bf16, b_row_f32)."""
    B = x.shape[0]
    n = len(emlp_params)
    flat = []
    in_specs = [pl.BlockSpec(x.shape, lambda i: (0, 0))]
    for (w, b) in emlp_params:
        flat.extend([w, b])
        in_specs.append(pl.BlockSpec(w.shape, lambda i: (0, 0)))
        in_specs.append(pl.BlockSpec(b.shape, lambda i: (0, 0)))
    gs, dist = pl.pallas_call(
        functools.partial(_emlp_orbit_kernel, n_layers=n, batch=B),
        out_shape=(jax.ShapeDtypeStruct((B, 4), jnp.float32),
                   jax.ShapeDtypeStruct((1, 1), jnp.float32)),
        grid=(1,),
        in_specs=in_specs,
        out_specs=(pl.BlockSpec((B, 4), lambda i: (0, 0)),
                   pl.BlockSpec((1, 1), lambda i: (0, 0))),
        compiler_params=pltpu.CompilerParams(dimension_semantics=("arbitrary",)),
    )(x, *flat)
    return gs, dist[0, 0]


def _matmul_bias_act_kernel(x_ref, w_ref, b_ref, o_ref, *, relu):
    acc = jnp.dot(x_ref[...].astype(jnp.bfloat16), w_ref[...],
                  preferred_element_type=jnp.float32) + b_ref[...]
    if relu:
        acc = jnp.maximum(acc, 0.0)
    o_ref[...] = acc


def matmul_bias_act_pallas(x, w, b_row, relu=True, tm=512):
    """y = [relu](x @ w + b).  x:(M,K) f32, w:(K,N) bf16, b_row:(1,N) f32.
    M is tiled over a parallel grid (double-buffered, megacore-shardable);
    K/N stay at natural size (block == full array dim), so no pad/slice ops."""
    M, K = x.shape
    K2, N = w.shape
    assert K == K2
    tm = min(tm, M)
    grid_m = pl.cdiv(M, tm)
    return pl.pallas_call(
        functools.partial(_matmul_bias_act_kernel, relu=relu),
        out_shape=jax.ShapeDtypeStruct((M, N), jnp.float32),
        grid=(grid_m,),
        in_specs=[
            pl.BlockSpec((tm, K), lambda i: (i, 0)),
            pl.BlockSpec((K, N), lambda i: (0, 0)),
            pl.BlockSpec((1, N), lambda i: (0, 0)),
        ],
        out_specs=pl.BlockSpec((tm, N), lambda i: (i, 0)),
        compiler_params=pltpu.CompilerParams(dimension_semantics=("parallel",)),
    )(x, w, b_row)


def _fc_head_kernel(x_ref, w1_ref, b1_ref, w2_ref, b2_ref, o_ref):
    h = jnp.dot(x_ref[...].astype(jnp.bfloat16), w1_ref[...],
                preferred_element_type=jnp.float32) + b1_ref[...]
    h = jnp.maximum(h, 0.0)
    o_ref[...] = jnp.dot(h.astype(jnp.bfloat16), w2_ref[...],
                         preferred_element_type=jnp.float32) + b2_ref[...]


def fc_head_pallas(x, w1, b1, w2, b2):
    """Fused fc1 + ReLU + fc2; the hidden layer never leaves the chip."""
    B, K = x.shape
    N1 = w1.shape[1]
    N2 = w2.shape[1]
    return pl.pallas_call(
        _fc_head_kernel,
        out_shape=jax.ShapeDtypeStruct((B, N2), jnp.float32),
        grid=(1,),
        in_specs=[
            pl.BlockSpec((B, K), lambda i: (0, 0)),
            pl.BlockSpec((K, N1), lambda i: (0, 0)),
            pl.BlockSpec((1, N1), lambda i: (0, 0)),
            pl.BlockSpec((N1, N2), lambda i: (0, 0)),
            pl.BlockSpec((1, N2), lambda i: (0, 0)),
        ],
        out_specs=pl.BlockSpec((B, N2), lambda i: (0, 0)),
        compiler_params=pltpu.CompilerParams(dimension_semantics=("arbitrary",)),
    )(x, w1, b1, w2, b2)


# ============================ EquivariantInterface ============================
def get_coords():
    idx1 = jnp.array(list(range(-14, 0)) + list(range(1, 15)), jnp.float32)
    idx1 = jnp.broadcast_to(idx1[None, :], (IMG, IMG))
    idx2 = jnp.array(list(range(14, 0, -1)) + list(range(-1, -15, -1)), jnp.float32)
    idx2 = jnp.broadcast_to(idx2[:, None], (IMG, IMG))
    return jnp.stack([idx1, idx2], axis=0)          # (2, 28, 28)


def get_vec(images):
    B = images.shape[0]
    coords = jnp.broadcast_to(get_coords()[None], (B, 2, IMG, IMG))
    x = jnp.concatenate([coords, images[:, None, :, :]], axis=1)   # (B,3,28,28)
    x = jnp.transpose(x, (0, 2, 3, 1)).reshape(B, IMG * IMG, 3)
    # TODO(synk): torch.sort + index_to_perm permutation-matrix gather has no
    # clean Pallas TPU equivalent; done with argsort/take_along_axis in plain JAX.
    order = jnp.argsort(-x[:, :, 2], axis=1)
    sort_x = jnp.take_along_axis(x, order[:, :, None], axis=1)
    v = sort_x[:, :M_PIX, :]
    mask = v[:, :, 2:3] < THRESHOLD
    v = jnp.where(mask, 0.0, v)
    return v


def sample_noise(key, B):
    angles = jax.random.uniform(key, (B, DZ), minval=0.0, maxval=2.0 * math.pi)
    Z = jnp.stack([jnp.cos(angles), jnp.sin(angles)], axis=1)      # (B, 2, dz)
    return Z * NOISE_SCALE


def formatize_input(v, Z):
    B = v.shape[0]
    coord_flat = v[:, :, :2].reshape(B, 2 * M_PIX)
    Z_flat = jnp.transpose(Z, (0, 2, 1)).reshape(B, 2 * DZ)
    return jnp.concatenate([v[:, :, 2], coord_flat, Z_flat], axis=1)   # (B, 3m+2dz)


def interface_forward(emlp_params, images, key):
    # TODO(synk): EMLPBlock / uniform_rep / SO(2) equivariant bases (emlp lib) are
    # not provided; approximated by a plain MLP with the same widths (620->96->96->96->4).
    B = images.shape[0]
    v = get_vec(images)
    Z = sample_noise(key, B)
    x = formatize_input(v, Z)
    gs_raw, orbit_distance = emlp_orbit_pallas(emlp_params, x)     # (B,4), scalar
    gs = jnp.swapaxes(gs_raw.reshape(B, 2, 2), -1, -2)             # torch transpose(-1,-2)
    return gs, orbit_distance


# ============================ image warp (kornia-like) ========================
def bilinear_warp(images, A):
    # images: (B, H, W); A: (B, 2, 2).  Output(p) = bilinear(Input, A @ (p-c) + c).
    # TODO(synk): rotate_kornia_API is not provided; data-dependent bilinear gather
    # has no clean Pallas TPU equivalent, so the warp is implemented in plain JAX.
    B, H, W = images.shape
    cy, cx = (H - 1) / 2.0, (W - 1) / 2.0
    ys, xs = jnp.meshgrid(jnp.arange(H, dtype=jnp.float32),
                          jnp.arange(W, dtype=jnp.float32), indexing="ij")
    px, py = xs - cx, ys - cy
    sx = A[:, 0, 0][:, None, None] * px + A[:, 0, 1][:, None, None] * py + cx
    sy = A[:, 1, 0][:, None, None] * px + A[:, 1, 1][:, None, None] * py + cy
    x0 = jnp.floor(sx); y0 = jnp.floor(sy)
    x1 = x0 + 1.0; y1 = y0 + 1.0
    wx1 = sx - x0; wx0 = 1.0 - wx1
    wy1 = sy - y0; wy0 = 1.0 - wy1

    def sample(img, yy, xx):
        valid = (xx >= 0) & (xx <= W - 1) & (yy >= 0) & (yy <= H - 1)
        xi = jnp.clip(xx, 0, W - 1).astype(jnp.int32)
        yi = jnp.clip(yy, 0, H - 1).astype(jnp.int32)
        return jnp.where(valid, img[yi, xi], 0.0)

    def per_image(img, a_y0, a_y1, a_x0, a_x1, a_wy0, a_wy1, a_wx0, a_wx1):
        return (sample(img, a_y0, a_x0) * a_wy0 * a_wx0
                + sample(img, a_y0, a_x1) * a_wy0 * a_wx1
                + sample(img, a_y1, a_x0) * a_wy1 * a_wx0
                + sample(img, a_y1, a_x1) * a_wy1 * a_wx1)

    return jax.vmap(per_image)(images, y0, y1, x0, x1, wy0, wy1, wx0, wx1)


# ============================ CNN backbone (NHWC) =============================
def im2col_3x3_nhwc(x):
    # x: (B, H, W, C) -> (B*H*W, 9*C), 'same' padding, stride 1, NO transposes.
    # TODO(synk): fully in-kernel im2col needs a sublane-merging (H,W)->(H*W)
    # reshape of non-8-aligned spatial dims, which Mosaic does not reliably
    # lower; patches are assembled here from NHWC slices instead.
    B, H, W, C = x.shape
    xp = jnp.pad(x, ((0, 0), (1, 1), (1, 1), (0, 0)))
    cols = [xp[:, dy:dy + H, dx:dx + W, :] for dy in range(3) for dx in range(3)]
    patches = jnp.stack(cols, axis=3)                 # (B, H, W, 9, C)
    return patches.reshape(B * H * W, 9 * C)


def maxpool2_nhwc(x):
    B, H, W, C = x.shape
    return x.reshape(B, H // 2, 2, W // 2, 2, C).max(axis=(2, 4))


def cnn_forward(cnn, x_nhwc):
    # TODO(synk): the repo's CNN(dropout, seed) definition is not provided; using a
    # deterministic synthetic conv(1->8)/pool/conv(8->16)/pool/fc(784->64)/fc(64->10).
    # Dropout is an eval-mode identity.
    B = x_nhwc.shape[0]
    h = matmul_bias_act_pallas(im2col_3x3_nhwc(x_nhwc), cnn["c1w"], cnn["c1b"], relu=True)
    h = maxpool2_nhwc(h.reshape(B, IMG, IMG, 8))                      # (B,14,14,8)
    h = matmul_bias_act_pallas(im2col_3x3_nhwc(h), cnn["c2w"], cnn["c2b"], relu=True)
    h = maxpool2_nhwc(h.reshape(B, IMG // 2, IMG // 2, 16))           # (B,7,7,16)
    h = h.reshape(B, -1)                                              # (B, 784)
    return fc_head_pallas(h, cnn["f1w"], cnn["f1b"], cnn["f2w"], cnn["f2b"])


# ============================ InterfacedModel =================================
def interfaced_model_forward(params, images, noise_key):
    B = images.shape[0]
    S = SAMPLE_SIZE
    imgs = jnp.broadcast_to(images, (B, S, IMG, IMG)).reshape(B * S, IMG, IMG)
    gs, orbit_distance = interface_forward(params["emlp"], imgs, noise_key)
    gs_inv = jnp.swapaxes(gs, -1, -2)
    transformed = bilinear_warp(imgs, gs_inv)                         # (B*S, 28, 28)
    logits = cnn_forward(params["cnn"], transformed[..., None])       # NHWC input
    logits = logits.reshape(B, S, 10).mean(axis=1)
    return logits, orbit_distance


# ============================ init + one-time param prep =====================
def init_linear(key, fan_in, fan_out):
    w = jax.random.normal(key, (fan_in, fan_out), jnp.float32) / math.sqrt(fan_in)
    b = jnp.zeros((fan_out,), jnp.float32)
    return w, b


def init_params(key):
    k_emlp, k_c1, k_c2, k_f1, k_f2 = jax.random.split(key, 5)
    dims = [3 * M_PIX + 2 * DZ] + [CH] * NUM_LAYERS + [4]      # 620, 96, 96, 96, 4
    emlp = []
    ks = jax.random.split(k_emlp, len(dims) - 1)
    for kk, din, dout in zip(ks, dims[:-1], dims[1:]):
        emlp.append(init_linear(kk, din, dout))
    cnn = dict(
        c1w=jax.random.normal(k_c1, (8, 1, 3, 3), jnp.float32) / 3.0,
        c1b=jnp.zeros((8,), jnp.float32),
        c2w=jax.random.normal(k_c2, (16, 8, 3, 3), jnp.float32) / math.sqrt(8 * 9),
        c2b=jnp.zeros((16,), jnp.float32),
    )
    cnn["f1w"], cnn["f1b"] = init_linear(k_f1, 16 * 7 * 7, 64)
    cnn["f2w"], cnn["f2b"] = init_linear(k_f2, 64, 10)
    return {"emlp": emlp, "cnn": cnn}


def prepare_params(params):
    """One-time conversion (outside the jitted forward): conv kernels ->
    (9*Cin, Cout) matmul layout matching the NHWC im2col, matmul operands cast
    to bf16 (f32 accumulation in-kernel), biases reshaped to (1, N) rows."""
    emlp = [(w.astype(jnp.bfloat16), b.reshape(1, -1).astype(jnp.float32))
            for (w, b) in params["emlp"]]
    c = params["cnn"]
    cnn = dict(
        c1w=jnp.transpose(c["c1w"], (2, 3, 1, 0)).reshape(9 * 1, 8).astype(jnp.bfloat16),
        c1b=c["c1b"].reshape(1, -1).astype(jnp.float32),
        c2w=jnp.transpose(c["c2w"], (2, 3, 1, 0)).reshape(9 * 8, 16).astype(jnp.bfloat16),
        c2b=c["c2b"].reshape(1, -1).astype(jnp.float32),
        f1w=c["f1w"].astype(jnp.bfloat16),
        f1b=c["f1b"].reshape(1, -1).astype(jnp.float32),
        f2w=c["f2w"].astype(jnp.bfloat16),
        f2b=c["f2b"].reshape(1, -1).astype(jnp.float32),
    )
    return {"emlp": emlp, "cnn": cnn}


if __name__ == "__main__":
    root = jax.random.PRNGKey(0)
    k_img, k_param, k_noise = jax.random.split(root, 3)
    images = jax.random.uniform(k_img, (2, 1, IMG, IMG), jnp.float32)   # MNIST-like [0,1)
    params = prepare_params(init_params(k_param))

    fwd = jax.jit(interfaced_model_forward)
    logits, orbit_distance = fwd(params, images, k_noise)
    logits = jax.block_until_ready(logits)
    orbit_distance = jax.block_until_ready(orbit_distance)

    assert logits.shape == (2, 10) and logits.dtype == jnp.float32
    assert orbit_distance.shape == () and jnp.isfinite(orbit_distance)
    print("KERNEL_OK")
</pallas_src>

<mosaic_0001>
module attributes {stable_mosaic.version = 11 : i64} {
  func.func private @main(%arg0: i32) attributes {dimension_semantics = [#tpu.dimension_semantics<core_parallel>], iteration_bounds = array<i64: 2>, tpu.core_type = #tpu.core_type<sc_scalar_subcore>, window_params = []} {
    return
  }
}

module attributes {stable_mosaic.version = 11 : i64} {
  func.func private @main(%arg0: i32) attributes {dimension_semantics = [#tpu.dimension_semantics<core_parallel>], iteration_bounds = array<i64: 2>, tpu.core_type = #tpu.core_type<sc_scalar_subcore>, window_params = []} {
    return
  }
}

module attributes {stable_mosaic.version = 11 : i64} {
  func.func @_emlp_orbit_kernel(%arg0: i32, %arg1: memref<2x620xf32, #tpu.memory_space<vmem>>, %arg2: memref<620x96xbf16, #tpu.memory_space<vmem>>, %arg3: memref<1x96xf32, #tpu.memory_space<vmem>>, %arg4: memref<96x96xbf16, #tpu.memory_space<vmem>>, %arg5: memref<1x96xf32, #tpu.memory_space<vmem>>, %arg6: memref<96x96xbf16, #tpu.memory_space<vmem>>, %arg7: memref<1x96xf32, #tpu.memory_space<vmem>>, %arg8: memref<96x4xbf16, #tpu.memory_space<vmem>>, %arg9: memref<1x4xf32, #tpu.memory_space<vmem>>, %arg10: memref<2x4xf32, #tpu.memory_space<vmem>>, %arg11: memref<1x1xf32, #tpu.memory_space<vmem>>) attributes {dimension_semantics = [#tpu.dimension_semantics<arbitrary>], iteration_bounds = array<i64: 1>, scalar_prefetch = 0 : i64, scratch_operands = 0 : i64, tpu.core_type = #tpu.core_type<tc>, window_params = [{pipeline_mode = #tpu.pipeline_mode<synchronous>, transform_indices = @transform_0, window_bounds = array<i64: 2, 620>}, {pipeline_mode = #tpu.pipeline_mode<synchronous>, transform_indices = @transform_1, window_bounds = array<i64: 620, 96>}, {pipeline_mode = #tpu.pipeline_mode<synchronous>, transform_indices = @transform_2, window_bounds = array<i64: 1, 96>}, {pipeline_mode = #tpu.pipeline_mode<synchronous>, transform_indices = @transform_3, window_bounds = array<i64: 96, 96>}, {pipeline_mode = #tpu.pipeline_mode<synchronous>, transform_indices = @transform_4, window_bounds = array<i64: 1, 96>}, {pipeline_mode = #tpu.pipeline_mode<synchronous>, transform_indices = @transform_5, window_bounds = array<i64: 96, 96>}, {pipeline_mode = #tpu.pipeline_mode<synchronous>, transform_indices = @transform_6, window_bounds = array<i64: 1, 96>}, {pipeline_mode = #tpu.pipeline_mode<synchronous>, transform_indices = @transform_7, window_bounds = array<i64: 96, 4>}, {pipeline_mode = #tpu.pipeline_mode<synchronous>, transform_indices = @transform_8, window_bounds = array<i64: 1, 4>}, {pipeline_mode = #tpu.pipeline_mode<synchronous>, transform_indices = @transform_9, window_bounds = array<i64: 2, 4>}, {pipeline_mode = #tpu.pipeline_mode<synchronous>, transform_indices = @transform_10, window_bounds = array<i64: 1, 1>}]} {
    %c0 = arith.constant 0 : index
    %c0_0 = arith.constant 0 : index
    %0 = vector.load %arg1[%c0, %c0_0] : memref<2x620xf32, #tpu.memory_space<vmem>>, vector<2x620xf32>
    %1 = arith.truncf %0 : vector<2x620xf32> to vector<2x620xbf16>
    %c0_1 = arith.constant 0 : index
    %c0_2 = arith.constant 0 : index
    %2 = vector.load %arg2[%c0_1, %c0_2] : memref<620x96xbf16, #tpu.memory_space<vmem>>, vector<620x96xbf16>
    %cst = arith.constant dense<0.000000e+00> : vector<2x96xf32>
    %3 = tpu.matmul %1, %2, %cst {dimension_numbers = #tpu.dot_dimension_numbers<[1], [0], [0], [1], [0, 0, 1, 1], [], []>} : vector<2x620xbf16>, vector<620x96xbf16>, vector<2x96xf32> -> vector<2x96xf32>
    %c0_3 = arith.constant 0 : index
    %c0_4 = arith.constant 0 : index
    %4 = vector.load %arg3[%c0_3, %c0_4] : memref<1x96xf32, #tpu.memory_space<vmem>>, vector<1x96xf32>
    %5 = vector.broadcast %4 : vector<1x96xf32> to vector<2x96xf32>
    %6 = arith.addf %3, %5 : vector<2x96xf32>
    %cst_5 = arith.constant 0.000000e+00 : f32
    %7 = vector.broadcast %cst_5 : f32 to vector<2x96xf32>
    %8 = arith.maximumf %6, %7 : vector<2x96xf32>
    %9 = arith.truncf %8 : vector<2x96xf32> to vector<2x96xbf16>
    %c0_6 = arith.constant 0 : index
    %c0_7 = arith.constant 0 : index
    %10 = vector.load %arg4[%c0_6, %c0_7] : memref<96x96xbf16, #tpu.memory_space<vmem>>, vector<96x96xbf16>
    %cst_8 = arith.constant dense<0.000000e+00> : vector<2x96xf32>
    %11 = tpu.matmul %9, %10, %cst_8 {dimension_numbers = #tpu.dot_dimension_numbers<[1], [0], [0], [1], [0, 0, 1, 1], [], []>} : vector<2x96xbf16>, vector<96x96xbf16>, vector<2x96xf32> -> vector<2x96xf32>
    %c0_9 = arith.constant 0 : index
    %c0_10 = arith.constant 0 : index
    %12 = vector.load %arg5[%c0_9, %c0_10] : memref<1x96xf32, #tpu.memory_space<vmem>>, vector<1x96xf32>
    %13 = vector.broadcast %12 : vector<1x96xf32> to vector<2x96xf32>
    %14 = arith.addf %11, %13 : vector<2x96xf32>
    %cst_11 = arith.constant 0.000000e+00 : f32
    %15 = vector.broadcast %cst_11 : f32 to vector<2x96xf32>
    %16 = arith.maximumf %14, %15 : vector<2x96xf32>
    %17 = arith.truncf %16 : vector<2x96xf32> to vector<2x96xbf16>
    %c0_12 = arith.constant 0 : index
    %c0_13 = arith.constant 0 : index
    %18 = vector.load %arg6[%c0_12, %c0_13] : memref<96x96xbf16, #tpu.memory_space<vmem>>, vector<96x96xbf16>
    %cst_14 = arith.constant dense<0.000000e+00> : vector<2x96xf32>
    %19 = tpu.matmul %17, %18, %cst_14 {dimension_numbers = #tpu.dot_dimension_numbers<[1], [0], [0], [1], [0, 0, 1, 1], [], []>} : vector<2x96xbf16>, vector<96x96xbf16>, vector<2x96xf32> -> vector<2x96xf32>
    %c0_15 = arith.constant 0 : index
    %c0_16 = arith.constant 0 : index
    %20 = vector.load %arg7[%c0_15, %c0_16] : memref<1x96xf32, #tpu.memory_space<vmem>>, vector<1x96xf32>
    %21 = vector.broadcast %20 : vector<1x96xf32> to vector<2x96xf32>
    %22 = arith.addf %19, %21 : vector<2x96xf32>
    %cst_17 = arith.constant 0.000000e+00 : f32
    %23 = vector.broadcast %cst_17 : f32 to vector<2x96xf32>
    %24 = arith.maximumf %22, %23 : vector<2x96xf32>
    %25 = arith.truncf %24 : vector<2x96xf32> to vector<2x96xbf16>
    %c0_18 = arith.constant 0 : index
    %c0_19 = arith.constant 0 : index
    %26 = vector.load %arg8[%c0_18, %c0_19] : memref<96x4xbf16, #tpu.memory_space<vmem>>, vector<96x4xbf16>
    %cst_20 = arith.constant dense<0.000000e+00> : vector<2x4xf32>
    %27 = tpu.matmul %25, %26, %cst_20 {dimension_numbers = #tpu.dot_dimension_numbers<[1], [0], [0], [1], [0, 0, 1, 1], [], []>} : vector<2x96xbf16>, vector<96x4xbf16>, vector<2x4xf32> -> vector<2x4xf32>
    %c0_21 = arith.constant 0 : index
    %c0_22 = arith.constant 0 : index
    %28 = vector.load %arg9[%c0_21, %c0_22] : memref<1x4xf32, #tpu.memory_space<vmem>>, vector<1x4xf32>
    %29 = vector.broadcast %28 : vector<1x4xf32> to vector<2x4xf32>
    %30 = arith.addf %27, %29 : vector<2x4xf32>
    %c0_23 = arith.constant 0 : index
    %c0_24 = arith.constant 0 : index
    %31 = vector.load %arg10[%c0_23, %c0_24] : memref<2x4xf32, #tpu.memory_space<vmem>>, vector<2x4xf32>
    tpu.vector_store %arg10[%c0_23, %c0_24], %30 {strides = array<i32>} : memref<2x4xf32, #tpu.memory_space<vmem>>, vector<2x4xf32>,
    %32 = vector.extract_strided_slice %30 {offsets = [0, 0], sizes = [2, 1], strides = [1, 1]} : vector<2x4xf32> to vector<2x1xf32>
    %33 = vector.extract_strided_slice %30 {offsets = [0, 1], sizes = [2, 1], strides = [1, 1]} : vector<2x4xf32> to vector<2x1xf32>
    %34 = vector.extract_strided_slice %30 {offsets = [0, 2], sizes = [2, 1], strides = [1, 1]} : vector<2x4xf32> to vector<2x1xf32>
    %35 = vector.extract_strided_slice %30 {offsets = [0, 3], sizes = [2, 1], strides = [1, 1]} : vector<2x4xf32> to vector<2x1xf32>
    %36 = arith.mulf %32, %32 : vector<2x1xf32>
    %37 = arith.mulf %33, %33 : vector<2x1xf32>
    %38 = arith.addf %36, %37 : vector<2x1xf32>
    %39 = arith.mulf %34, %34 : vector<2x1xf32>
    %40 = arith.mulf %35, %35 : vector<2x1xf32>
    %41 = arith.addf %39, %40 : vector<2x1xf32>
    %42 = arith.mulf %32, %34 : vector<2x1xf32>
    %43 = arith.mulf %33, %35 : vector<2x1xf32>
    %44 = arith.addf %42, %43 : vector<2x1xf32>
    %45 = arith.mulf %32, %35 : vector<2x1xf32>
    %46 = arith.mulf %34, %33 : vector<2x1xf32>
    %47 = arith.subf %45, %46 : vector<2x1xf32>
    %cst_25 = arith.constant 1.000000e+00 : f32
    %48 = vector.broadcast %cst_25 : f32 to vector<2x1xf32>
    %49 = arith.subf %38, %48 : vector<2x1xf32>
    %50 = math.absf %49 : vector<2x1xf32>
    %cst_26 = arith.constant 1.000000e+00 : f32
    %51 = vector.broadcast %cst_26 : f32 to vector<2x1xf32>
    %52 = arith.subf %41, %51 : vector<2x1xf32>
    %53 = math.absf %52 : vector<2x1xf32>
    %54 = arith.addf %50, %53 : vector<2x1xf32>
    %55 = math.absf %44 : vector<2x1xf32>
    %56 = arith.addf %54, %55 : vector<2x1xf32>
    %cst_27 = arith.constant 1.000000e+00 : f32
    %57 = vector.broadcast %cst_27 : f32 to vector<2x1xf32>
    %58 = arith.subf %47, %57 : vector<2x1xf32>
    %59 = math.absf %58 : vector<2x1xf32>
    %60 = arith.addf %56, %59 : vector<2x1xf32>
    %61 = vector.shape_cast %60 : vector<2x1xf32> to vector<1x2x1xf32>
    %cst_28 = arith.constant dense<0.000000e+00> : vector<1xf32>
    %62 = vector.multi_reduction <add>, %61, %cst_28 [1, 2] : vector<1x2x1xf32> to vector<1xf32>
    %63 = vector.shape_cast %62 : vector<1xf32> to vector<1x1x1xf32>
    %64 = vector.extract %63[0, 0, 0] : f32 from vector<1x1x1xf32>
    %cst_29 = arith.constant 8.000000e+00 : f32
    %65 = arith.divf %64, %cst_29 : f32
    %66 = vector.broadcast %65 : f32 to vector<1x1xf32>
    %c0_30 = arith.constant 0 : index
    %c0_31 = arith.constant 0 : index
    %67 = vector.load %arg11[%c0_30, %c0_31] : memref<1x1xf32, #tpu.memory_space<vmem>>, vector<1x1xf32>
    tpu.vector_store %arg11[%c0_30, %c0_31], %66 {strides = array<i32>} : memref<1x1xf32, #tpu.memory_space<vmem>>, vector<1x1xf32>,
    return
  }
  func.func @transform_0(%arg0: i32) -> (i32, i32) {
    %c0_i32 = arith.constant 0 : i32
    %c0_i32_0 = arith.constant 0 : i32
    %c0_i32_1 = arith.constant 0 : i32
    return %c0_i32, %c0_i32_0 : i32, i32
  }
  func.func @transform_1(%arg0: i32) -> (i32, i32) {
    %c0_i32 = arith.constant 0 : i32
    %c0_i32_0 = arith.constant 0 : i32
    %c0_i32_1 = arith.constant 0 : i32
    return %c0_i32, %c0_i32_0 : i32, i32
  }
  func.func @transform_2(%arg0: i32) -> (i32, i32) {
    %c0_i32 = arith.constant 0 : i32
    %c0_i32_0 = arith.constant 0 : i32
    %c0_i32_1 = arith.constant 0 : i32
    return %c0_i32, %c0_i32_0 : i32, i32
  }
  func.func @transform_3(%arg0: i32) -> (i32, i32) {
    %c0_i32 = arith.constant 0 : i32
    %c0_i32_0 = arith.constant 0 : i32
    %c0_i32_1 = arith.constant 0 : i32
    return %c0_i32, %c0_i32_0 : i32, i32
  }
  func.func @transform_4(%arg0: i32) -> (i32, i32) {
    %c0_i32 = arith.constant 0 : i32
    %c0_i32_0 = arith.constant 0 : i32
    %c0_i32_1 = arith.constant 0 : i32
    return %c0_i32, %c0_i32_0 : i32, i32
  }
  func.func @transform_5(%arg0: i32) -> (i32, i32) {
    %c0_i32 = arith.constant 0 : i32
    %c0_i32_0 = arith.constant 0 : i32
    %c0_i32_1 = arith.constant 0 : i32
    return %c0_i32, %c0_i32_0 : i32, i32
  }
  func.func @transform_6(%arg0: i32) -> (i32, i32) {
    %c0_i32 = arith.constant 0 : i32
    %c0_i32_0 = arith.constant 0 : i32
    %c0_i32_1 = arith.constant 0 : i32
    return %c0_i32, %c0_i32_0 : i32, i32
  }
  func.func @transform_7(%arg0: i32) -> (i32, i32) {
    %c0_i32 = arith.constant 0 : i32
    %c0_i32_0 = arith.constant 0 : i32
    %c0_i32_1 = arith.constant 0 : i32
    return %c0_i32, %c0_i32_0 : i32, i32
  }
  func.func @transform_8(%arg0: i32) -> (i32, i32) {
    %c0_i32 = arith.constant 0 : i32
    %c0_i32_0 = arith.constant 0 : i32
    %c0_i32_1 = arith.constant 0 : i32
    return %c0_i32, %c0_i32_0 : i32, i32
  }
  func.func @transform_9(%arg0: i32) -> (i32, i32) {
    %c0_i32 = arith.constant 0 : i32
    %c0_i32_0 = arith.constant 0 : i32
    %c0_i32_1 = arith.constant 0 : i32
    return %c0_i32, %c0_i32_0 : i32, i32
  }
  func.func @transform_10(%arg0: i32) -> (i32, i32) {
    %c0_i32 = arith.constant 0 : i32
    %c0_i32_0 = arith.constant 0 : i32
    %c0_i32_1 = arith.constant 0 : i32
    return %c0_i32, %c0_i32_0 : i32, i32
  }
}

module attributes {stable_mosaic.version = 11 : i64} {
  func.func @_matmul_bias_act_kernel(%arg0: i32, %arg1: memref<512x9xf32, #tpu.memory_space<vmem>>, %arg2: memref<9x8xbf16, #tpu.memory_space<vmem>>, %arg3: memref<1x8xf32, #tpu.memory_space<vmem>>, %arg4: memref<512x8xf32, #tpu.memory_space<vmem>>) attributes {dimension_semantics = [#tpu.dimension_semantics<parallel>], iteration_bounds = array<i64: 4>, scalar_prefetch = 0 : i64, scratch_operands = 0 : i64, tpu.core_type = #tpu.core_type<tc>, window_params = [{transform_indices = @transform_0, window_bounds = array<i64: 512, 9>}, {pipeline_mode = #tpu.pipeline_mode<synchronous>, transform_indices = @transform_1, window_bounds = array<i64: 9, 8>}, {pipeline_mode = #tpu.pipeline_mode<synchronous>, transform_indices = @transform_2, window_bounds = array<i64: 1, 8>}, {transform_indices = @transform_3, window_bounds = array<i64: 512, 8>}]} {
    %c0 = arith.constant 0 : index
    %c0_0 = arith.constant 0 : index
    %0 = vector.load %arg1[%c0, %c0_0] : memref<512x9xf32, #tpu.memory_space<vmem>>, vector<512x9xf32>
    %1 = arith.truncf %0 : vector<512x9xf32> to vector<512x9xbf16>
    %c0_1 = arith.constant 0 : index
    %c0_2 = arith.constant 0 : index
    %2 = vector.load %arg2[%c0_1, %c0_2] : memref<9x8xbf16, #tpu.memory_space<vmem>>, vector<9x8xbf16>
    %cst = arith.constant dense<0.000000e+00> : vector<512x8xf32>
    %3 = tpu.matmul %1, %2, %cst {dimension_numbers = #tpu.dot_dimension_numbers<[1], [0], [0], [1], [0, 0, 1, 1], [], []>} : vector<512x9xbf16>, vector<9x8xbf16>, vector<512x8xf32> -> vector<512x8xf32>
    %c0_3 = arith.constant 0 : index
    %c0_4 = arith.constant 0 : index
    %4 = vector.load %arg3[%c0_3, %c0_4] : memref<1x8xf32, #tpu.memory_space<vmem>>, vector<1x8xf32>
    %5 = vector.broadcast %4 : vector<1x8xf32> to vector<512x8xf32>
    %6 = arith.addf %3, %5 : vector<512x8xf32>
    %cst_5 = arith.constant 0.000000e+00 : f32
    %7 = vector.broadcast %cst_5 : f32 to vector<512x8xf32>
    %8 = arith.maximumf %6, %7 : vector<512x8xf32>
    %c0_6 = arith.constant 0 : index
    %c0_7 = arith.constant 0 : index
    %9 = vector.load %arg4[%c0_6, %c0_7] : memref<512x8xf32, #tpu.memory_space<vmem>>, vector<512x8xf32>
    tpu.vector_store %arg4[%c0_6, %c0_7], %8 {strides = array<i32>} : memref<512x8xf32, #tpu.memory_space<vmem>>, vector<512x8xf32>,
    return
  }
  func.func @transform_0(%arg0: i32) -> (i32, i32) {
    %c0_i32 = arith.constant 0 : i32
    %c0_i32_0 = arith.constant 0 : i32
    return %arg0, %c0_i32 : i32, i32
  }
  func.func @transform_1(%arg0: i32) -> (i32, i32) {
    %c0_i32 = arith.constant 0 : i32
    %c0_i32_0 = arith.constant 0 : i32
    %c0_i32_1 = arith.constant 0 : i32
    return %c0_i32, %c0_i32_0 : i32, i32
  }
  func.func @transform_2(%arg0: i32) -> (i32, i32) {
    %c0_i32 = arith.constant 0 : i32
    %c0_i32_0 = arith.constant 0 : i32
    %c0_i32_1 = arith.constant 0 : i32
    return %c0_i32, %c0_i32_0 : i32, i32
  }
  func.func @transform_3(%arg0: i32) -> (i32, i32) {
    %c0_i32 = arith.constant 0 : i32
    %c0_i32_0 = arith.constant 0 : i32
    return %arg0, %c0_i32 : i32, i32
  }
}

module attributes {stable_mosaic.version = 11 : i64} {
  func.func @_matmul_bias_act_kernel(%arg0: i32, %arg1: memref<392x72xf32, #tpu.memory_space<vmem>>, %arg2: memref<72x16xbf16, #tpu.memory_space<vmem>>, %arg3: memref<1x16xf32, #tpu.memory_space<vmem>>, %arg4: memref<392x16xf32, #tpu.memory_space<vmem>>) attributes {dimension_semantics = [#tpu.dimension_semantics<parallel>], iteration_bounds = array<i64: 1>, scalar_prefetch = 0 : i64, scratch_operands = 0 : i64, tpu.core_type = #tpu.core_type<tc>, window_params = [{transform_indices = @transform_0, window_bounds = array<i64: 392, 72>}, {pipeline_mode = #tpu.pipeline_mode<synchronous>, transform_indices = @transform_1, window_bounds = array<i64: 72, 16>}, {pipeline_mode = #tpu.pipeline_mode<synchronous>, transform_indices = @transform_2, window_bounds = array<i64: 1, 16>}, {transform_indices = @transform_3, window_bounds = array<i64: 392, 16>}]} {
    %c0 = arith.constant 0 : index
    %c0_0 = arith.constant 0 : index
    %0 = vector.load %arg1[%c0, %c0_0] : memref<392x72xf32, #tpu.memory_space<vmem>>, vector<392x72xf32>
    %1 = arith.truncf %0 : vector<392x72xf32> to vector<392x72xbf16>
    %c0_1 = arith.constant 0 : index
    %c0_2 = arith.constant 0 : index
    %2 = vector.load %arg2[%c0_1, %c0_2] : memref<72x16xbf16, #tpu.memory_space<vmem>>, vector<72x16xbf16>
    %cst = arith.constant dense<0.000000e+00> : vector<392x16xf32>
    %3 = tpu.matmul %1, %2, %cst {dimension_numbers = #tpu.dot_dimension_numbers<[1], [0], [0], [1], [0, 0, 1, 1], [], []>} : vector<392x72xbf16>, vector<72x16xbf16>, vector<392x16xf32> -> vector<392x16xf32>
    %c0_3 = arith.constant 0 : index
    %c0_4 = arith.constant 0 : index
    %4 = vector.load %arg3[%c0_3, %c0_4] : memref<1x16xf32, #tpu.memory_space<vmem>>, vector<1x16xf32>
    %5 = vector.broadcast %4 : vector<1x16xf32> to vector<392x16xf32>
    %6 = arith.addf %3, %5 : vector<392x16xf32>
    %cst_5 = arith.constant 0.000000e+00 : f32
    %7 = vector.broadcast %cst_5 : f32 to vector<392x16xf32>
    %8 = arith.maximumf %6, %7 : vector<392x16xf32>
    %c0_6 = arith.constant 0 : index
    %c0_7 = arith.constant 0 : index
    %9 = vector.load %arg4[%c0_6, %c0_7] : memref<392x16xf32, #tpu.memory_space<vmem>>, vector<392x16xf32>
    tpu.vector_store %arg4[%c0_6, %c0_7], %8 {strides = array<i32>} : memref<392x16xf32, #tpu.memory_space<vmem>>, vector<392x16xf32>,
    return
  }
  func.func @transform_0(%arg0: i32) -> (i32, i32) {
    %c0_i32 = arith.constant 0 : i32
    %c0_i32_0 = arith.constant 0 : i32
    return %arg0, %c0_i32 : i32, i32
  }
  func.func @transform_1(%arg0: i32) -> (i32, i32) {
    %c0_i32 = arith.constant 0 : i32
    %c0_i32_0 = arith.constant 0 : i32
    %c0_i32_1 = arith.constant 0 : i32
    return %c0_i32, %c0_i32_0 : i32, i32
  }
  func.func @transform_2(%arg0: i32) -> (i32, i32) {
    %c0_i32 = arith.constant 0 : i32
    %c0_i32_0 = arith.constant 0 : i32
    %c0_i32_1 = arith.constant 0 : i32
    return %c0_i32, %c0_i32_0 : i32, i32
  }
  func.func @transform_3(%arg0: i32) -> (i32, i32) {
    %c0_i32 = arith.constant 0 : i32
    %c0_i32_0 = arith.constant 0 : i32
    return %arg0, %c0_i32 : i32, i32
  }
}

module attributes {stable_mosaic.version = 11 : i64} {
  func.func @_fc_head_kernel(%arg0: i32, %arg1: memref<2x784xf32, #tpu.memory_space<vmem>>, %arg2: memref<784x64xbf16, #tpu.memory_space<vmem>>, %arg3: memref<1x64xf32, #tpu.memory_space<vmem>>, %arg4: memref<64x10xbf16, #tpu.memory_space<vmem>>, %arg5: memref<1x10xf32, #tpu.memory_space<vmem>>, %arg6: memref<2x10xf32, #tpu.memory_space<vmem>>) attributes {dimension_semantics = [#tpu.dimension_semantics<arbitrary>], iteration_bounds = array<i64: 1>, scalar_prefetch = 0 : i64, scratch_operands = 0 : i64, tpu.core_type = #tpu.core_type<tc>, window_params = [{pipeline_mode = #tpu.pipeline_mode<synchronous>, transform_indices = @transform_0, window_bounds = array<i64: 2, 784>}, {pipeline_mode = #tpu.pipeline_mode<synchronous>, transform_indices = @transform_1, window_bounds = array<i64: 784, 64>}, {pipeline_mode = #tpu.pipeline_mode<synchronous>, transform_indices = @transform_2, window_bounds = array<i64: 1, 64>}, {pipeline_mode = #tpu.pipeline_mode<synchronous>, transform_indices = @transform_3, window_bounds = array<i64: 64, 10>}, {pipeline_mode = #tpu.pipeline_mode<synchronous>, transform_indices = @transform_4, window_bounds = array<i64: 1, 10>}, {pipeline_mode = #tpu.pipeline_mode<synchronous>, transform_indices = @transform_5, window_bounds = array<i64: 2, 10>}]} {
    %c0 = arith.constant 0 : index
    %c0_0 = arith.constant 0 : index
    %0 = vector.load %arg1[%c0, %c0_0] : memref<2x784xf32, #tpu.memory_space<vmem>>, vector<2x784xf32>
    %1 = arith.truncf %0 : vector<2x784xf32> to vector<2x784xbf16>
    %c0_1 = arith.constant 0 : index
    %c0_2 = arith.constant 0 : index
    %2 = vector.load %arg2[%c0_1, %c0_2] : memref<784x64xbf16, #tpu.memory_space<vmem>>, vector<784x64xbf16>
    %cst = arith.constant dense<0.000000e+00> : vector<2x64xf32>
    %3 = tpu.matmul %1, %2, %cst {dimension_numbers = #tpu.dot_dimension_numbers<[1], [0], [0], [1], [0, 0, 1, 1], [], []>} : vector<2x784xbf16>, vector<784x64xbf16>, vector<2x64xf32> -> vector<2x64xf32>
    %c0_3 = arith.constant 0 : index
    %c0_4 = arith.constant 0 : index
    %4 = vector.load %arg3[%c0_3, %c0_4] : memref<1x64xf32, #tpu.memory_space<vmem>>, vector<1x64xf32>
    %5 = vector.broadcast %4 : vector<1x64xf32> to vector<2x64xf32>
    %6 = arith.addf %3, %5 : vector<2x64xf32>
    %cst_5 = arith.constant 0.000000e+00 : f32
    %7 = vector.broadcast %cst_5 : f32 to vector<2x64xf32>
    %8 = arith.maximumf %6, %7 : vector<2x64xf32>
    %9 = arith.truncf %8 : vector<2x64xf32> to vector<2x64xbf16>
    %c0_6 = arith.constant 0 : index
    %c0_7 = arith.constant 0 : index
    %10 = vector.load %arg4[%c0_6, %c0_7] : memref<64x10xbf16, #tpu.memory_space<vmem>>, vector<64x10xbf16>
    %cst_8 = arith.constant dense<0.000000e+00> : vector<2x10xf32>
    %11 = tpu.matmul %9, %10, %cst_8 {dimension_numbers = #tpu.dot_dimension_numbers<[1], [0], [0], [1], [0, 0, 1, 1], [], []>} : vector<2x64xbf16>, vector<64x10xbf16>, vector<2x10xf32> -> vector<2x10xf32>
    %c0_9 = arith.constant 0 : index
    %c0_10 = arith.constant 0 : index
    %12 = vector.load %arg5[%c0_9, %c0_10] : memref<1x10xf32, #tpu.memory_space<vmem>>, vector<1x10xf32>
    %13 = vector.broadcast %12 : vector<1x10xf32> to vector<2x10xf32>
    %14 = arith.addf %11, %13 : vector<2x10xf32>
    %c0_11 = arith.constant 0 : index
    %c0_12 = arith.constant 0 : index
    %15 = vector.load %arg6[%c0_11, %c0_12] : memref<2x10xf32, #tpu.memory_space<vmem>>, vector<2x10xf32>
    tpu.vector_store %arg6[%c0_11, %c0_12], %14 {strides = array<i32>} : memref<2x10xf32, #tpu.memory_space<vmem>>, vector<2x10xf32>,
    return
  }
  func.func @transform_0(%arg0: i32) -> (i32, i32) {
    %c0_i32 = arith.constant 0 : i32
    %c0_i32_0 = arith.constant 0 : i32
    %c0_i32_1 = arith.constant 0 : i32
    return %c0_i32, %c0_i32_0 : i32, i32
  }
  func.func @transform_1(%arg0: i32) -> (i32, i32) {
    %c0_i32 = arith.constant 0 : i32
    %c0_i32_0 = arith.constant 0 : i32
    %c0_i32_1 = arith.constant 0 : i32
    return %c0_i32, %c0_i32_0 : i32, i32
  }
  func.func @transform_2(%arg0: i32) -> (i32, i32) {
    %c0_i32 = arith.constant 0 : i32
    %c0_i32_0 = arith.constant 0 : i32
    %c0_i32_1 = arith.constant 0 : i32
    return %c0_i32, %c0_i32_0 : i32, i32
  }
  func.func @transform_3(%arg0: i32) -> (i32, i32) {
    %c0_i32 = arith.constant 0 : i32
    %c0_i32_0 = arith.constant 0 : i32
    %c0_i32_1 = arith.constant 0 : i32
    return %c0_i32, %c0_i32_0 : i32, i32
  }
  func.func @transform_4(%arg0: i32) -> (i32, i32) {
    %c0_i32 = arith.constant 0 : i32
    %c0_i32_0 = arith.constant 0 : i32
    %c0_i32_1 = arith.constant 0 : i32
    return %c0_i32, %c0_i32_0 : i32, i32
  }
  func.func @transform_5(%arg0: i32) -> (i32, i32) {
    %c0_i32 = arith.constant 0 : i32
    %c0_i32_0 = arith.constant 0 : i32
    %c0_i32_1 = arith.constant 0 : i32
    return %c0_i32, %c0_i32_0 : i32, i32
  }
}

</mosaic_0001>

<llo_original>
// kernel: interfaced_model_forward.4
$region0: #{interfaced_model_forward.4}
  #allocation0 [shape = 'u32[]', space=smem, size = 0x4, offset = 0x4, fixed_abs, tag = 'smem constant byte address 0x4 - core index']
  #allocation1 [shape = 'u32[144,128]{1,0:T(1,128)}', space=vmem, size = 0x12000, scoped, tag = 'internal scratch']
  %s0 = inlined_call_operand.vmem [shape: f32[2,620], index: 0, kind: input, shape index: {}]
  %s1 = inlined_call_operand.vmem [shape: bf16[620,96], index: 1, kind: input, shape index: {}]
  %s2 = inlined_call_operand.vmem [shape: f32[1,96], index: 2, kind: input, shape index: {}]
  %s3 = inlined_call_operand.vmem [shape: bf16[96,96], index: 3, kind: input, shape index: {}]
  %s4 = inlined_call_operand.vmem [shape: f32[1,96], index: 4, kind: input, shape index: {}]
  %s5 = inlined_call_operand.vmem [shape: bf16[96,96], index: 5, kind: input, shape index: {}]
  %s6 = inlined_call_operand.vmem [shape: f32[1,96], index: 6, kind: input, shape index: {}]
  %s7 = inlined_call_operand.vmem [shape: bf16[96,4], index: 7, kind: input, shape index: {}]
  %s8 = inlined_call_operand.vmem [shape: f32[1,4], index: 8, kind: input, shape index: {}]
  %s9 = inlined_call_operand.vmem [shape: f32[2,4], index: 9, kind: output, shape index: {0}]
  %s10 = inlined_call_operand.hbm [shape: f32[1,1], index: 10, kind: output, shape index: {1}]
  %11 = xla_tuple %s9, %s10
  %s12 = sld [smem:[#allocation0]]
  $region54: #{interfaced_model_forward.4} parent=0
    _
  %s14 = ssub.s32 1, %s12
  %s15 = scalar_select 0, %s14, %s12
  $region1: #{interfaced_model_forward.4} parent=0
    #allocation2 [shape = 'u8[512]{0}', space=vmem, size = 0x400, scoped, tag = 'output window, operand 1, single buffered']
    #allocation3 [shape = 's32[1]{0}', space=sflag, size = 0x4, scoped, tag = 'scoped memory for interfaced_model_forward.4']
    %16 = vsyncpa [#allocation3], 0
    // Predicated region
    $region2: #{interfaced_model_forward.4} parent=1 // pred_check
      _
    $region3: #{interfaced_model_forward.4} parent=1 // pred_check_branch
      %18 = sbr.rel (0) target = $region5
    $region4: #{interfaced_model_forward.4} parent=1 // pred_region
      _
    $region5: #{interfaced_model_forward.4} parent=1 // pred_fallthru
      _
    // Predicated region
    $region6: #{interfaced_model_forward.4} parent=1 // pred_check
      _
    $region7: #{interfaced_model_forward.4} parent=1 // pred_check_branch
      %20 = sbr.rel (0) target = $region9
    $region8: #{interfaced_model_forward.4} parent=1 // pred_region
      _
    $region9: #{interfaced_model_forward.4} parent=1 // pred_fallthru
      _
    // Predicated region
    $region10: #{interfaced_model_forward.4} parent=1 // pred_check
      _
    $region11: #{interfaced_model_forward.4} parent=1 // pred_check_branch
      %22 = sbr.rel (0) target = $region13
    $region12: #{interfaced_model_forward.4} parent=1 // pred_region
      _
    $region13: #{interfaced_model_forward.4} parent=1 // pred_fallthru
      _
    // Predicated region
    $region14: #{interfaced_model_forward.4} parent=1 // pred_check
      _
    $region15: #{interfaced_model_forward.4} parent=1 // pred_check_branch
      %24 = sbr.rel (0) target = $region17
    $region16: #{interfaced_model_forward.4} parent=1 // pred_region
      _
    $region17: #{interfaced_model_forward.4} parent=1 // pred_fallthru
      _
    // Predicated region
    $region18: #{interfaced_model_forward.4} parent=1 // pred_check
      _
    $region19: #{interfaced_model_forward.4} parent=1 // pred_check_branch
      %26 = sbr.rel (0) target = $region21
    $region20: #{interfaced_model_forward.4} parent=1 // pred_region
      _
    $region21: #{interfaced_model_forward.4} parent=1 // pred_fallthru
      _
    // Predicated region
    $region22: #{interfaced_model_forward.4} parent=1 // pred_check
      _
    $region23: #{interfaced_model_forward.4} parent=1 // pred_check_branch
      %28 = sbr.rel (0) target = $region25
    $region24: #{interfaced_model_forward.4} parent=1 // pred_region
      _
    $region25: #{interfaced_model_forward.4} parent=1 // pred_fallthru
      _
    // Predicated region
    $region26: #{interfaced_model_forward.4} parent=1 // pred_check
      _
    $region27: #{interfaced_model_forward.4} parent=1 // pred_check_branch
      %30 = sbr.rel (0) target = $region29
    $region28: #{interfaced_model_forward.4} parent=1 // pred_region
      _
    $region29: #{interfaced_model_forward.4} parent=1 // pred_fallthru
      _
    // Predicated region
    $region30: #{interfaced_model_forward.4} parent=1 // pred_check
      _
    $region31: #{interfaced_model_forward.4} parent=1 // pred_check_branch
      %32 = sbr.rel (0) target = $region33
    $region32: #{interfaced_model_forward.4} parent=1 // pred_region
      _
    $region33: #{interfaced_model_forward.4} parent=1 // pred_fallthru
      _
    // Predicated region
    $region34: #{interfaced_model_forward.4} parent=1 // pred_check
      _
    $region35: #{interfaced_model_forward.4} parent=1 // pred_check_branch
      %34 = sbr.rel (0) target = $region37
    $region36: #{interfaced_model_forward.4} parent=1 // pred_region
      _
    $region37: #{interfaced_model_forward.4} parent=1 // pred_fallthru
      _
    %v36 = vld [vmem:[%s0] sm:$0xff]
    %v37 = vld [vmem:[%s0 + $0x8] sm:$0x3]
    %v40 = vcombine.high %v36, %v36
    %v42 = vunpack.c.l.s4 1983009808
    %v43 = vunpack.c.0.s8 %v42
    %v44 = vlaneseq
    %v45 = vshrl.u32 %v44, 7
    %v46 = vsub.s32 %v43, %v45
    %v47 = vrot.slane %v36, %v46
    %v49 = vunpack.c.l.s4 1983009808
    %v50 = vunpack.c.0.s8 %v49
    %v51 = vlaneseq
    %v52 = vshrl.u32 %v51, 7
    %v53 = vsub.s32 %v50, %v52
    %v54 = vrot.slane %v40, %v53
    %v55 = vcombine.high %v47, %v47
    %v56 = vcombine.high %v54, %v54
    %v58 = vunpack.c.l.s4 1983009808
    %v59 = vunpack.c.0.s8 %v58
    %v60 = vlaneseq
    %v61 = vshrl.u32 %v60, 7
    %v62 = vsub.s32 %v59, %v61
    %v63 = vrot.slane %v37, %v62
    %v69 = vpack.c.bf16 %v47, %v47
    %v70 = vpack.c.bf16 %v55, %v55
    %v71 = vpack.c.bf16 %v54, %v54
    %v72 = vpack.c.bf16 %v56, %v56
    %v73 = vpack.c.bf16 %v63, %v63
    %v74 = vld [vmem:[%s1] sm:$0xf]
    %v75 = vld [vmem:[%s1 + $0x4] sm:$0xf]
    %v76 = vld [vmem:[%s1 + $0x8] sm:$0xf]
    %v77 = vld [vmem:[%s1 + $0xc] sm:$0xf]
    %v78 = vld [vmem:[%s1 + $0x10] sm:$0xf]
    %v79 = vld [vmem:[%s1 + $0x14] sm:$0xf]
    %v80 = vld [vmem:[%s1 + $0x18] sm:$0xf]
    %v81 = vld [vmem:[%s1 + $0x1c] sm:$0xf]
    %v82 = vld [vmem:[%s1 + $0x20] sm:$0xf]
    %v83 = vld [vmem:[%s1 + $0x24] sm:$0xf]
    %v84 = vld [vmem:[%s1 + $0x28] sm:$0xf]
    %v85 = vld [vmem:[%s1 + $0x2c] sm:$0xf]
    %v86 = vld [vmem:[%s1 + $0x30] sm:$0xf]
    %v87 = vld [vmem:[%s1 + $0x34] sm:$0xf]
    %v88 = vld [vmem:[%s1 + $0x38] sm:$0xf]
    %v89 = vld [vmem:[%s1 + $0x3c] sm:$0xf]
    %v90 = vld [vmem:[%s1 + $0x40] sm:$0xf]
    %v91 = vld [vmem:[%s1 + $0x44] sm:$0xf]
    %v92 = vld [vmem:[%s1 + $0x48] sm:$0xf]
    %v93 = vld [vmem:[%s1 + $0x4c] sm:$0xf]
    %v94 = vld [vmem:[%s1 + $0x50] sm:$0xf]
    %v95 = vld [vmem:[%s1 + $0x54] sm:$0xf]
    %v96 = vld [vmem:[%s1 + $0x58] sm:$0xf]
    %v97 = vld [vmem:[%s1 + $0x5c] sm:$0xf]
    %v98 = vld [vmem:[%s1 + $0x60] sm:$0xf]
    %v99 = vld [vmem:[%s1 + $0x64] sm:$0xf]
    %v100 = vld [vmem:[%s1 + $0x68] sm:$0xf]
    %v101 = vld [vmem:[%s1 + $0x6c] sm:$0xf]
    %v102 = vld [vmem:[%s1 + $0x70] sm:$0xf]
    %v103 = vld [vmem:[%s1 + $0x74] sm:$0xf]
    %v104 = vld [vmem:[%s1 + $0x78] sm:$0xf]
    %v105 = vld [vmem:[%s1 + $0x7c] sm:$0xf]
    %v106 = vld [vmem:[%s1 + $0x80] sm:$0xf]
    %v107 = vld [vmem:[%s1 + $0x84] sm:$0xf]
    %v108 = vld [vmem:[%s1 + $0x88] sm:$0xf]
    %v109 = vld [vmem:[%s1 + $0x8c] sm:$0xf]
    %v110 = vld [vmem:[%s1 + $0x90] sm:$0xf]
    %v111 = vld [vmem:[%s1 + $0x94] sm:$0xf]
    %v112 = vld [vmem:[%s1 + $0x98] sm:$0xf]
    %v113 = vld [vmem:[%s1 + $0x9c] sm:$0xf]
    %v114 = vld [vmem:[%s1 + $0xa0] sm:$0xf]
    %v115 = vld [vmem:[%s1 + $0xa4] sm:$0xf]
    %v116 = vld [vmem:[%s1 + $0xa8] sm:$0xf]
    %v117 = vld [vmem:[%s1 + $0xac] sm:$0xf]
    %v118 = vld [vmem:[%s1 + $0xb0] sm:$0xf]
    %v119 = vld [vmem:[%s1 + $0xb4] sm:$0xf]
    %v120 = vld [vmem:[%s1 + $0xb8] sm:$0xf]
    %v121 = vld [vmem:[%s1 + $0xbc] sm:$0xf]
    %v122 = vld [vmem:[%s1 + $0xc0] sm:$0xf]
    %v123 = vld [vmem:[%s1 + $0xc4] sm:$0xf]
    %v124 = vld [vmem:[%s1 + $0xc8] sm:$0xf]
    %v125 = vld [vmem:[%s1 + $0xcc] sm:$0xf]
    %v126 = vld [vmem:[%s1 + $0xd0] sm:$0xf]
    %v127 = vld [vmem:[%s1 + $0xd4] sm:$0xf]
    %v128 = vld [vmem:[%s1 + $0xd8] sm:$0xf]
    %v129 = vld [vmem:[%s1 + $0xdc] sm:$0xf]
    %v130 = vld [vmem:[%s1 + $0xe0] sm:$0xf]
    %v131 = vld [vmem:[%s1 + $0xe4] sm:$0xf]
    %v132 = vld [vmem:[%s1 + $0xe8] sm:$0xf]
    %v133 = vld [vmem:[%s1 + $0xec] sm:$0xf]
    %v134 = vld [vmem:[%s1 + $0xf0] sm:$0xf]
    %v135 = vld [vmem:[%s1 + $0xf4] sm:$0xf]
    %v136 = vld [vmem:[%s1 + $0xf8] sm:$0xf]
    %v137 = vld [vmem:[%s1 + $0xfc] sm:$0xf]
    %v138 = vld [vmem:[%s1 + $0x100] sm:$0xf]
    %v139 = vld [vmem:[%s1 + $0x104] sm:$0xf]
    %v140 = vld [vmem:[%s1 + $0x108] sm:$0xf]
    %v141 = vld [vmem:[%s1 + $0x10c] sm:$0xf]
    %v142 = vld [vmem:[%s1 + $0x110] sm:$0xf]
    %v143 = vld [vmem:[%s1 + $0x114] sm:$0xf]
    %v144 = vld [vmem:[%s1 + $0x118] sm:$0xf]
    %v145 = vld [vmem:[%s1 + $0x11c] sm:$0xf]
    %v146 = vld [vmem:[%s1 + $0x120] sm:$0xf]
    %v147 = vld [vmem:[%s1 + $0x124] sm:$0xf]
    %v148 = vld [vmem:[%s1 + $0x128] sm:$0xf]
    %v149 = vld [vmem:[%s1 + $0x12c] sm:$0xf]
    %v150 = vld [vmem:[%s1 + $0x130] sm:$0xf]
    %v151 = vld [vmem:[%s1 + $0x134] sm:$0x3]
    %v152 = vld [vmem:[%s2] sm:$0x1]
    %v154 = vlaneseq
    %v155 = vshrl.u32 %v154, 7
    %v156 = vsub.s32 0, %v155
    %v157 = vrot.slane %v152, %v156
    %v237 = vunpack.c.l.b16 %v74
    %v238 = vunpack.c.l.b16 %v75
    %v239 = vunpack.c.l.b16 %v76
    %v240 = vunpack.c.l.b16 %v77
    %v241 = vunpack.c.l.b16 %v78
    %v242 = vunpack.c.l.b16 %v79
    %v243 = vunpack.c.l.b16 %v80
    %v244 = vunpack.c.l.b16 %v81
    %v245 = vunpack.c.l.b16 %v82
    %v246 = vunpack.c.l.b16 %v83
    %v247 = vunpack.c.l.b16 %v84
    %v248 = vunpack.c.l.b16 %v85
    %v249 = vunpack.c.l.b16 %v86
    %v250 = vunpack.c.l.b16 %v87
    %v251 = vunpack.c.l.b16 %v88
    %v252 = vunpack.c.l.b16 %v89
    %v253 = vunpack.c.l.b16 %v90
    %v254 = vunpack.c.l.b16 %v91
    %v255 = vunpack.c.l.b16 %v92
    %v256 = vunpack.c.l.b16 %v93
    %v257 = vunpack.c.l.b16 %v94
    %v258 = vunpack.c.l.b16 %v95
    %v259 = vunpack.c.l.b16 %v96
    %v260 = vunpack.c.l.b16 %v97
    %v261 = vunpack.c.l.b16 %v98
    %v262 = vunpack.c.l.b16 %v99
    %v263 = vunpack.c.l.b16 %v100
    %v264 = vunpack.c.l.b16 %v101
    %v265 = vunpack.c.l.b16 %v102
    %v266 = vunpack.c.l.b16 %v103
    %v267 = vunpack.c.l.b16 %v104
    %v268 = vunpack.c.l.b16 %v105
    %v269 = vunpack.c.l.b16 %v106
    %v270 = vunpack.c.l.b16 %v107
    %v271 = vunpack.c.l.b16 %v108
    %v272 = vunpack.c.l.b16 %v109
    %v273 = vunpack.c.l.b16 %v110
    %v274 = vunpack.c.l.b16 %v111
    %v275 = vunpack.c.l.b16 %v112
    %v276 = vunpack.c.l.b16 %v113
    %v277 = vunpack.c.l.b16 %v114
    %v278 = vunpack.c.l.b16 %v115
    %v279 = vunpack.c.l.b16 %v116
    %v280 = vunpack.c.l.b16 %v117
    %v281 = vunpack.c.l.b16 %v118
    %v282 = vunpack.c.l.b16 %v119
    %v283 = vunpack.c.l.b16 %v120
    %v284 = vunpack.c.l.b16 %v121
    %v285 = vunpack.c.l.b16 %v122
    %v286 = vunpack.c.l.b16 %v123
    %v287 = vunpack.c.l.b16 %v124
    %v288 = vunpack.c.l.b16 %v125
    %v289 = vunpack.c.l.b16 %v126
    %v290 = vunpack.c.l.b16 %v127
    %v291 = vunpack.c.l.b16 %v128
    %v292 = vunpack.c.l.b16 %v129
    %v293 = vunpack.c.l.b16 %v130
    %v294 = vunpack.c.l.b16 %v131
    %v295 = vunpack.c.l.b16 %v132
    %v296 = vunpack.c.l.b16 %v133
    %v297 = vunpack.c.l.b16 %v134
    %v298 = vunpack.c.l.b16 %v135
    %v299 = vunpack.c.l.b16 %v136
    %v300 = vunpack.c.l.b16 %v137
    %v301 = vunpack.c.l.b16 %v138
    %v302 = vunpack.c.l.b16 %v139
    %v303 = vunpack.c.l.b16 %v140
    %v304 = vunpack.c.l.b16 %v141
    %v305 = vunpack.c.l.b16 %v142
    %v306 = vunpack.c.l.b16 %v143
    %v307 = vunpack.c.l.b16 %v144
    %v308 = vunpack.c.l.b16 %v145
    %v309 = vunpack.c.l.b16 %v146
    %v310 = vunpack.c.l.b16 %v147
    %v311 = vunpack.c.l.b16 %v148
    %v312 = vunpack.c.l.b16 %v149
    %v313 = vunpack.c.l.b16 %v150
    %v314 = vunpack.c.l.b16 %v151
    %v315 = vpack.c.b16 %v238, %v237
    %v316 = vpack.c.b16 %v240, %v239
    %v317 = vpack.c.b16 %v242, %v241
    %v318 = vpack.c.b16 %v244, %v243
    %v319 = vpack.c.b16 %v246, %v245
    %v320 = vpack.c.b16 %v248, %v247
    %v321 = vpack.c.b16 %v250, %v249
    %v322 = vpack.c.b16 %v252, %v251
    %v323 = vpack.c.b16 %v254, %v253
    %v324 = vpack.c.b16 %v256, %v255
    %v325 = vpack.c.b16 %v258, %v257
    %v326 = vpack.c.b16 %v260, %v259
    %v327 = vpack.c.b16 %v262, %v261
    %v328 = vpack.c.b16 %v264, %v263
    %v329 = vpack.c.b16 %v266, %v265
    %v330 = vpack.c.b16 %v268, %v267
    %v331 = vpack.c.b16 %v270, %v269
    %v332 = vpack.c.b16 %v272, %v271
    %v333 = vpack.c.b16 %v274, %v273
    %v334 = vpack.c.b16 %v276, %v275
    %v335 = vpack.c.b16 %v278, %v277
    %v336 = vpack.c.b16 %v280, %v279
    %v337 = vpack.c.b16 %v282, %v281
    %v338 = vpack.c.b16 %v284, %v283
    %v339 = vpack.c.b16 %v286, %v285
    %v340 = vpack.c.b16 %v288, %v287
    %v341 = vpack.c.b16 %v290, %v289
    %v342 = vpack.c.b16 %v292, %v291
    %v343 = vpack.c.b16 %v294, %v293
    %v344 = vpack.c.b16 %v296, %v295
    %v345 = vpack.c.b16 %v298, %v297
    %v346 = vpack.c.b16 %v300, %v299
    %v347 = vpack.c.b16 %v302, %v301
    %v348 = vpack.c.b16 %v304, %v303
    %v349 = vpack.c.b16 %v306, %v305
    %v350 = vpack.c.b16 %v308, %v307
    %v351 = vpack.c.b16 %v310, %v309
    %v352 = vpack.c.b16 %v312, %v311
    %v353 = vpack.c.b16 %v314, %v313
    %vm392 = vcmask 883712
    %v394 = vsel %vm392, %v73, 0
    %vm396 = vcmask 1045504
    %v398 = vsel %vm396, %v353, 0
    %400 = vmatprep.subr.bf16.mxu0 0
    %401 = vmatpush1.bf16.msra.mxu0 %v315
    %402 = vmatprep.subr.bf16.mxu0 0
    %403 = vmatpush1.bf16.msra.mxu0 %v316
    %404 = vmatprep.subr.bf16.mxu0 0
    %405 = vmatpush1.bf16.msra.mxu0 %v317
    %406 = vmatprep.subr.bf16.mxu0 0
    %407 = vmatpush1.bf16.msra.mxu0 %v318
    %408 = vmatprep.subr.bf16.mxu0 0
    %409 = vmatpush1.bf16.msra.mxu0 %v319
    %410 = vmatprep.subr.bf16.mxu0 0
    %411 = vmatpush1.bf16.msra.mxu0 %v320
    %412 = vmatprep.subr.bf16.mxu0 0
    %413 = vmatpush1.bf16.msra.mxu0 %v321
    %414 = vmatprep.subr.bf16.mxu0 0
    %415 = vmatpush1.bf16.msra.mxu0 %v322
    %416 = vmatprep.subr.bf16.mxu0 0
    %417 = vmatpush1.bf16.msra.mxu0 %v323
    %418 = vmatprep.subr.bf16.mxu0 0
    %419 = vmatpush1.bf16.msra.mxu0 %v324
    %420 = vmatprep.subr.bf16.mxu0 0
    %421 = vmatpush1.bf16.msra.mxu0 %v325
    %422 = vmatprep.subr.bf16.mxu0 0
    %423 = vmatpush1.bf16.msra.mxu0 %v326
    %424 = vmatprep.subr.bf16.mxu0 0
    %425 = vmatpush1.bf16.msra.mxu0 %v327
    %426 = vmatprep.subr.bf16.mxu0 0
    %427 = vmatpush1.bf16.msra.mxu0 %v328
    %428 = vmatprep.subr.bf16.mxu0 0
    %429 = vmatpush1.bf16.msra.mxu0 %v329
    %430 = vmatprep.subr.bf16.mxu0 0
    %431 = vmatpush1.bf16.msra.mxu0 %v330
    %432 = vmatprep.mubr.bf16.mxu0 %v70
    %433 = vmatmul.mubr.bf16.gmra.mrb[0].mxu0 %v69
    %v434 = vpop.f32.mrb[0].mxu0
    %v435 = vadd.f32 %v157, %v434
    %v436 = vpop.f32.mrb[0].mxu0
    %v437 = vpop.f32.mrb[0].mxu0
    %v438 = vpop.f32.mrb[0].mxu0
    %439 = vdwg.mxu0
    %440 = vmatprep.subr.bf16.mxu0 0
    %441 = vmatpush1.bf16.msra.mxu0 %v331
    %442 = vmatprep.subr.bf16.mxu0 0
    %443 = vmatpush1.bf16.msra.mxu0 %v332
    %444 = vmatprep.subr.bf16.mxu0 0
    %445 = vmatpush1.bf16.msra.mxu0 %v333
    %446 = vmatprep.subr.bf16.mxu0 0
    %447 = vmatpush1.bf16.msra.mxu0 %v334
    %448 = vmatprep.subr.bf16.mxu0 0
    %449 = vmatpush1.bf16.msra.mxu0 %v335
    %450 = vmatprep.subr.bf16.mxu0 0
    %451 = vmatpush1.bf16.msra.mxu0 %v336
    %452 = vmatprep.subr.bf16.mxu0 0
    %453 = vmatpush1.bf16.msra.mxu0 %v337
    %454 = vmatprep.subr.bf16.mxu0 0
    %455 = vmatpush1.bf16.msra.mxu0 %v338
    %456 = vmatprep.subr.bf16.mxu0 0
    %457 = vmatpush1.bf16.msra.mxu0 %v339
    %458 = vmatprep.subr.bf16.mxu0 0
    %459 = vmatpush1.bf16.msra.mxu0 %v340
    %460 = vmatprep.subr.bf16.mxu0 0
    %461 = vmatpush1.bf16.msra.mxu0 %v341
    %462 = vmatprep.subr.bf16.mxu0 0
    %463 = vmatpush1.bf16.msra.mxu0 %v342
    %464 = vmatprep.subr.bf16.mxu0 0
    %465 = vmatpush1.bf16.msra.mxu0 %v343
    %466 = vmatprep.subr.bf16.mxu0 0
    %467 = vmatpush1.bf16.msra.mxu0 %v344
    %468 = vmatprep.subr.bf16.mxu0 0
    %469 = vmatpush1.bf16.msra.mxu0 %v345
    %470 = vmatprep.subr.bf16.mxu0 0
    %471 = vmatpush1.bf16.msra.mxu0 %v346
    %472 = vmatprep.mubr.bf16.mxu0 %v72
    %473 = vmatmul.mubr.bf16.gmra.mrb[0].mxu0 %v71
    %v474 = vpop.f32.mrb[0].mxu0
    %v475 = vadd.f32 %v435, %v474
    %v476 = vpop.f32.mrb[0].mxu0
    %v477 = vpop.f32.mrb[0].mxu0
    %v478 = vpop.f32.mrb[0].mxu0
    %479 = vdwg.mxu0
    %480 = vmatprep.subr.bf16.mxu0 0
    %481 = vmatpush1.bf16.msra.mxu0 %v347
    %482 = vmatprep.subr.bf16.mxu0 0
    %483 = vmatpush1.bf16.msra.mxu0 %v348
    %484 = vmatprep.subr.bf16.mxu0 0
    %485 = vmatpush1.bf16.msra.mxu0 %v349
    %486 = vmatprep.subr.bf16.mxu0 0
    %487 = vmatpush1.bf16.msra.mxu0 %v350
    %488 = vmatprep.subr.bf16.mxu0 0
    %489 = vmatpush1.bf16.msra.mxu0 %v351
    %490 = vmatprep.subr.bf16.mxu0 0
    %491 = vmatpush1.bf16.msra.mxu0 %v352
    %492 = vmatprep.subr.bf16.mxu0 0
    %493 = vmatpush1.bf16.msra.mxu0 %v398
    %494 = vmatprep.subr.bf16.mxu0 0
    %495 = vmatpush1.bf16.msra.mxu0 0
    %496 = vmatprep.subr.bf16.mxu0 0
    %497 = vmatpush1.bf16.msra.mxu0 0
    %498 = vmatprep.subr.bf16.mxu0 0
    %499 = vmatpush1.bf16.msra.mxu0 0
    %500 = vmatprep.subr.bf16.mxu0 0
    %501 = vmatpush1.bf16.msra.mxu0 0
    %502 = vmatprep.subr.bf16.mxu0 0
    %503 = vmatpush1.bf16.msra.mxu0 0
    %504 = vmatprep.subr.bf16.mxu0 0
    %505 = vmatpush1.bf16.msra.mxu0 0
    %506 = vmatprep.subr.bf16.mxu0 0
    %507 = vmatpush1.bf16.msra.mxu0 0
    %508 = vmatprep.subr.bf16.mxu0 0
    %509 = vmatpush1.bf16.msra.mxu0 0
    %510 = vmatprep.subr.bf16.mxu0 0
    %511 = vmatpush1.bf16.msra.mxu0 0
    %512 = vmatprep.mubr.bf16.mxu0 0
    %513 = vmatmul.mubr.bf16.gmra.mrb[0].mxu0 %v394
    %v514 = vpop.f32.mrb[0].mxu0
    %v515 = vadd.f32 %v475, %v514
    %v516 = vpop.f32.mrb[0].mxu0
    %v517 = vpop.f32.mrb[0].mxu0
    %v518 = vpop.f32.mrb[0].mxu0
    %519 = vdwg.mxu0
    %v520 = vmax.f32 %v515, 0.0
    %v521 = vpack.c.bf16 %v520, %v520
    %v522 = vld [vmem:[%s3] sm:$0xf]
    %v523 = vld [vmem:[%s3 + $0x4] sm:$0xf]
    %v524 = vld [vmem:[%s3 + $0x8] sm:$0xf]
    %v525 = vld [vmem:[%s3 + $0xc] sm:$0xf]
    %v526 = vld [vmem:[%s3 + $0x10] sm:$0xf]
    %v527 = vld [vmem:[%s3 + $0x14] sm:$0xf]
    %v528 = vld [vmem:[%s3 + $0x18] sm:$0xf]
    %v529 = vld [vmem:[%s3 + $0x1c] sm:$0xf]
    %v530 = vld [vmem:[%s3 + $0x20] sm:$0xf]
    %v531 = vld [vmem:[%s3 + $0x24] sm:$0xf]
    %v532 = vld [vmem:[%s3 + $0x28] sm:$0xf]
    %v533 = vld [vmem:[%s3 + $0x2c] sm:$0xf]
    %v534 = vld [vmem:[%s4] sm:$0x1]
    %v536 = vlaneseq
    %v537 = vshrl.u32 %v536, 7
    %v538 = vsub.s32 0, %v537
    %v539 = vrot.slane %v534, %v538
    %v553 = vunpack.c.l.b16 %v522
    %v554 = vunpack.c.l.b16 %v523
    %v555 = vunpack.c.l.b16 %v524
    %v556 = vunpack.c.l.b16 %v525
    %v557 = vunpack.c.l.b16 %v526
    %v558 = vunpack.c.l.b16 %v527
    %v559 = vunpack.c.l.b16 %v528
    %v560 = vunpack.c.l.b16 %v529
    %v561 = vunpack.c.l.b16 %v530
    %v562 = vunpack.c.l.b16 %v531
    %v563 = vunpack.c.l.b16 %v532
    %v564 = vunpack.c.l.b16 %v533
    %v565 = vpack.c.b16 %v554, %v553
    %v566 = vpack.c.b16 %v556, %v555
    %v567 = vpack.c.b16 %v558, %v557
    %v568 = vpack.c.b16 %v560, %v559
    %v569 = vpack.c.b16 %v562, %v561
    %v570 = vpack.c.b16 %v564, %v563
    %vm577 = vcmask 785408
    %v579 = vsel %vm577, %v521, 0
    %581 = vmatprep.subr.bf16.mxu0 0
    %582 = vmatpush1.bf16.msra.mxu0 %v565
    %583 = vmatprep.subr.bf16.mxu0 0
    %584 = vmatpush1.bf16.msra.mxu0 %v566
    %585 = vmatprep.subr.bf16.mxu0 0
    %586 = vmatpush1.bf16.msra.mxu0 %v567
    %587 = vmatprep.subr.bf16.mxu0 0
    %588 = vmatpush1.bf16.msra.mxu0 %v568
    %589 = vmatprep.subr.bf16.mxu0 0
    %590 = vmatpush1.bf16.msra.mxu0 %v569
    %591 = vmatprep.subr.bf16.mxu0 0
    %592 = vmatpush1.bf16.msra.mxu0 %v570
    %593 = vmatprep.subr.bf16.mxu0 0
    %594 = vmatpush1.bf16.msra.mxu0 0
    %595 = vmatprep.subr.bf16.mxu0 0
    %596 = vmatpush1.bf16.msra.mxu0 0
    %597 = vmatprep.subr.bf16.mxu0 0
    %598 = vmatpush1.bf16.msra.mxu0 0
    %599 = vmatprep.subr.bf16.mxu0 0
    %600 = vmatpush1.bf16.msra.mxu0 0
    %601 = vmatprep.subr.bf16.mxu0 0
    %602 = vmatpush1.bf16.msra.mxu0 0
    %603 = vmatprep.subr.bf16.mxu0 0
    %604 = vmatpush1.bf16.msra.mxu0 0
    %605 = vmatprep.subr.bf16.mxu0 0
    %606 = vmatpush1.bf16.msra.mxu0 0
    %607 = vmatprep.subr.bf16.mxu0 0
    %608 = vmatpush1.bf16.msra.mxu0 0
    %609 = vmatprep.subr.bf16.mxu0 0
    %610 = vmatpush1.bf16.msra.mxu0 0
    %611 = vmatprep.subr.bf16.mxu0 0
    %612 = vmatpush1.bf16.msra.mxu0 0
    %613 = vmatprep.mubr.bf16.mxu0 0
    %614 = vmatmul.mubr.bf16.gmra.mrb[0].mxu0 %v579
    %v615 = vpop.f32.mrb[0].mxu0
    %v616 = vadd.f32 %v539, %v615
    %v617 = vpop.f32.mrb[0].mxu0
    %v618 = vpop.f32.mrb[0].mxu0
    %v619 = vpop.f32.mrb[0].mxu0
    %620 = vdwg.mxu0
    %v621 = vmax.f32 %v616, 0.0
    %v622 = vpack.c.bf16 %v621, %v621
    %v623 = vld [vmem:[%s5] sm:$0xf]
    %v624 = vld [vmem:[%s5 + $0x4] sm:$0xf]
    %v625 = vld [vmem:[%s5 + $0x8] sm:$0xf]
    %v626 = vld [vmem:[%s5 + $0xc] sm:$0xf]
    %v627 = vld [vmem:[%s5 + $0x10] sm:$0xf]
    %v628 = vld [vmem:[%s5 + $0x14] sm:$0xf]
    %v629 = vld [vmem:[%s5 + $0x18] sm:$0xf]
    %v630 = vld [vmem:[%s5 + $0x1c] sm:$0xf]
    %v631 = vld [vmem:[%s5 + $0x20] sm:$0xf]
    %v632 = vld [vmem:[%s5 + $0x24] sm:$0xf]
    %v633 = vld [vmem:[%s5 + $0x28] sm:$0xf]
    %v634 = vld [vmem:[%s5 + $0x2c] sm:$0xf]
    %v635 = vld [vmem:[%s6] sm:$0x1]
    %v637 = vlaneseq
    %v638 = vshrl.u32 %v637, 7
    %v639 = vsub.s32 0, %v638
    %v640 = vrot.slane %v635, %v639
    %v654 = vunpack.c.l.b16 %v623
    %v655 = vunpack.c.l.b16 %v624
    %v656 = vunpack.c.l.b16 %v625
    %v657 = vunpack.c.l.b16 %v626
    %v658 = vunpack.c.l.b16 %v627
    %v659 = vunpack.c.l.b16 %v628
    %v660 = vunpack.c.l.b16 %v629
    %v661 = vunpack.c.l.b16 %v630
    %v662 = vunpack.c.l.b16 %v631
    %v663 = vunpack.c.l.b16 %v632
    %v664 = vunpack.c.l.b16 %v633
    %v665 = vunpack.c.l.b16 %v634
    %v666 = vpack.c.b16 %v655, %v654
    %v667 = vpack.c.b16 %v657, %v656
    %v668 = vpack.c.b16 %v659, %v658
    %v669 = vpack.c.b16 %v661, %v660
    %v670 = vpack.c.b16 %v663, %v662
    %v671 = vpack.c.b16 %v665, %v664
    %v679 = vsel %vm577, %v622, 0
    %681 = vmatprep.subr.bf16.mxu0 0
    %682 = vmatpush1.bf16.msra.mxu0 %v666
    %683 = vmatprep.subr.bf16.mxu0 0
    %684 = vmatpush1.bf16.msra.mxu0 %v667
    %685 = vmatprep.subr.bf16.mxu0 0
    %686 = vmatpush1.bf16.msra.mxu0 %v668
    %687 = vmatprep.subr.bf16.mxu0 0
    %688 = vmatpush1.bf16.msra.mxu0 %v669
    %689 = vmatprep.subr.bf16.mxu0 0
    %690 = vmatpush1.bf16.msra.mxu0 %v670
    %691 = vmatprep.subr.bf16.mxu0 0
    %692 = vmatpush1.bf16.msra.mxu0 %v671
    %693 = vmatprep.subr.bf16.mxu0 0
    %694 = vmatpush1.bf16.msra.mxu0 0
    %695 = vmatprep.subr.bf16.mxu0 0
    %696 = vmatpush1.bf16.msra.mxu0 0
    %697 = vmatprep.subr.bf16.mxu0 0
    %698 = vmatpush1.bf16.msra.mxu0 0
    %699 = vmatprep.subr.bf16.mxu0 0
    %700 = vmatpush1.bf16.msra.mxu0 0
    %701 = vmatprep.subr.bf16.mxu0 0
    %702 = vmatpush1.bf16.msra.mxu0 0
    %703 = vmatprep.subr.bf16.mxu0 0
    %704 = vmatpush1.bf16.msra.mxu0 0
    %705 = vmatprep.subr.bf16.mxu0 0
    %706 = vmatpush1.bf16.msra.mxu0 0
    %707 = vmatprep.subr.bf16.mxu0 0
    %708 = vmatpush1.bf16.msra.mxu0 0
    %709 = vmatprep.subr.bf16.mxu0 0
    %710 = vmatpush1.bf16.msra.mxu0 0
    %711 = vmatprep.subr.bf16.mxu0 0
    %712 = vmatpush1.bf16.msra.mxu0 0
    %713 = vmatprep.mubr.bf16.mxu0 0
    %714 = vmatmul.mubr.bf16.gmra.mrb[0].mxu0 %v679
    %v715 = vpop.f32.mrb[0].mxu0
    %v716 = vadd.f32 %v640, %v715
    %v717 = vpop.f32.mrb[0].mxu0
    %v718 = vpop.f32.mrb[0].mxu0
    %v719 = vpop.f32.mrb[0].mxu0
    %720 = vdwg.mxu0
    %v721 = vmax.f32 %v716, 0.0
    %v722 = vpack.c.bf16 %v721, %v721
    %v723 = vld [vmem:[%s7] sm:$0xf]
    %v724 = vld [vmem:[%s7 + $0x4] sm:$0xf]
    %v725 = vld [vmem:[%s7 + $0x8] sm:$0xf]
    %v726 = vld [vmem:[%s7 + $0xc] sm:$0xf]
    %v727 = vld [vmem:[%s7 + $0x10] sm:$0xf]
    %v728 = vld [vmem:[%s7 + $0x14] sm:$0xf]
    %v729 = vld [vmem:[%s7 + $0x18] sm:$0xf]
    %v730 = vld [vmem:[%s7 + $0x1c] sm:$0xf]
    %v731 = vld [vmem:[%s7 + $0x20] sm:$0xf]
    %v732 = vld [vmem:[%s7 + $0x24] sm:$0xf]
    %v733 = vld [vmem:[%s7 + $0x28] sm:$0xf]
    %v734 = vld [vmem:[%s7 + $0x2c] sm:$0xf]
    %v735 = vld [vmem:[%s8] sm:$0x1]
    %v737 = vlaneseq
    %v738 = vshrl.u32 %v737, 7
    %v739 = vsub.s32 0, %v738
    %v740 = vrot.slane %v735, %v739
    %v754 = vunpack.c.l.b16 %v723
    %v755 = vunpack.c.l.b16 %v724
    %v756 = vunpack.c.l.b16 %v725
    %v757 = vunpack.c.l.b16 %v726
    %v758 = vunpack.c.l.b16 %v727
    %v759 = vunpack.c.l.b16 %v728
    %v760 = vunpack.c.l.b16 %v729
    %v761 = vunpack.c.l.b16 %v730
    %v762 = vunpack.c.l.b16 %v731
    %v763 = vunpack.c.l.b16 %v732
    %v764 = vunpack.c.l.b16 %v733
    %v765 = vunpack.c.l.b16 %v734
    %v766 = vpack.c.b16 %v755, %v754
    %v767 = vpack.c.b16 %v757, %v756
    %v768 = vpack.c.b16 %v759, %v758
    %v769 = vpack.c.b16 %v761, %v760
    %v770 = vpack.c.b16 %v763, %v762
    %v771 = vpack.c.b16 %v765, %v764
    %v779 = vsel %vm577, %v722, 0
    %781 = vmatprep.subr.bf16.mxu0 0
    %782 = vmatpush1.bf16.msra.mxu0 %v766
    %783 = vmatprep.subr.bf16.mxu0 0
    %784 = vmatpush1.bf16.msra.mxu0 %v767
    %785 = vmatprep.subr.bf16.mxu0 0
    %786 = vmatpush1.bf16.msra.mxu0 %v768
    %787 = vmatprep.subr.bf16.mxu0 0
    %788 = vmatpush1.bf16.msra.mxu0 %v769
    %789 = vmatprep.subr.bf16.mxu0 0
    %790 = vmatpush1.bf16.msra.mxu0 %v770
    %791 = vmatprep.subr.bf16.mxu0 0
    %792 = vmatpush1.bf16.msra.mxu0 %v771
    %793 = vmatprep.subr.bf16.mxu0 0
    %794 = vmatpush1.bf16.msra.mxu0 0
    %795 = vmatprep.subr.bf16.mxu0 0
    %796 = vmatpush1.bf16.msra.mxu0 0
    %797 = vmatprep.subr.bf16.mxu0 0
    %798 = vmatpush1.bf16.msra.mxu0 0
    %799 = vmatprep.subr.bf16.mxu0 0
    %800 = vmatpush1.bf16.msra.mxu0 0
    %801 = vmatprep.subr.bf16.mxu0 0
    %802 = vmatpush1.bf16.msra.mxu0 0
    %803 = vmatprep.subr.bf16.mxu0 0
    %804 = vmatpush1.bf16.msra.mxu0 0
    %805 = vmatprep.subr.bf16.mxu0 0
    %806 = vmatpush1.bf16.msra.mxu0 0
    %807 = vmatprep.subr.bf16.mxu0 0
    %808 = vmatpush1.bf16.msra.mxu0 0
    %809 = vmatprep.subr.bf16.mxu0 0
    %810 = vmatpush1.bf16.msra.mxu0 0
    %811 = vmatprep.subr.bf16.mxu0 0
    %812 = vmatpush1.bf16.msra.mxu0 0
    %813 = vmatprep.mubr.bf16.mxu0 0
    %814 = vmatmul.mubr.bf16.gmra.mrb[0].mxu0 %v779
    %v815 = vpop.f32.mrb[0].mxu0
    %v816 = vadd.f32 %v740, %v815
    %v817 = vpop.f32.mrb[0].mxu0
    %v818 = vpop.f32.mrb[0].mxu0
    %v819 = vpop.f32.mrb[0].mxu0
    %820 = vdwg.mxu0
    %vm821 = vcmask 25600
    %822 = vst.msk [vmem:[%s9] sm:$0x3] %vm821, %v816
    %v823 = vmul.f32 %v816, %v816
    %825 = vrot.lane.b32.xlu0 %v823, 127
    %v826 = vpop.permute.xlu0 %825
    %v828 = vadd.f32 %v823, %v826
    %830 = vrot.lane.b32.xlu0 %v816, 126
    %v831 = vpop.permute.xlu0 %830
    %v833 = vmul.f32 %v816, %v831
    %835 = vrot.lane.b32.xlu0 %v833, 127
    %v836 = vpop.permute.xlu0 %835
    %v838 = vadd.f32 %v833, %v836
    %839 = vrot.lane.b32.xlu0 %v816, 125
    %v840 = vpop.permute.xlu0 %839
    %v842 = vmul.f32 %v816, %v840
    %843 = vrot.lane.b32.xlu0 %v816, 1
    %v844 = vpop.permute.xlu0 %843
    %v846 = vmul.f32 %v816, %v844
    %848 = vrot.lane.b32.xlu0 %v846, 126
    %v849 = vpop.permute.xlu0 %848
    %v851 = vsub.f32 %v842, %v849
    %v852 = vsub.f32 %v828, 1.0
    %v853 = vand.u32 2147483647, %v852
    %855 = vrot.lane.b32.xlu0 %v853, 126
    %v856 = vpop.permute.xlu0 %855
    %v858 = vadd.f32 %v853, %v856
    %v859 = vand.u32 2147483647, %v838
    %v860 = vadd.f32 %v858, %v859
    %v861 = vsub.f32 %v851, 1.0
    %v862 = vand.u32 2147483647, %v861
    %v863 = vadd.f32 %v860, %v862
    %vm864 = vcmask 1024
    %v865 = vsel %vm864, %v863, 0.0
    %866 = vadd.xlane.f32.xlu0 %v865
    %v867 = vpop.xlane.xlu0 %866
    %v868 = vrot.slane %v867, 4
    %v869 = vadd.f32 %v867, %v868
    %v870 = vrot.slane %v869, 2
    %v871 = vadd.f32 %v869, %v870
    %v872 = vrot.slane %v871, 1
    %v873 = vadd.f32 %v871, %v872
    %s874 = vtos %v873
    %v875 = vrcp.pop 8.0
    %s876 = vtos %v875
    %s877 = smul.f32 %s874, %s876
    %v878 = vstv %s877
    %vm879 = vcmask 0
    %880 = vst.msk [vmem:[#allocation2] sm:$0x1] %vm879, %v878
    // Predicated region
    $region38: #{interfaced_model_forward.4} parent=1 // pred_check
      _
    $region39: #{interfaced_model_forward.4} parent=1 // pred_check_branch
      %882 = sbr.rel (0) target = $region41
    $region40: #{interfaced_model_forward.4} parent=1 // pred_region
      _
    $region41: #{interfaced_model_forward.4} parent=1 // pred_fallthru
      _
    // Predicated region
    $region42: #{interfaced_model_forward.4} parent=1 // pred_check
      _
    $region43: #{interfaced_model_forward.4} parent=1 // pred_check_branch
      %884 = sbr.rel (0) target = $region45
    $region44: #{interfaced_model_forward.4} parent=1 // pred_region
      %s886 = ssub.s32 16, 16
      %887 = vsyncadd [#allocation3], %s886
      %s889 = sshll.u32 [#allocation2], 4
      %s890 = int_to_ptr.vmem [resolvable:$true] %s889
      %892 = dma.vmem_to_hbm [thread:$0]  %s890, 16, %s10, [#allocation3]
    $region45: #{interfaced_model_forward.4} parent=1 // pred_fallthru
      _
    // Predicated region
    $region46: #{interfaced_model_forward.4} parent=1 // pred_check
      _
    $region47: #{interfaced_model_forward.4} parent=1 // pred_check_branch
      %894 = sbr.rel (0) target = $region49
    $region48: #{interfaced_model_forward.4} parent=1 // pred_region
      _
    $region49: #{interfaced_model_forward.4} parent=1 // pred_fallthru
      _
    // Predicated region
    $region50: #{interfaced_model_forward.4} parent=1 // pred_check
      _
    $region51: #{interfaced_model_forward.4} parent=1 // pred_check_branch
      %896 = sbr.rel (0) target = $region53
    $region52: #{interfaced_model_forward.4} parent=1 // pred_region
      %897 = dma.done [#allocation3], 16
    $region53: #{interfaced_model_forward.4} parent=1 // pred_fallthru
      _
    %898 = vsyncpa [#allocation3], 1

// kernel: interfaced_model_forward.5
$region0: #{interfaced_model_forward.5}
  #allocation0 [shape = 'u32[]', space=smem, size = 0x4, offset = 0x4, fixed_abs, tag = 'smem constant byte address 0x4 - core index']
  #allocation1 [shape = 'u32[144,128]{1,0:T(1,128)}', space=vmem, size = 0x12000, scoped, tag = 'internal scratch']
  %s0 = inlined_call_operand.vmem [shape: f32[1568,9], index: 0, kind: input, shape index: {}]
  %s1 = inlined_call_operand.vmem [shape: bf16[9,8], index: 1, kind: input, shape index: {}]
  %s2 = inlined_call_operand.vmem [shape: f32[1,8], index: 2, kind: input, shape index: {}]
  %s3 = inlined_call_operand.vmem [shape: f32[1568,8], index: 3, kind: output, shape index: {}]
  %s4 = sld [smem:[#allocation0]]
  $region93: #{interfaced_model_forward.5} parent=0
    _
  %s6 = ssub.s32 1, %s4
  %s7 = scalar_select 0, %s6, %s4
  $region1: #{interfaced_model_forward.5} parent=0
    #allocation2 [shape = 'u8[524288]{0}', space=vmem, size = 0x80000, scoped, tag = 'output window, operand 0']
    loop: start=0, step=1, limit=6
    $region2: #{interfaced_model_forward.5} parent=1 // loop_pre_header
      _
    $region3: #{interfaced_model_forward.5} parent=1 // loop_header
      %s9 = sphi 0, %s13
      %p10 = scmp.ge.s32.totalorder %s9, 6
      %s19 = sphi 0, %s21
      %s22 = sphi 0, %s19
      %s23 = sphi 0, %s22
      %s39 = sphi 0, %s23
      %s43 = sphi 0, %s43
      %s45 = sphi 0, %s43
      %s46 = sphi 0, %s45
      %s60 = sphi 0, %s46
      %s64 = sphi 0, %s64
      %s66 = sphi 0, %s64
      %s67 = sphi 0, %s66
      %s81 = sphi 0, %s67
      %s87 = sphi 0, %s89
      %s90 = sphi 0, %s87
      %s91 = sphi 0, %s90
      %s107 = sphi 0, %s91
    $region4: #{interfaced_model_forward.5} parent=1 // loop_header_branch
      %12 = sbr.rel (%p10) target = $region8
    $region5: #{interfaced_model_forward.5} parent=1 // loop_body
      %s14 = ssub.s32 %s9, 1
      %s15 = ssub.s32 %s9, 2
      %s16 = sadd.s32 %s9, 1
      %s17 = ssub.s32 %s9, %s16
      %p18 = scmp.eq.s32.totalorder %s17, 0
      %s20 = sadd.s32 %s19, 1
      %s21 = scalar_select %p18, %s19, %s20
      %p24 = pneg %p18
      %p25 = scmp.eq.s32.totalorder %s9, 3
      %p26 = por %p24, %p25
      %p27 = scmp.ne.s32.totalorder %s19, %s22
      %p28 = scmp.eq.s32.totalorder %s9, 0
      %p29 = por %p27, %p28
      %p30 = scmp.ne.s32.totalorder %s19, %s22
      %p31 = scmp.eq.s32.totalorder %s14, 3
      %p32 = por %p30, %p31
      %p33 = scmp.ne.s32.totalorder %s22, %s23
      %p34 = scmp.eq.s32.totalorder %s14, 0
      %p35 = por %p33, %p34
      %p36 = scmp.ne.s32.totalorder %s22, %s23
      %p37 = scmp.eq.s32.totalorder %s15, 3
      %p38 = por %p36, %p37
      %p40 = scmp.ne.s32.totalorder %s23, %s39
      %p41 = scmp.eq.s32.totalorder %s15, 0
      %p42 = por %p40, %p41
      %s44 = sadd.s32 %s43, 1
      %p47 = scmp.eq.s32.totalorder %s9, 3
      %p48 = scmp.ne.s32.totalorder %s43, %s45
      %p49 = scmp.eq.s32.totalorder %s9, 0
      %p50 = por %p48, %p49
      %p51 = scmp.ne.s32.totalorder %s43, %s45
      %p52 = scmp.eq.s32.totalorder %s14, 3
      %p53 = por %p51, %p52
      %p54 = scmp.ne.s32.totalorder %s45, %s46
      %p55 = scmp.eq.s32.totalorder %s14, 0
      %p56 = por %p54, %p55
      %p57 = scmp.ne.s32.totalorder %s45, %s46
      %p58 = scmp.eq.s32.totalorder %s15, 3
      %p59 = por %p57, %p58
      %p61 = scmp.ne.s32.totalorder %s46, %s60
      %p62 = scmp.eq.s32.totalorder %s15, 0
      %p63 = por %p61, %p62
      %s65 = sadd.s32 %s64, 1
      %p68 = scmp.eq.s32.totalorder %s9, 3
      %p69 = scmp.ne.s32.totalorder %s64, %s66
      %p70 = scmp.eq.s32.totalorder %s9, 0
      %p71 = por %p69, %p70
      %p72 = scmp.ne.s32.totalorder %s64, %s66
      %p73 = scmp.eq.s32.totalorder %s14, 3
      %p74 = por %p72, %p73
      %p75 = scmp.ne.s32.totalorder %s66, %s67
      %p76 = scmp.eq.s32.totalorder %s14, 0
      %p77 = por %p75, %p76
      %p78 = scmp.ne.s32.totalorder %s66, %s67
      %p79 = scmp.eq.s32.totalorder %s15, 3
      %p80 = por %p78, %p79
      %p82 = scmp.ne.s32.totalorder %s67, %s81
      %p83 = scmp.eq.s32.totalorder %s15, 0
      %p84 = por %p82, %p83
      %s85 = ssub.s32 %s9, %s16
      %p86 = scmp.eq.s32.totalorder %s85, 0
      %s88 = sadd.s32 %s87, 1
      %s89 = scalar_select %p86, %s87, %s88
      %p92 = pneg %p86
      %p93 = scmp.eq.s32.totalorder %s9, 3
      %p94 = por %p92, %p93
      %p95 = scmp.ne.s32.totalorder %s87, %s90
      %p96 = scmp.eq.s32.totalorder %s9, 0
      %p97 = por %p95, %p96
      %p98 = scmp.ne.s32.totalorder %s87, %s90
      %p99 = scmp.eq.s32.totalorder %s14, 3
      %p100 = por %p98, %p99
      %p101 = scmp.ne.s32.totalorder %s90, %s91
      %p102 = scmp.eq.s32.totalorder %s14, 0
      %p103 = por %p101, %p102
      %p104 = scmp.ne.s32.totalorder %s90, %s91
      %p105 = scmp.eq.s32.totalorder %s15, 3
      %p106 = por %p104, %p105
      %p108 = scmp.ne.s32.totalorder %s91, %s107
      %p109 = scmp.eq.s32.totalorder %s15, 0
      %p110 = por %p108, %p109
      %p111 = scmp.le.s32.totalorder 1, %s9
      %p112 = scmp.lt.s32.totalorder %s9, 5
      %p113 = pnand %p111, %p112
      %p114 = pneg %p113
      // Predicated region
      $region9: #{interfaced_model_forward.5} parent=5 // pred_check
        _
      $region10: #{interfaced_model_forward.5} parent=5 // pred_check_branch
        %116 = sbr.rel (%p113) target = $region12
      $region11: #{interfaced_model_forward.5} parent=5 // pred_region
        %s117 = ssub.s32 %s9, 1
        // Predicated region
        $region13: #{interfaced_model_forward.5} parent=11 // pred_check
          %p118 = pneg %p56
        $region14: #{interfaced_model_forward.5} parent=11 // pred_check_branch
          %120 = sbr.rel (%p118) target = $region16
        $region15: #{interfaced_model_forward.5} parent=11 // pred_region
          _
        $region16: #{interfaced_model_forward.5} parent=11 // pred_fallthru
          _
        // Predicated region
        $region17: #{interfaced_model_forward.5} parent=11 // pred_check
          %p121 = pneg %p77
        $region18: #{interfaced_model_forward.5} parent=11 // pred_check_branch
          %123 = sbr.rel (%p121) target = $region20
        $region19: #{interfaced_model_forward.5} parent=11 // pred_region
          _
        $region20: #{interfaced_model_forward.5} parent=11 // pred_fallthru
          _
      $region12: #{interfaced_model_forward.5} parent=5 // pred_fallthru
        _
      %p124 = scmp.lt.s32.totalorder %s9, 4
      // Predicated region
      $region21: #{interfaced_model_forward.5} parent=5 // pred_check
        %p125 = pneg %p124
      $region22: #{interfaced_model_forward.5} parent=5 // pred_check_branch
        %127 = sbr.rel (%p125) target = $region24
      $region23: #{interfaced_model_forward.5} parent=5 // pred_region
        // Predicated region
        $region25: #{interfaced_model_forward.5} parent=23 // pred_check
          %p128 = pneg %p29
        $region26: #{interfaced_model_forward.5} parent=23 // pred_check_branch
          %130 = sbr.rel (%p128) target = $region28
        $region27: #{interfaced_model_forward.5} parent=23 // pred_region
          %s131 = smul.u32 64, %s9
          %s132 = ssub.s32 196, %s131
          %p133 = scmp.lt.s32.totalorder %s132, 64
          %s134 = scalar_select %p133, %s132, 64
          %s135 = smul.u32 128, %s134
          %p136 = scmp.lt.s32.totalorder %s131, 195
          %s137 = scalar_select %p136, %s131, 195
          %s138 = smul.addr %s137, 8
          %s139 = scalar_lea.vmem %s0, %s138
          %s140 = smul.u32 64, %s9
          %s141 = ssub.s32 196, %s140
          %p142 = scmp.lt.s32.totalorder %s141, 64
          %s143 = scalar_select %p142, %s141, 64
          %s144 = smul.u32 128, %s143
        $region28: #{interfaced_model_forward.5} parent=23 // pred_fallthru
          _
      $region24: #{interfaced_model_forward.5} parent=5 // pred_fallthru
        _
      %p145 = scmp.le.s32.totalorder 1, %s9
      %p146 = scmp.lt.s32.totalorder %s9, 5
      %p147 = pnand %p145, %p146
      %p148 = pneg %p147
      // Predicated region
      $region29: #{interfaced_model_forward.5} parent=5 // pred_check
        _
      $region30: #{interfaced_model_forward.5} parent=5 // pred_check_branch
        %150 = sbr.rel (%p147) target = $region32
      $region31: #{interfaced_model_forward.5} parent=5 // pred_region
        %s151 = ssub.s32 %s9, 1
        %s152 = smul.u32 64, %s14
        %s153 = ssub.s32 196, %s152
        %p154 = scmp.lt.s32.totalorder %s153, 64
        %s155 = scalar_select %p154, %s153, 64
        %s156 = smul.u32 128, %s155
        %p157 = scmp.lt.s32.totalorder %s152, 195
        %s158 = scalar_select %p157, %s152, 195
        %s159 = smul.addr %s158, 8
        %s160 = scalar_lea.vmem %s0, %s159
        %p161 = pneg %p35
        %p162 = pneg %p32
        %p163 = pneg %p56
        %p164 = pneg %p53
        %p165 = pneg %p77
        %p166 = pneg %p74
        %p167 = pneg %p103
        %p168 = pneg %p100
        %s169 = sand.u32 %s90, 1
        %s170 = sand.u32 %s90, 1
        %s171 = smul.addr %s170, 512
        %s172 = scalar_lea.vmem [#allocation2], %s171
        %s173 = smul.u32 64, %s14
        %s174 = ssub.s32 196, %s173
        %p175 = scmp.lt.s32.totalorder %s174, 64
        %s176 = scalar_select %p175, %s174, 64
        %s177 = smul.u32 128, %s176
        %p178 = scmp.lt.s32.totalorder %s173, 195
        %s179 = scalar_select %p178, %s173, 195
        %s180 = smul.addr %s179, 8
        %s181 = scalar_lea.vmem %s0, %s180
        %s182 = smul.u32 64, %s14
        %s183 = ssub.s32 196, %s182
        %p184 = scmp.lt.s32.totalorder %s183, 64
        %s185 = scalar_select %p184, %s183, 64
        %s186 = smul.u32 128, %s185
        %s187 = smul.u32 64, %s14
        %s188 = ssub.s32 196, %s187
        %p189 = scmp.lt.s32.totalorder %s188, 64
        %s190 = scalar_select %p189, %s188, 64
        %s191 = smul.u32 128, %s190
        %v193 = vld [vmem:[%s181] sm:$0xff]
        %v194 = vld [vmem:[%s181 + $0x8] sm:$0xff]
        %v195 = vld [vmem:[%s181 + $0x10] sm:$0xff]
        %v196 = vld [vmem:[%s181 + $0x18] sm:$0xff]
        %v197 = vld [vmem:[%s181 + $0x20] sm:$0xff]
        %v198 = vld [vmem:[%s181 + $0x28] sm:$0xff]
        %v199 = vld [vmem:[%s181 + $0x30] sm:$0xff]
        %v200 = vld [vmem:[%s181 + $0x38] sm:$0xff]
        %v201 = vld [vmem:[%s181 + $0x40] sm:$0xff]
        %v202 = vld [vmem:[%s181 + $0x48] sm:$0xff]
        %v203 = vld [vmem:[%s181 + $0x50] sm:$0xff]
        %v204 = vld [vmem:[%s181 + $0x58] sm:$0xff]
        %v205 = vld [vmem:[%s181 + $0x60] sm:$0xff]
        %v206 = vld [vmem:[%s181 + $0x68] sm:$0xff]
        %v207 = vld [vmem:[%s181 + $0x70] sm:$0xff]
        %v208 = vld [vmem:[%s181 + $0x78] sm:$0xff]
        %v209 = vld [vmem:[%s181 + $0x80] sm:$0xff]
        %v210 = vld [vmem:[%s181 + $0x88] sm:$0xff]
        %v211 = vld [vmem:[%s181 + $0x90] sm:$0xff]
        %v212 = vld [vmem:[%s181 + $0x98] sm:$0xff]
        %v213 = vld [vmem:[%s181 + $0xa0] sm:$0xff]
        %v214 = vld [vmem:[%s181 + $0xa8] sm:$0xff]
        %v215 = vld [vmem:[%s181 + $0xb0] sm:$0xff]
        %v216 = vld [vmem:[%s181 + $0xb8] sm:$0xff]
        %v217 = vld [vmem:[%s181 + $0xc0] sm:$0xff]
        %v218 = vld [vmem:[%s181 + $0xc8] sm:$0xff]
        %v219 = vld [vmem:[%s181 + $0xd0] sm:$0xff]
        %v220 = vld [vmem:[%s181 + $0xd8] sm:$0xff]
        %v221 = vld [vmem:[%s181 + $0xe0] sm:$0xff]
        %v222 = vld [vmem:[%s181 + $0xe8] sm:$0xff]
        %v223 = vld [vmem:[%s181 + $0xf0] sm:$0xff]
        %v224 = vld [vmem:[%s181 + $0xf8] sm:$0xff]
        %v225 = vld [vmem:[%s181 + $0x100] sm:$0xff]
        %v226 = vld [vmem:[%s181 + $0x108] sm:$0xff]
        %v227 = vld [vmem:[%s181 + $0x110] sm:$0xff]
        %v228 = vld [vmem:[%s181 + $0x118] sm:$0xff]
        %v229 = vld [vmem:[%s181 + $0x120] sm:$0xff]
        %v230 = vld [vmem:[%s181 + $0x128] sm:$0xff]
        %v231 = vld [vmem:[%s181 + $0x130] sm:$0xff]
        %v232 = vld [vmem:[%s181 + $0x138] sm:$0xff]
        %v233 = vld [vmem:[%s181 + $0x140] sm:$0xff]
        %v234 = vld [vmem:[%s181 + $0x148] sm:$0xff]
        %v235 = vld [vmem:[%s181 + $0x150] sm:$0xff]
        %v236 = vld [vmem:[%s181 + $0x158] sm:$0xff]
        %v237 = vld [vmem:[%s181 + $0x160] sm:$0xff]
        %v238 = vld [vmem:[%s181 + $0x168] sm:$0xff]
        %v239 = vld [vmem:[%s181 + $0x170] sm:$0xff]
        %v240 = vld [vmem:[%s181 + $0x178] sm:$0xff]
        %v241 = vld [vmem:[%s181 + $0x180] sm:$0xff]
        %v242 = vld [vmem:[%s181 + $0x188] sm:$0xff]
        %v243 = vld [vmem:[%s181 + $0x190] sm:$0xff]
        %v244 = vld [vmem:[%s181 + $0x198] sm:$0xff]
        %v245 = vld [vmem:[%s181 + $0x1a0] sm:$0xff]
        %v246 = vld [vmem:[%s181 + $0x1a8] sm:$0xff]
        %v247 = vld [vmem:[%s181 + $0x1b0] sm:$0xff]
        %v248 = vld [vmem:[%s181 + $0x1b8] sm:$0xff]
        %v249 = vld [vmem:[%s181 + $0x1c0] sm:$0xff]
        %v250 = vld [vmem:[%s181 + $0x1c8] sm:$0xff]
        %v251 = vld [vmem:[%s181 + $0x1d0] sm:$0xff]
        %v252 = vld [vmem:[%s181 + $0x1d8] sm:$0xff]
        %v253 = vld [vmem:[%s181 + $0x1e0] sm:$0xff]
        %v254 = vld [vmem:[%s181 + $0x1e8] sm:$0xff]
        %v255 = vld [vmem:[%s181 + $0x1f0] sm:$0xff]
        %v256 = vld [vmem:[%s181 + $0x1f8] sm:$0xff]
        %v257 = vpack.c.bf16 %v194, %v193
        %v258 = vpack.c.bf16 %v196, %v195
        %v259 = vpack.c.bf16 %v198, %v197
        %v260 = vpack.c.bf16 %v200, %v199
        %v261 = vpack.c.bf16 %v202, %v201
        %v262 = vpack.c.bf16 %v204, %v203
        %v263 = vpack.c.bf16 %v206, %v205
        %v264 = vpack.c.bf16 %v208, %v207
        %v265 = vpack.c.bf16 %v210, %v209
        %v266 = vpack.c.bf16 %v212, %v211
        %v267 = vpack.c.bf16 %v214, %v213
        %v268 = vpack.c.bf16 %v216, %v215
        %v269 = vpack.c.bf16 %v218, %v217
        %v270 = vpack.c.bf16 %v220, %v219
        %v271 = vpack.c.bf16 %v222, %v221
        %v272 = vpack.c.bf16 %v224, %v223
        %v273 = vpack.c.bf16 %v226, %v225
        %v274 = vpack.c.bf16 %v228, %v227
        %v275 = vpack.c.bf16 %v230, %v229
        %v276 = vpack.c.bf16 %v232, %v231
        %v277 = vpack.c.bf16 %v234, %v233
        %v278 = vpack.c.bf16 %v236, %v235
        %v279 = vpack.c.bf16 %v238, %v237
        %v280 = vpack.c.bf16 %v240, %v239
        %v281 = vpack.c.bf16 %v242, %v241
        %v282 = vpack.c.bf16 %v244, %v243
        %v283 = vpack.c.bf16 %v246, %v245
        %v284 = vpack.c.bf16 %v248, %v247
        %v285 = vpack.c.bf16 %v250, %v249
        %v286 = vpack.c.bf16 %v252, %v251
        %v287 = vpack.c.bf16 %v254, %v253
        %v288 = vpack.c.bf16 %v256, %v255
        %v289 = vld [vmem:[%s1] sm:$0xf]
        %v290 = vld [vmem:[%s1 + $0x4] sm:$0x1]
        %v291 = vld [vmem:[%s2] sm:$0x1]
        %v293 = vlaneseq
        %v294 = vshrl.u32 %v293, 7
        %v295 = vsub.s32 0, %v294
        %v296 = vrot.slane %v291, %v295
        %v300 = vunpack.c.l.b16 %v289
        %v301 = vunpack.c.l.b16 %v290
        %v302 = vpack.c.b16 %v301, %v300
        %vm303 = vcmask 72704
        %v305 = vsel %vm303, %v257, 0
        %v308 = vsel %vm303, %v258, 0
        %v311 = vsel %vm303, %v259, 0
        %v314 = vsel %vm303, %v260, 0
        %v317 = vsel %vm303, %v261, 0
        %v320 = vsel %vm303, %v262, 0
        %v323 = vsel %vm303, %v263, 0
        %v326 = vsel %vm303, %v264, 0
        %v329 = vsel %vm303, %v265, 0
        %v332 = vsel %vm303, %v266, 0
        %v335 = vsel %vm303, %v267, 0
        %v338 = vsel %vm303, %v268, 0
        %v341 = vsel %vm303, %v269, 0
        %v344 = vsel %vm303, %v270, 0
        %v347 = vsel %vm303, %v271, 0
        %v350 = vsel %vm303, %v272, 0
        %v353 = vsel %vm303, %v273, 0
        %v356 = vsel %vm303, %v274, 0
        %v359 = vsel %vm303, %v275, 0
        %v362 = vsel %vm303, %v276, 0
        %v365 = vsel %vm303, %v277, 0
        %v368 = vsel %vm303, %v278, 0
        %v371 = vsel %vm303, %v279, 0
        %v374 = vsel %vm303, %v280, 0
        %v377 = vsel %vm303, %v281, 0
        %v380 = vsel %vm303, %v282, 0
        %v383 = vsel %vm303, %v283, 0
        %v386 = vsel %vm303, %v284, 0
        %v389 = vsel %vm303, %v285, 0
        %v392 = vsel %vm303, %v286, 0
        %v395 = vsel %vm303, %v287, 0
        %v398 = vsel %vm303, %v288, 0
        %vm400 = vcmask 1043456
        %vm401 = vcmask 1044480
        %v402 = vsel %vm400, 4294967295, 65535
        %v403 = vsel %vm401, %v402, 0
        %v405 = vand.u32 %v302, %v403
        %407 = vmatprep.subr.bf16.mxu0 0
        %408 = vmatpush1.bf16.msra.mxu0 %v405
        %409 = vmatprep.subr.bf16.mxu0 0
        %410 = vmatpush1.bf16.msra.mxu0 0
        %411 = vmatprep.subr.bf16.mxu0 0
        %412 = vmatpush1.bf16.msra.mxu0 0
        %413 = vmatprep.subr.bf16.mxu0 0
        %414 = vmatpush1.bf16.msra.mxu0 0
        %415 = vmatprep.subr.bf16.mxu0 0
        %416 = vmatpush1.bf16.msra.mxu0 0
        %417 = vmatprep.subr.bf16.mxu0 0
        %418 = vmatpush1.bf16.msra.mxu0 0
        %419 = vmatprep.subr.bf16.mxu0 0
        %420 = vmatpush1.bf16.msra.mxu0 0
        %421 = vmatprep.subr.bf16.mxu0 0
        %422 = vmatpush1.bf16.msra.mxu0 0
        %423 = vmatprep.subr.bf16.mxu0 0
        %424 = vmatpush1.bf16.msra.mxu0 0
        %425 = vmatprep.subr.bf16.mxu0 0
        %426 = vmatpush1.bf16.msra.mxu0 0
        %427 = vmatprep.subr.bf16.mxu0 0
        %428 = vmatpush1.bf16.msra.mxu0 0
        %429 = vmatprep.subr.bf16.mxu0 0
        %430 = vmatpush1.bf16.msra.mxu0 0
        %431 = vmatprep.subr.bf16.mxu0 0
        %432 = vmatpush1.bf16.msra.mxu0 0
        %433 = vmatprep.subr.bf16.mxu0 0
        %434 = vmatpush1.bf16.msra.mxu0 0
        %435 = vmatprep.subr.bf16.mxu0 0
        %436 = vmatpush1.bf16.msra.mxu0 0
        %437 = vmatprep.subr.bf16.mxu0 0
        %438 = vmatpush1.bf16.msra.mxu0 0
        %439 = vmatprep.mubr.bf16.mxu0 0
        %440 = vmatmul.mubr.bf16.gmra.mrb[0].mxu0 %v305
        %v441 = vpop.f32.mrb[0].mxu0
        %v442 = vadd.f32 %v296, %v441
        %v443 = vpop.f32.mrb[0].mxu0
        %v444 = vpop.f32.mrb[0].mxu0
        %v445 = vadd.f32 %v296, %v444
        %v446 = vpop.f32.mrb[0].mxu0
        %447 = vmatprep.mubr.bf16.mxu0 0
        %448 = vmatmul.mubr.bf16.gmra.mrb[0].mxu0 %v308
        %v449 = vpop.f32.mrb[0].mxu0
        %v450 = vadd.f32 %v296, %v449
        %v451 = vpop.f32.mrb[0].mxu0
        %v452 = vpop.f32.mrb[0].mxu0
        %v453 = vadd.f32 %v296, %v452
        %v454 = vpop.f32.mrb[0].mxu0
        %455 = vmatprep.mubr.bf16.mxu0 0
        %456 = vmatmul.mubr.bf16.gmra.mrb[0].mxu0 %v311
        %v457 = vpop.f32.mrb[0].mxu0
        %v458 = vadd.f32 %v296, %v457
        %v459 = vpop.f32.mrb[0].mxu0
        %v460 = vpop.f32.mrb[0].mxu0
        %v461 = vadd.f32 %v296, %v460
        %v462 = vpop.f32.mrb[0].mxu0
        %463 = vmatprep.mubr.bf16.mxu0 0
        %464 = vmatmul.mubr.bf16.gmra.mrb[0].mxu0 %v314
        %v465 = vpop.f32.mrb[0].mxu0
        %v466 = vadd.f32 %v296, %v465
        %v467 = vpop.f32.mrb[0].mxu0
        %v468 = vpop.f32.mrb[0].mxu0
        %v469 = vadd.f32 %v296, %v468
        %v470 = vpop.f32.mrb[0].mxu0
        %471 = vmatprep.mubr.bf16.mxu0 0
        %472 = vmatmul.mubr.bf16.gmra.mrb[0].mxu0 %v317
        %v473 = vpop.f32.mrb[0].mxu0
        %v474 = vadd.f32 %v296, %v473
        %v475 = vpop.f32.mrb[0].mxu0
        %v476 = vpop.f32.mrb[0].mxu0
        %v477 = vadd.f32 %v296, %v476
        %v478 = vpop.f32.mrb[0].mxu0
        %479 = vmatprep.mubr.bf16.mxu0 0
        %480 = vmatmul.mubr.bf16.gmra.mrb[0].mxu0 %v320
        %v481 = vpop.f32.mrb[0].mxu0
        %v482 = vadd.f32 %v296, %v481
        %v483 = vpop.f32.mrb[0].mxu0
        %v484 = vpop.f32.mrb[0].mxu0
        %v485 = vadd.f32 %v296, %v484
        %v486 = vpop.f32.mrb[0].mxu0
        %487 = vmatprep.mubr.bf16.mxu0 0
        %488 = vmatmul.mubr.bf16.gmra.mrb[0].mxu0 %v323
        %v489 = vpop.f32.mrb[0].mxu0
        %v490 = vadd.f32 %v296, %v489
        %v491 = vpop.f32.mrb[0].mxu0
        %v492 = vpop.f32.mrb[0].mxu0
        %v493 = vadd.f32 %v296, %v492
        %v494 = vpop.f32.mrb[0].mxu0
        %495 = vmatprep.mubr.bf16.mxu0 0
        %496 = vmatmul.mubr.bf16.gmra.mrb[0].mxu0 %v326
        %v497 = vpop.f32.mrb[0].mxu0
        %v498 = vadd.f32 %v296, %v497
        %v499 = vpop.f32.mrb[0].mxu0
        %v500 = vpop.f32.mrb[0].mxu0
        %v501 = vadd.f32 %v296, %v500
        %v502 = vpop.f32.mrb[0].mxu0
        %503 = vmatprep.mubr.bf16.mxu0 0
        %504 = vmatmul.mubr.bf16.gmra.mrb[0].mxu0 %v329
        %v505 = vpop.f32.mrb[0].mxu0
        %v506 = vadd.f32 %v296, %v505
        %v507 = vpop.f32.mrb[0].mxu0
        %v508 = vpop.f32.mrb[0].mxu0
        %v509 = vadd.f32 %v296, %v508
        %v510 = vpop.f32.mrb[0].mxu0
        %511 = vmatprep.mubr.bf16.mxu0 0
        %512 = vmatmul.mubr.bf16.gmra.mrb[0].mxu0 %v332
        %v513 = vpop.f32.mrb[0].mxu0
        %v514 = vadd.f32 %v296, %v513
        %v515 = vpop.f32.mrb[0].mxu0
        %v516 = vpop.f32.mrb[0].mxu0
        %v517 = vadd.f32 %v296, %v516
        %v518 = vpop.f32.mrb[0].mxu0
        %519 = vmatprep.mubr.bf16.mxu0 0
        %520 = vmatmul.mubr.bf16.gmra.mrb[0].mxu0 %v335
        %v521 = vpop.f32.mrb[0].mxu0
        %v522 = vadd.f32 %v296, %v521
        %v523 = vpop.f32.mrb[0].mxu0
        %v524 = vpop.f32.mrb[0].mxu0
        %v525 = vadd.f32 %v296, %v524
        %v526 = vpop.f32.mrb[0].mxu0
        %527 = vmatprep.mubr.bf16.mxu0 0
        %528 = vmatmul.mubr.bf16.gmra.mrb[0].mxu0 %v338
        %v529 = vpop.f32.mrb[0].mxu0
        %v530 = vadd.f32 %v296, %v529
        %v531 = vpop.f32.mrb[0].mxu0
        %v532 = vpop.f32.mrb[0].mxu0
        %v533 = vadd.f32 %v296, %v532
        %v534 = vpop.f32.mrb[0].mxu0
        %535 = vmatprep.mubr.bf16.mxu0 0
        %536 = vmatmul.mubr.bf16.gmra.mrb[0].mxu0 %v341
        %v537 = vpop.f32.mrb[0].mxu0
        %v538 = vadd.f32 %v296, %v537
        %v539 = vpop.f32.mrb[0].mxu0
        %v540 = vpop.f32.mrb[0].mxu0
        %v541 = vadd.f32 %v296, %v540
        %v542 = vpop.f32.mrb[0].mxu0
        %543 = vmatprep.mubr.bf16.mxu0 0
        %544 = vmatmul.mubr.bf16.gmra.mrb[0].mxu0 %v344
        %v545 = vpop.f32.mrb[0].mxu0
        %v546 = vadd.f32 %v296, %v545
        %v547 = vpop.f32.mrb[0].mxu0
        %v548 = vpop.f32.mrb[0].mxu0
        %v549 = vadd.f32 %v296, %v548
        %v550 = vpop.f32.mrb[0].mxu0
        %551 = vmatprep.mubr.bf16.mxu0 0
        %552 = vmatmul.mubr.bf16.gmra.mrb[0].mxu0 %v347
        %v553 = vpop.f32.mrb[0].mxu0
        %v554 = vadd.f32 %v296, %v553
        %v555 = vpop.f32.mrb[0].mxu0
        %v556 = vpop.f32.mrb[0].mxu0
        %v557 = vadd.f32 %v296, %v556
        %v558 = vpop.f32.mrb[0].mxu0
        %559 = vmatprep.mubr.bf16.mxu0 0
        %560 = vmatmul.mubr.bf16.gmra.mrb[0].mxu0 %v350
        %v561 = vpop.f32.mrb[0].mxu0
        %v562 = vadd.f32 %v296, %v561
        %v563 = vpop.f32.mrb[0].mxu0
        %v564 = vpop.f32.mrb[0].mxu0
        %v565 = vadd.f32 %v296, %v564
        %v566 = vpop.f32.mrb[0].mxu0
        %567 = vmatprep.mubr.bf16.mxu0 0
        %568 = vmatmul.mubr.bf16.gmra.mrb[0].mxu0 %v353
        %v569 = vpop.f32.mrb[0].mxu0
        %v570 = vadd.f32 %v296, %v569
        %v571 = vpop.f32.mrb[0].mxu0
        %v572 = vpop.f32.mrb[0].mxu0
        %v573 = vadd.f32 %v296, %v572
        %v574 = vpop.f32.mrb[0].mxu0
        %575 = vmatprep.mubr.bf16.mxu0 0
        %576 = vmatmul.mubr.bf16.gmra.mrb[0].mxu0 %v356
        %v577 = vpop.f32.mrb[0].mxu0
        %v578 = vadd.f32 %v296, %v577
        %v579 = vpop.f32.mrb[0].mxu0
        %v580 = vpop.f32.mrb[0].mxu0
        %v581 = vadd.f32 %v296, %v580
        %v582 = vpop.f32.mrb[0].mxu0
        %583 = vmatprep.mubr.bf16.mxu0 0
        %584 = vmatmul.mubr.bf16.gmra.mrb[0].mxu0 %v359
        %v585 = vpop.f32.mrb[0].mxu0
        %v586 = vadd.f32 %v296, %v585
        %v587 = vpop.f32.mrb[0].mxu0
        %v588 = vpop.f32.mrb[0].mxu0
        %v589 = vadd.f32 %v296, %v588
        %v590 = vpop.f32.mrb[0].mxu0
        %591 = vmatprep.mubr.bf16.mxu0 0
        %592 = vmatmul.mubr.bf16.gmra.mrb[0].mxu0 %v362
        %v593 = vpop.f32.mrb[0].mxu0
        %v594 = vadd.f32 %v296, %v593
        %v595 = vpop.f32.mrb[0].mxu0
        %v596 = vpop.f32.mrb[0].mxu0
        %v597 = vadd.f32 %v296, %v596
        %v598 = vpop.f32.mrb[0].mxu0
        %599 = vmatprep.mubr.bf16.mxu0 0
        %600 = vmatmul.mubr.bf16.gmra.mrb[0].mxu0 %v365
        %v601 = vpop.f32.mrb[0].mxu0
        %v602 = vadd.f32 %v296, %v601
        %v603 = vpop.f32.mrb[0].mxu0
        %v604 = vpop.f32.mrb[0].mxu0
        %v605 = vadd.f32 %v296, %v604
        %v606 = vpop.f32.mrb[0].mxu0
        %607 = vmatprep.mubr.bf16.mxu0 0
        %608 = vmatmul.mubr.bf16.gmra.mrb[0].mxu0 %v368
        %v609 = vpop.f32.mrb[0].mxu0
        %v610 = vadd.f32 %v296, %v609
        %v611 = vpop.f32.mrb[0].mxu0
        %v612 = vpop.f32.mrb[0].mxu0
        %v613 = vadd.f32 %v296, %v612
        %v614 = vpop.f32.mrb[0].mxu0
        %615 = vmatprep.mubr.bf16.mxu0 0
        %616 = vmatmul.mubr.bf16.gmra.mrb[0].mxu0 %v371
        %v617 = vpop.f32.mrb[0].mxu0
        %v618 = vadd.f32 %v296, %v617
        %v619 = vpop.f32.mrb[0].mxu0
        %v620 = vpop.f32.mrb[0].mxu0
        %v621 = vadd.f32 %v296, %v620
        %v622 = vpop.f32.mrb[0].mxu0
        %623 = vmatprep.mubr.bf16.mxu0 0
        %624 = vmatmul.mubr.bf16.gmra.mrb[0].mxu0 %v374
        %v625 = vpop.f32.mrb[0].mxu0
        %v626 = vadd.f32 %v296, %v625
        %v627 = vpop.f32.mrb[0].mxu0
        %v628 = vpop.f32.mrb[0].mxu0
        %v629 = vadd.f32 %v296, %v628
        %v630 = vpop.f32.mrb[0].mxu0
        %631 = vmatprep.mubr.bf16.mxu0 0
        %632 = vmatmul.mubr.bf16.gmra.mrb[0].mxu0 %v377
        %v633 = vpop.f32.mrb[0].mxu0
        %v634 = vadd.f32 %v296, %v633
        %v635 = vpop.f32.mrb[0].mxu0
        %v636 = vpop.f32.mrb[0].mxu0
        %v637 = vadd.f32 %v296, %v636
        %v638 = vpop.f32.mrb[0].mxu0
        %639 = vmatprep.mubr.bf16.mxu0 0
        %640 = vmatmul.mubr.bf16.gmra.mrb[0].mxu0 %v380
        %v641 = vpop.f32.mrb[0].mxu0
        %v642 = vadd.f32 %v296, %v641
        %v643 = vpop.f32.mrb[0].mxu0
        %v644 = vpop.f32.mrb[0].mxu0
        %v645 = vadd.f32 %v296, %v644
        %v646 = vpop.f32.mrb[0].mxu0
        %647 = vmatprep.mubr.bf16.mxu0 0
        %648 = vmatmul.mubr.bf16.gmra.mrb[0].mxu0 %v383
        %v649 = vpop.f32.mrb[0].mxu0
        %v650 = vadd.f32 %v296, %v649
        %v651 = vpop.f32.mrb[0].mxu0
        %v652 = vpop.f32.mrb[0].mxu0
        %v653 = vadd.f32 %v296, %v652
        %v654 = vpop.f32.mrb[0].mxu0
        %655 = vmatprep.mubr.bf16.mxu0 0
        %656 = vmatmul.mubr.bf16.gmra.mrb[0].mxu0 %v386
        %v657 = vpop.f32.mrb[0].mxu0
        %v658 = vadd.f32 %v296, %v657
        %v659 = vpop.f32.mrb[0].mxu0
        %v660 = vpop.f32.mrb[0].mxu0
        %v661 = vadd.f32 %v296, %v660
        %v662 = vpop.f32.mrb[0].mxu0
        %663 = vmatprep.mubr.bf16.mxu0 0
        %664 = vmatmul.mubr.bf16.gmra.mrb[0].mxu0 %v389
        %v665 = vpop.f32.mrb[0].mxu0
        %v666 = vadd.f32 %v296, %v665
        %v667 = vpop.f32.mrb[0].mxu0
        %v668 = vpop.f32.mrb[0].mxu0
        %v669 = vadd.f32 %v296, %v668
        %v670 = vpop.f32.mrb[0].mxu0
        %671 = vmatprep.mubr.bf16.mxu0 0
        %672 = vmatmul.mubr.bf16.gmra.mrb[0].mxu0 %v392
        %v673 = vpop.f32.mrb[0].mxu0
        %v674 = vadd.f32 %v296, %v673
        %v675 = vpop.f32.mrb[0].mxu0
        %v676 = vpop.f32.mrb[0].mxu0
        %v677 = vadd.f32 %v296, %v676
        %v678 = vpop.f32.mrb[0].mxu0
        %679 = vmatprep.mubr.bf16.mxu0 0
        %680 = vmatmul.mubr.bf16.gmra.mrb[0].mxu0 %v395
        %v681 = vpop.f32.mrb[0].mxu0
        %v682 = vadd.f32 %v296, %v681
        %v683 = vpop.f32.mrb[0].mxu0
        %v684 = vpop.f32.mrb[0].mxu0
        %v685 = vadd.f32 %v296, %v684
        %v686 = vpop.f32.mrb[0].mxu0
        %687 = vmatprep.mubr.bf16.mxu0 0
        %688 = vmatmul.mubr.bf16.gmra.mrb[0].mxu0 %v398
        %v689 = vpop.f32.mrb[0].mxu0
        %v690 = vadd.f32 %v296, %v689
        %v691 = vpop.f32.mrb[0].mxu0
        %v692 = vpop.f32.mrb[0].mxu0
        %v693 = vadd.f32 %v296, %v692
        %v694 = vpop.f32.mrb[0].mxu0
        %695 = vdwg.mxu0
        %v696 = vmax.f32 %v442, 0.0
        %v697 = vmax.f32 %v445, 0.0
        %v698 = vmax.f32 %v450, 0.0
        %v699 = vmax.f32 %v453, 0.0
        %v700 = vmax.f32 %v458, 0.0
        %v701 = vmax.f32 %v461, 0.0
        %v702 = vmax.f32 %v466, 0.0
        %v703 = vmax.f32 %v469, 0.0
        %v704 = vmax.f32 %v474, 0.0
        %v705 = vmax.f32 %v477, 0.0
        %v706 = vmax.f32 %v482, 0.0
        %v707 = vmax.f32 %v485, 0.0
        %v708 = vmax.f32 %v490, 0.0
        %v709 = vmax.f32 %v493, 0.0
        %v710 = vmax.f32 %v498, 0.0
        %v711 = vmax.f32 %v501, 0.0
        %v712 = vmax.f32 %v506, 0.0
        %v713 = vmax.f32 %v509, 0.0
        %v714 = vmax.f32 %v514, 0.0
        %v715 = vmax.f32 %v517, 0.0
        %v716 = vmax.f32 %v522, 0.0
        %v717 = vmax.f32 %v525, 0.0
        %v718 = vmax.f32 %v530, 0.0
        %v719 = vmax.f32 %v533, 0.0
        %v720 = vmax.f32 %v538, 0.0
        %v721 = vmax.f32 %v541, 0.0
        %v722 = vmax.f32 %v546, 0.0
        %v723 = vmax.f32 %v549, 0.0
        %v724 = vmax.f32 %v554, 0.0
        %v725 = vmax.f32 %v557, 0.0
        %v726 = vmax.f32 %v562, 0.0
        %v727 = vmax.f32 %v565, 0.0
        %v728 = vmax.f32 %v570, 0.0
        %v729 = vmax.f32 %v573, 0.0
        %v730 = vmax.f32 %v578, 0.0
        %v731 = vmax.f32 %v581, 0.0
        %v732 = vmax.f32 %v586, 0.0
        %v733 = vmax.f32 %v589, 0.0
        %v734 = vmax.f32 %v594, 0.0
        %v735 = vmax.f32 %v597, 0.0
        %v736 = vmax.f32 %v602, 0.0
        %v737 = vmax.f32 %v605, 0.0
        %v738 = vmax.f32 %v610, 0.0
        %v739 = vmax.f32 %v613, 0.0
        %v740 = vmax.f32 %v618, 0.0
        %v741 = vmax.f32 %v621, 0.0
        %v742 = vmax.f32 %v626, 0.0
        %v743 = vmax.f32 %v629, 0.0
        %v744 = vmax.f32 %v634, 0.0
        %v745 = vmax.f32 %v637, 0.0
        %v746 = vmax.f32 %v642, 0.0
        %v747 = vmax.f32 %v645, 0.0
        %v748 = vmax.f32 %v650, 0.0
        %v749 = vmax.f32 %v653, 0.0
        %v750 = vmax.f32 %v658, 0.0
        %v751 = vmax.f32 %v661, 0.0
        %v752 = vmax.f32 %v666, 0.0
        %v753 = vmax.f32 %v669, 0.0
        %v754 = vmax.f32 %v674, 0.0
        %v755 = vmax.f32 %v677, 0.0
        %v756 = vmax.f32 %v682, 0.0
        %v757 = vmax.f32 %v685, 0.0
        %v758 = vmax.f32 %v690, 0.0
        %v759 = vmax.f32 %v693, 0.0
        %vm760 = vcmask 64512
        %761 = vst.msk [vmem:[%s172] sm:$0xff] %vm760, %v696
        %762 = vst.msk [vmem:[%s172 + $0x8] sm:$0xff] %vm760, %v697
        %763 = vst.msk [vmem:[%s172 + $0x10] sm:$0xff] %vm760, %v698
        %764 = vst.msk [vmem:[%s172 + $0x18] sm:$0xff] %vm760, %v699
        %765 = vst.msk [vmem:[%s172 + $0x20] sm:$0xff] %vm760, %v700
        %766 = vst.msk [vmem:[%s172 + $0x28] sm:$0xff] %vm760, %v701
        %767 = vst.msk [vmem:[%s172 + $0x30] sm:$0xff] %vm760, %v702
        %768 = vst.msk [vmem:[%s172 + $0x38] sm:$0xff] %vm760, %v703
        %769 = vst.msk [vmem:[%s172 + $0x40] sm:$0xff] %vm760, %v704
        %770 = vst.msk [vmem:[%s172 + $0x48] sm:$0xff] %vm760, %v705
        %771 = vst.msk [vmem:[%s172 + $0x50] sm:$0xff] %vm760, %v706
        %772 = vst.msk [vmem:[%s172 + $0x58] sm:$0xff] %vm760, %v707
        %773 = vst.msk [vmem:[%s172 + $0x60] sm:$0xff] %vm760, %v708
        %774 = vst.msk [vmem:[%s172 + $0x68] sm:$0xff] %vm760, %v709
        %775 = vst.msk [vmem:[%s172 + $0x70] sm:$0xff] %vm760, %v710
        %776 = vst.msk [vmem:[%s172 + $0x78] sm:$0xff] %vm760, %v711
        %777 = vst.msk [vmem:[%s172 + $0x80] sm:$0xff] %vm760, %v712
        %778 = vst.msk [vmem:[%s172 + $0x88] sm:$0xff] %vm760, %v713
        %779 = vst.msk [vmem:[%s172 + $0x90] sm:$0xff] %vm760, %v714
        %780 = vst.msk [vmem:[%s172 + $0x98] sm:$0xff] %vm760, %v715
        %781 = vst.msk [vmem:[%s172 + $0xa0] sm:$0xff] %vm760, %v716
        %782 = vst.msk [vmem:[%s172 + $0xa8] sm:$0xff] %vm760, %v717
        %783 = vst.msk [vmem:[%s172 + $0xb0] sm:$0xff] %vm760, %v718
        %784 = vst.msk [vmem:[%s172 + $0xb8] sm:$0xff] %vm760, %v719
        %785 = vst.msk [vmem:[%s172 + $0xc0] sm:$0xff] %vm760, %v720
        %786 = vst.msk [vmem:[%s172 + $0xc8] sm:$0xff] %vm760, %v721
        %787 = vst.msk [vmem:[%s172 + $0xd0] sm:$0xff] %vm760, %v722
        %788 = vst.msk [vmem:[%s172 + $0xd8] sm:$0xff] %vm760, %v723
        %789 = vst.msk [vmem:[%s172 + $0xe0] sm:$0xff] %vm760, %v724
        %790 = vst.msk [vmem:[%s172 + $0xe8] sm:$0xff] %vm760, %v725
        %791 = vst.msk [vmem:[%s172 + $0xf0] sm:$0xff] %vm760, %v726
        %792 = vst.msk [vmem:[%s172 + $0xf8] sm:$0xff] %vm760, %v727
        %793 = vst.msk [vmem:[%s172 + $0x100] sm:$0xff] %vm760, %v728
        %794 = vst.msk [vmem:[%s172 + $0x108] sm:$0xff] %vm760, %v729
        %795 = vst.msk [vmem:[%s172 + $0x110] sm:$0xff] %vm760, %v730
        %796 = vst.msk [vmem:[%s172 + $0x118] sm:$0xff] %vm760, %v731
        %797 = vst.msk [vmem:[%s172 + $0x120] sm:$0xff] %vm760, %v732
        %798 = vst.msk [vmem:[%s172 + $0x128] sm:$0xff] %vm760, %v733
        %799 = vst.msk [vmem:[%s172 + $0x130] sm:$0xff] %vm760, %v734
        %800 = vst.msk [vmem:[%s172 + $0x138] sm:$0xff] %vm760, %v735
        %801 = vst.msk [vmem:[%s172 + $0x140] sm:$0xff] %vm760, %v736
        %802 = vst.msk [vmem:[%s172 + $0x148] sm:$0xff] %vm760, %v737
        %803 = vst.msk [vmem:[%s172 + $0x150] sm:$0xff] %vm760, %v738
        %804 = vst.msk [vmem:[%s172 + $0x158] sm:$0xff] %vm760, %v739
        %805 = vst.msk [vmem:[%s172 + $0x160] sm:$0xff] %vm760, %v740
        %806 = vst.msk [vmem:[%s172 + $0x168] sm:$0xff] %vm760, %v741
        %807 = vst.msk [vmem:[%s172 + $0x170] sm:$0xff] %vm760, %v742
        %808 = vst.msk [vmem:[%s172 + $0x178] sm:$0xff] %vm760, %v743
        %809 = vst.msk [vmem:[%s172 + $0x180] sm:$0xff] %vm760, %v744
        %810 = vst.msk [vmem:[%s172 + $0x188] sm:$0xff] %vm760, %v745
        %811 = vst.msk [vmem:[%s172 + $0x190] sm:$0xff] %vm760, %v746
        %812 = vst.msk [vmem:[%s172 + $0x198] sm:$0xff] %vm760, %v747
        %813 = vst.msk [vmem:[%s172 + $0x1a0] sm:$0xff] %vm760, %v748
        %814 = vst.msk [vmem:[%s172 + $0x1a8] sm:$0xff] %vm760, %v749
        %815 = vst.msk [vmem:[%s172 + $0x1b0] sm:$0xff] %vm760, %v750
        %816 = vst.msk [vmem:[%s172 + $0x1b8] sm:$0xff] %vm760, %v751
        %817 = vst.msk [vmem:[%s172 + $0x1c0] sm:$0xff] %vm760, %v752
        %818 = vst.msk [vmem:[%s172 + $0x1c8] sm:$0xff] %vm760, %v753
        %819 = vst.msk [vmem:[%s172 + $0x1d0] sm:$0xff] %vm760, %v754
        %820 = vst.msk [vmem:[%s172 + $0x1d8] sm:$0xff] %vm760, %v755
        %821 = vst.msk [vmem:[%s172 + $0x1e0] sm:$0xff] %vm760, %v756
        %822 = vst.msk [vmem:[%s172 + $0x1e8] sm:$0xff] %vm760, %v757
        %823 = vst.msk [vmem:[%s172 + $0x1f0] sm:$0xff] %vm760, %v758
        %824 = vst.msk [vmem:[%s172 + $0x1f8] sm:$0xff] %vm760, %v759
        %s825 = sand.u32 %s90, 1
        %s826 = sand.u32 %s90, 1
        %s827 = smul.addr %s826, 512
        %s828 = scalar_lea.vmem [#allocation2], %s827
        // Predicated region
        $region33: #{interfaced_model_forward.5} parent=31 // pred_check
          %p829 = pneg %p100
        $region34: #{interfaced_model_forward.5} parent=31 // pred_check_branch
          %831 = sbr.rel (%p829) target = $region36
        $region35: #{interfaced_model_forward.5} parent=31 // pred_region
          %s832 = smul.u32 64, %s14
          %s833 = ssub.s32 196, %s832
          %p834 = scmp.lt.s32.totalorder %s833, 64
          %s835 = scalar_select %p834, %s833, 64
          %s836 = smul.u32 128, %s835
          %p837 = scmp.ne.s32.totalorder 0, %s836
          %s838 = smul.addr %s832, 8
          %s839 = scalar_lea.vmem %s3, %s838
          // Predicated region
          $region37: #{interfaced_model_forward.5} parent=35 // pred_check
            %p840 = pneg %p837
          $region38: #{interfaced_model_forward.5} parent=35 // pred_check_branch
            %842 = sbr.rel (%p840) target = $region40
          $region39: #{interfaced_model_forward.5} parent=35 // pred_region
            // Predicated region
            $region41: #{interfaced_model_forward.5} parent=39 // pred_check
              _
            $region42: #{interfaced_model_forward.5} parent=39 // pred_check_branch
              %844 = sbr.rel (0) target = $region44
            $region43: #{interfaced_model_forward.5} parent=39 // pred_region
              // Predicated region
              $region63: #{interfaced_model_forward.5} parent=43 // pred_check
                _
              $region64: #{interfaced_model_forward.5} parent=43 // pred_check_branch
                %1019 = sbr.rel (0) target = $region66
              $region65: #{interfaced_model_forward.5} parent=43 // pred_region
                %s1020 = sshrl.u32 %s835, 6
                // While loop
                $region67: #{interfaced_model_forward.5} parent=65 // loop_pre_header
                  _
                $region68: #{interfaced_model_forward.5} parent=65 // loop_header
                  %s1022 = sphi 0, %s1024
                  %p1023 = scmp.ge.s32.totalorder %s1022, %s1020
                  %s1027 = sphi 0, %s1160
                  %s1028 = sphi %s828, %s1163
                  %s1029 = sphi %s839, %s1164
                $region69: #{interfaced_model_forward.5} parent=65 // loop_header_branch
                  %1026 = sbr.rel (%p1023) target = $region73
                $region70: #{interfaced_model_forward.5} parent=65 // loop_body
                  %v1030 = vld [vmem:[%s1028] sm:$0xff]
                  %1031 = vst [vmem:[%s1029] sm:$0xff] %v1030
                  %v1032 = vld [vmem:[%s1028 + $0x8] sm:$0xff]
                  %1033 = vst [vmem:[%s1029 + $0x8] sm:$0xff] %v1032
                  %v1034 = vld [vmem:[%s1028 + $0x10] sm:$0xff]
                  %1035 = vst [vmem:[%s1029 + $0x10] sm:$0xff] %v1034
                  %v1036 = vld [vmem:[%s1028 + $0x18] sm:$0xff]
                  %1037 = vst [vmem:[%s1029 + $0x18] sm:$0xff] %v1036
                  %v1038 = vld [vmem:[%s1028 + $0x20] sm:$0xff]
                  %1039 = vst [vmem:[%s1029 + $0x20] sm:$0xff] %v1038
                  %v1040 = vld [vmem:[%s1028 + $0x28] sm:$0xff]
                  %1041 = vst [vmem:[%s1029 + $0x28] sm:$0xff] %v1040
                  %v1042 = vld [vmem:[%s1028 + $0x30] sm:$0xff]
                  %1043 = vst [vmem:[%s1029 + $0x30] sm:$0xff] %v1042
                  %v1044 = vld [vmem:[%s1028 + $0x38] sm:$0xff]
                  %1045 = vst [vmem:[%s1029 + $0x38] sm:$0xff] %v1044
                  %v1046 = vld [vmem:[%s1028 + $0x40] sm:$0xff]
                  %1047 = vst [vmem:[%s1029 + $0x40] sm:$0xff] %v1046
                  %v1048 = vld [vmem:[%s1028 + $0x48] sm:$0xff]
                  %1049 = vst [vmem:[%s1029 + $0x48] sm:$0xff] %v1048
                  %v1050 = vld [vmem:[%s1028 + $0x50] sm:$0xff]
                  %1051 = vst [vmem:[%s1029 + $0x50] sm:$0xff] %v1050
                  %v1052 = vld [vmem:[%s1028 + $0x58] sm:$0xff]
                  %1053 = vst [vmem:[%s1029 + $0x58] sm:$0xff] %v1052
                  %v1054 = vld [vmem:[%s1028 + $0x60] sm:$0xff]
                  %1055 = vst [vmem:[%s1029 + $0x60] sm:$0xff] %v1054
                  %v1056 = vld [vmem:[%s1028 + $0x68] sm:$0xff]
                  %1057 = vst [vmem:[%s1029 + $0x68] sm:$0xff] %v1056
                  %v1058 = vld [vmem:[%s1028 + $0x70] sm:$0xff]
                  %1059 = vst [vmem:[%s1029 + $0x70] sm:$0xff] %v1058
                  %v1060 = vld [vmem:[%s1028 + $0x78] sm:$0xff]
                  %1061 = vst [vmem:[%s1029 + $0x78] sm:$0xff] %v1060
                  %v1062 = vld [vmem:[%s1028 + $0x80] sm:$0xff]
                  %1063 = vst [vmem:[%s1029 + $0x80] sm:$0xff] %v1062
                  %v1064 = vld [vmem:[%s1028 + $0x88] sm:$0xff]
                  %1065 = vst [vmem:[%s1029 + $0x88] sm:$0xff] %v1064
                  %v1066 = vld [vmem:[%s1028 + $0x90] sm:$0xff]
                  %1067 = vst [vmem:[%s1029 + $0x90] sm:$0xff] %v1066
                  %v1068 = vld [vmem:[%s1028 + $0x98] sm:$0xff]
                  %1069 = vst [vmem:[%s1029 + $0x98] sm:$0xff] %v1068
                  %v1070 = vld [vmem:[%s1028 + $0xa0] sm:$0xff]
                  %1071 = vst [vmem:[%s1029 + $0xa0] sm:$0xff] %v1070
                  %v1072 = vld [vmem:[%s1028 + $0xa8] sm:$0xff]
                  %1073 = vst [vmem:[%s1029 + $0xa8] sm:$0xff] %v1072
                  %v1074 = vld [vmem:[%s1028 + $0xb0] sm:$0xff]
                  %1075 = vst [vmem:[%s1029 + $0xb0] sm:$0xff] %v1074
                  %v1076 = vld [vmem:[%s1028 + $0xb8] sm:$0xff]
                  %1077 = vst [vmem:[%s1029 + $0xb8] sm:$0xff] %v1076
                  %v1078 = vld [vmem:[%s1028 + $0xc0] sm:$0xff]
                  %1079 = vst [vmem:[%s1029 + $0xc0] sm:$0xff] %v1078
                  %v1080 = vld [vmem:[%s1028 + $0xc8] sm:$0xff]
                  %1081 = vst [vmem:[%s1029 + $0xc8] sm:$0xff] %v1080
                  %v1082 = vld [vmem:[%s1028 + $0xd0] sm:$0xff]
                  %1083 = vst [vmem:[%s1029 + $0xd0] sm:$0xff] %v1082
                  %v1084 = vld [vmem:[%s1028 + $0xd8] sm:$0xff]
                  %1085 = vst [vmem:[%s1029 + $0xd8] sm:$0xff] %v1084
                  %v1086 = vld [vmem:[%s1028 + $0xe0] sm:$0xff]
                  %1087 = vst [vmem:[%s1029 + $0xe0] sm:$0xff] %v1086
                  %v1088 = vld [vmem:[%s1028 + $0xe8] sm:$0xff]
                  %1089 = vst [vmem:[%s1029 + $0xe8] sm:$0xff] %v1088
                  %v1090 = vld [vmem:[%s1028 + $0xf0] sm:$0xff]
                  %1091 = vst [vmem:[%s1029 + $0xf0] sm:$0xff] %v1090
                  %v1092 = vld [vmem:[%s1028 + $0xf8] sm:$0xff]
                  %1093 = vst [vmem:[%s1029 + $0xf8] sm:$0xff] %v1092
                  %v1094 = vld [vmem:[%s1028 + $0x100] sm:$0xff]
                  %1095 = vst [vmem:[%s1029 + $0x100] sm:$0xff] %v1094
                  %v1096 = vld [vmem:[%s1028 + $0x108] sm:$0xff]
                  %1097 = vst [vmem:[%s1029 + $0x108] sm:$0xff] %v1096
                  %v1098 = vld [vmem:[%s1028 + $0x110] sm:$0xff]
                  %1099 = vst [vmem:[%s1029 + $0x110] sm:$0xff] %v1098
                  %v1100 = vld [vmem:[%s1028 + $0x118] sm:$0xff]
                  %1101 = vst [vmem:[%s1029 + $0x118] sm:$0xff] %v1100
                  %v1102 = vld [vmem:[%s1028 + $0x120] sm:$0xff]
                  %1103 = vst [vmem:[%s1029 + $0x120] sm:$0xff] %v1102
                  %v1104 = vld [vmem:[%s1028 + $0x128] sm:$0xff]
                  %1105 = vst [vmem:[%s1029 + $0x128] sm:$0xff] %v1104
                  %v1106 = vld [vmem:[%s1028 + $0x130] sm:$0xff]
                  %1107 = vst [vmem:[%s1029 + $0x130] sm:$0xff] %v1106
                  %v1108 = vld [vmem:[%s1028 + $0x138] sm:$0xff]
                  %1109 = vst [vmem:[%s1029 + $0x138] sm:$0xff] %v1108
                  %v1110 = vld [vmem:[%s1028 + $0x140] sm:$0xff]
                  %1111 = vst [vmem:[%s1029 + $0x140] sm:$0xff] %v1110
                  %v1112 = vld [vmem:[%s1028 + $0x148] sm:$0xff]
                  %1113 = vst [vmem:[%s1029 + $0x148] sm:$0xff] %v1112
                  %v1114 = vld [vmem:[%s1028 + $0x150] sm:$0xff]
                  %1115 = vst [vmem:[%s1029 + $0x150] sm:$0xff] %v1114
                  %v1116 = vld [vmem:[%s1028 + $0x158] sm:$0xff]
                  %1117 = vst [vmem:[%s1029 + $0x158] sm:$0xff] %v1116
                  %v1118 = vld [vmem:[%s1028 + $0x160] sm:$0xff]
                  %1119 = vst [vmem:[%s1029 + $0x160] sm:$0xff] %v1118
                  %v1120 = vld [vmem:[%s1028 + $0x168] sm:$0xff]
                  %1121 = vst [vmem:[%s1029 + $0x168] sm:$0xff] %v1120
                  %v1122 = vld [vmem:[%s1028 + $0x170] sm:$0xff]
                  %1123 = vst [vmem:[%s1029 + $0x170] sm:$0xff] %v1122
                  %v1124 = vld [vmem:[%s1028 + $0x178] sm:$0xff]
                  %1125 = vst [vmem:[%s1029 + $0x178] sm:$0xff] %v1124
                  %v1126 = vld [vmem:[%s1028 + $0x180] sm:$0xff]
                  %1127 = vst [vmem:[%s1029 + $0x180] sm:$0xff] %v1126
                  %v1128 = vld [vmem:[%s1028 + $0x188] sm:$0xff]
                  %1129 = vst [vmem:[%s1029 + $0x188] sm:$0xff] %v1128
                  %v1130 = vld [vmem:[%s1028 + $0x190] sm:$0xff]
                  %1131 = vst [vmem:[%s1029 + $0x190] sm:$0xff] %v1130
                  %v1132 = vld [vmem:[%s1028 + $0x198] sm:$0xff]
                  %1133 = vst [vmem:[%s1029 + $0x198] sm:$0xff] %v1132
                  %v1134 = vld [vmem:[%s1028 + $0x1a0] sm:$0xff]
                  %1135 = vst [vmem:[%s1029 + $0x1a0] sm:$0xff] %v1134
                  %v1136 = vld [vmem:[%s1028 + $0x1a8] sm:$0xff]
                  %1137 = vst [vmem:[%s1029 + $0x1a8] sm:$0xff] %v1136
                  %v1138 = vld [vmem:[%s1028 + $0x1b0] sm:$0xff]
                  %1139 = vst [vmem:[%s1029 + $0x1b0] sm:$0xff] %v1138
                  %v1140 = vld [vmem:[%s1028 + $0x1b8] sm:$0xff]
                  %1141 = vst [vmem:[%s1029 + $0x1b8] sm:$0xff] %v1140
                  %v1142 = vld [vmem:[%s1028 + $0x1c0] sm:$0xff]
                  %1143 = vst [vmem:[%s1029 + $0x1c0] sm:$0xff] %v1142
                  %v1144 = vld [vmem:[%s1028 + $0x1c8] sm:$0xff]
                  %1145 = vst [vmem:[%s1029 + $0x1c8] sm:$0xff] %v1144
                  %v1146 = vld [vmem:[%s1028 + $0x1d0] sm:$0xff]
                  %1147 = vst [vmem:[%s1029 + $0x1d0] sm:$0xff] %v1146
                  %v1148 = vld [vmem:[%s1028 + $0x1d8] sm:$0xff]
                  %1149 = vst [vmem:[%s1029 + $0x1d8] sm:$0xff] %v1148
                  %v1150 = vld [vmem:[%s1028 + $0x1e0] sm:$0xff]
                  %1151 = vst [vmem:[%s1029 + $0x1e0] sm:$0xff] %v1150
                  %v1152 = vld [vmem:[%s1028 + $0x1e8] sm:$0xff]
                  %1153 = vst [vmem:[%s1029 + $0x1e8] sm:$0xff] %v1152
                  %v1154 = vld [vmem:[%s1028 + $0x1f0] sm:$0xff]
                  %1155 = vst [vmem:[%s1029 + $0x1f0] sm:$0xff] %v1154
                  %v1156 = vld [vmem:[%s1028 + $0x1f8] sm:$0xff]
                  %1157 = vst [vmem:[%s1029 + $0x1f8] sm:$0xff] %v1156
                  %s1158 = sadd.s32 1, %s1027
                  %p1159 = scmp.ge.s32.totalorder %s1158, %s1020
                  %s1160 = scalar_select %p1159, 0, %s1158
                  %s1161 = smul.u32 %s1160, 512
                  %s1162 = smul.u32 %s1160, 512
                  %s1163 = scalar_lea.vmem %s828, %s1161 [#allocation2]
                  %s1164 = scalar_lea.vmem %s839, %s1162
                $region71: #{interfaced_model_forward.5} parent=65 // loop_footer
                  %s1024 = sadd.s32 %s1022, 1
                $region72: #{interfaced_model_forward.5} parent=65 // loop_footer_branch
                  %1021 = sbr.rel target = $region68
                $region73: #{interfaced_model_forward.5} parent=65 // loop_exit
                  _
                %s1165 = sshrl.u32 %s835, 6
                %s1166 = sand.u32 %s835, 63
                %s1167 = smul.u32 %s1165, 64
                %s1168 = smul.u32 8, %s1167
                %s1169 = scalar_lea.vmem %s828, %s1168 [#allocation2]
                %s1170 = smul.u32 8, %s1167
                %s1171 = scalar_lea.vmem %s839, %s1170
                // While loop
                $region74: #{interfaced_model_forward.5} parent=65 // loop_pre_header
                  _
                $region75: #{interfaced_model_forward.5} parent=65 // loop_header
                  %s1173 = sphi 0, %s1175
                  %p1174 = scmp.ge.s32.totalorder %s1173, %s1166
                  %s1178 = sphi 0, %s1185
                  %s1179 = sphi %s1169, %s1188
                  %s1180 = sphi %s1171, %s1189
                $region76: #{interfaced_model_forward.5} parent=65 // loop_header_branch
                  %1177 = sbr.rel (%p1174) target = $region80
                $region77: #{interfaced_model_forward.5} parent=65 // loop_body
                  %v1181 = vld [vmem:[%s1179] sm:$0xff]
                  %1182 = vst [vmem:[%s1180] sm:$0xff] %v1181
                  %s1183 = sadd.s32 1, %s1178
                  %p1184 = scmp.ge.s32.totalorder %s1183, %s1166
                  %s1185 = scalar_select %p1184, 0, %s1183
                  %s1186 = smul.u32 %s1185, 8
                  %s1187 = smul.u32 %s1185, 8
                  %s1188 = scalar_lea.vmem %s1169, %s1186 [#allocation2]
                  %s1189 = scalar_lea.vmem %s1171, %s1187
                $region78: #{interfaced_model_forward.5} parent=65 // loop_footer
                  %s1175 = sadd.s32 %s1173, 1
                $region79: #{interfaced_model_forward.5} parent=65 // loop_footer_branch
                  %1172 = sbr.rel target = $region75
                $region80: #{interfaced_model_forward.5} parent=65 // loop_exit
                  _
              $region66: #{interfaced_model_forward.5} parent=43 // pred_fallthru
                _
              // Predicated region
              $region81: #{interfaced_model_forward.5} parent=43 // pred_check
                _
              $region82: #{interfaced_model_forward.5} parent=43 // pred_check_branch
                %1191 = sbr.rel target = $region84
              $region83: #{interfaced_model_forward.5} parent=43 // pred_region
                _
              $region84: #{interfaced_model_forward.5} parent=43 // pred_fallthru
                _
            $region44: #{interfaced_model_forward.5} parent=39 // pred_fallthru
              _
            // Predicated region
            $region45: #{interfaced_model_forward.5} parent=39 // pred_check
              _
            $region46: #{interfaced_model_forward.5} parent=39 // pred_check_branch
              %846 = sbr.rel target = $region48
            $region47: #{interfaced_model_forward.5} parent=39 // pred_region
              %s848 = sshrl.u32 %s835, 6
              // While loop
              $region49: #{interfaced_model_forward.5} parent=47 // loop_pre_header
                _
              $region50: #{interfaced_model_forward.5} parent=47 // loop_header
                %s850 = sphi 0, %s852
                %p851 = scmp.ge.s32.totalorder %s850, %s848
                %s855 = sphi 0, %s988
                %s856 = sphi %s828, %s991
                %s857 = sphi %s839, %s992
              $region51: #{interfaced_model_forward.5} parent=47 // loop_header_branch
                %854 = sbr.rel (%p851) target = $region55
              $region52: #{interfaced_model_forward.5} parent=47 // loop_body
                %v858 = vld [vmem:[%s856] sm:$0xff]
                %859 = vst [vmem:[%s857] sm:$0xff] %v858
                %v860 = vld [vmem:[%s856 + $0x8] sm:$0xff]
                %861 = vst [vmem:[%s857 + $0x8] sm:$0xff] %v860
                %v862 = vld [vmem:[%s856 + $0x10] sm:$0xff]
                %863 = vst [vmem:[%s857 + $0x10] sm:$0xff] %v862
                %v864 = vld [vmem:[%s856 + $0x18] sm:$0xff]
                %865 = vst [vmem:[%s857 + $0x18] sm:$0xff] %v864
                %v866 = vld [vmem:[%s856 + $0x20] sm:$0xff]
                %867 = vst [vmem:[%s857 + $0x20] sm:$0xff] %v866
                %v868 = vld [vmem:[%s856 + $0x28] sm:$0xff]
                %869 = vst [vmem:[%s857 + $0x28] sm:$0xff] %v868
                %v870 = vld [vmem:[%s856 + $0x30] sm:$0xff]
                %871 = vst [vmem:[%s857 + $0x30] sm:$0xff] %v870
                %v872 = vld [vmem:[%s856 + $0x38] sm:$0xff]
                %873 = vst [vmem:[%s857 + $0x38] sm:$0xff] %v872
                %v874 = vld [vmem:[%s856 + $0x40] sm:$0xff]
                %875 = vst [vmem:[%s857 + $0x40] sm:$0xff] %v874
                %v876 = vld [vmem:[%s856 + $0x48] sm:$0xff]
                %877 = vst [vmem:[%s857 + $0x48] sm:$0xff] %v876
                %v878 = vld [vmem:[%s856 + $0x50] sm:$0xff]
                %879 = vst [vmem:[%s857 + $0x50] sm:$0xff] %v878
                %v880 = vld [vmem:[%s856 + $0x58] sm:$0xff]
                %881 = vst [vmem:[%s857 + $0x58] sm:$0xff] %v880
                %v882 = vld [vmem:[%s856 + $0x60] sm:$0xff]
                %883 = vst [vmem:[%s857 + $0x60] sm:$0xff] %v882
                %v884 = vld [vmem:[%s856 + $0x68] sm:$0xff]
                %885 = vst [vmem:[%s857 + $0x68] sm:$0xff] %v884
                %v886 = vld [vmem:[%s856 + $0x70] sm:$0xff]
                %887 = vst [vmem:[%s857 + $0x70] sm:$0xff] %v886
                %v888 = vld [vmem:[%s856 + $0x78] sm:$0xff]
                %889 = vst [vmem:[%s857 + $0x78] sm:$0xff] %v888
                %v890 = vld [vmem:[%s856 + $0x80] sm:$0xff]
                %891 = vst [vmem:[%s857 + $0x80] sm:$0xff] %v890
                %v892 = vld [vmem:[%s856 + $0x88] sm:$0xff]
                %893 = vst [vmem:[%s857 + $0x88] sm:$0xff] %v892
                %v894 = vld [vmem:[%s856 + $0x90] sm:$0xff]
                %895 = vst [vmem:[%s857 + $0x90] sm:$0xff] %v894
                %v896 = vld [vmem:[%s856 + $0x98] sm:$0xff]
                %897 = vst [vmem:[%s857 + $0x98] sm:$0xff] %v896
                %v898 = vld [vmem:[%s856 + $0xa0] sm:$0xff]
                %899 = vst [vmem:[%s857 + $0xa0] sm:$0xff] %v898
                %v900 = vld [vmem:[%s856 + $0xa8] sm:$0xff]
                %901 = vst [vmem:[%s857 + $0xa8] sm:$0xff] %v900
                %v902 = vld [vmem:[%s856 + $0xb0] sm:$0xff]
                %903 = vst [vmem:[%s857 + $0xb0] sm:$0xff] %v902
                %v904 = vld [vmem:[%s856 + $0xb8] sm:$0xff]
                %905 = vst [vmem:[%s857 + $0xb8] sm:$0xff] %v904
                %v906 = vld [vmem:[%s856 + $0xc0] sm:$0xff]
                %907 = vst [vmem:[%s857 + $0xc0] sm:$0xff] %v906
                %v908 = vld [vmem:[%s856 + $0xc8] sm:$0xff]
                %909 = vst [vmem:[%s857 + $0xc8] sm:$0xff] %v908
                %v910 = vld [vmem:[%s856 + $0xd0] sm:$0xff]
                %911 = vst [vmem:[%s857 + $0xd0] sm:$0xff] %v910
                %v912 = vld [vmem:[%s856 + $0xd8] sm:$0xff]
                %913 = vst [vmem:[%s857 + $0xd8] sm:$0xff] %v912
                %v914 = vld [vmem:[%s856 + $0xe0] sm:$0xff]
                %915 = vst [vmem:[%s857 + $0xe0] sm:$0xff] %v914
                %v916 = vld [vmem:[%s856 + $0xe8] sm:$0xff]
                %917 = vst [vmem:[%s857 + $0xe8] sm:$0xff] %v916
                %v918 = vld [vmem:[%s856 + $0xf0] sm:$0xff]
                %919 = vst [vmem:[%s857 + $0xf0] sm:$0xff] %v918
                %v920 = vld [vmem:[%s856 + $0xf8] sm:$0xff]
                %921 = vst [vmem:[%s857 + $0xf8] sm:$0xff] %v920
                %v922 = vld [vmem:[%s856 + $0x100] sm:$0xff]
                %923 = vst [vmem:[%s857 + $0x100] sm:$0xff] %v922
                %v924 = vld [vmem:[%s856 + $0x108] sm:$0xff]
                %925 = vst [vmem:[%s857 + $0x108] sm:$0xff] %v924
                %v926 = vld [vmem:[%s856 + $0x110] sm:$0xff]
                %927 = vst [vmem:[%s857 + $0x110] sm:$0xff] %v926
                %v928 = vld [vmem:[%s856 + $0x118] sm:$0xff]
                %929 = vst [vmem:[%s857 + $0x118] sm:$0xff] %v928
                %v930 = vld [vmem:[%s856 + $0x120] sm:$0xff]
                %931 = vst [vmem:[%s857 + $0x120] sm:$0xff] %v930
                %v932 = vld [vmem:[%s856 + $0x128] sm:$0xff]
                %933 = vst [vmem:[%s857 + $0x128] sm:$0xff] %v932
                %v934 = vld [vmem:[%s856 + $0x130] sm:$0xff]
                %935 = vst [vmem:[%s857 + $0x130] sm:$0xff] %v934
                %v936 = vld [vmem:[%s856 + $0x138] sm:$0xff]
                %937 = vst [vmem:[%s857 + $0x138] sm:$0xff] %v936
                %v938 = vld [vmem:[%s856 + $0x140] sm:$0xff]
                %939 = vst [vmem:[%s857 + $0x140] sm:$0xff] %v938
                %v940 = vld [vmem:[%s856 + $0x148] sm:$0xff]
                %941 = vst [vmem:[%s857 + $0x148] sm:$0xff] %v940
                %v942 = vld [vmem:[%s856 + $0x150] sm:$0xff]
                %943 = vst [vmem:[%s857 + $0x150] sm:$0xff] %v942
                %v944 = vld [vmem:[%s856 + $0x158] sm:$0xff]
                %945 = vst [vmem:[%s857 + $0x158] sm:$0xff] %v944
                %v946 = vld [vmem:[%s856 + $0x160] sm:$0xff]
                %947 = vst [vmem:[%s857 + $0x160] sm:$0xff] %v946
                %v948 = vld [vmem:[%s856 + $0x168] sm:$0xff]
                %949 = vst [vmem:[%s857 + $0x168] sm:$0xff] %v948
                %v950 = vld [vmem:[%s856 + $0x170] sm:$0xff]
                %951 = vst [vmem:[%s857 + $0x170] sm:$0xff] %v950
                %v952 = vld [vmem:[%s856 + $0x178] sm:$0xff]
                %953 = vst [vmem:[%s857 + $0x178] sm:$0xff] %v952
                %v954 = vld [vmem:[%s856 + $0x180] sm:$0xff]
                %955 = vst [vmem:[%s857 + $0x180] sm:$0xff] %v954
                %v956 = vld [vmem:[%s856 + $0x188] sm:$0xff]
                %957 = vst [vmem:[%s857 + $0x188] sm:$0xff] %v956
                %v958 = vld [vmem:[%s856 + $0x190] sm:$0xff]
                %959 = vst [vmem:[%s857 + $0x190] sm:$0xff] %v958
                %v960 = vld [vmem:[%s856 + $0x198] sm:$0xff]
                %961 = vst [vmem:[%s857 + $0x198] sm:$0xff] %v960
                %v962 = vld [vmem:[%s856 + $0x1a0] sm:$0xff]
                %963 = vst [vmem:[%s857 + $0x1a0] sm:$0xff] %v962
                %v964 = vld [vmem:[%s856 + $0x1a8] sm:$0xff]
                %965 = vst [vmem:[%s857 + $0x1a8] sm:$0xff] %v964
                %v966 = vld [vmem:[%s856 + $0x1b0] sm:$0xff]
                %967 = vst [vmem:[%s857 + $0x1b0] sm:$0xff] %v966
                %v968 = vld [vmem:[%s856 + $0x1b8] sm:$0xff]
                %969 = vst [vmem:[%s857 + $0x1b8] sm:$0xff] %v968
                %v970 = vld [vmem:[%s856 + $0x1c0] sm:$0xff]
                %971 = vst [vmem:[%s857 + $0x1c0] sm:$0xff] %v970
                %v972 = vld [vmem:[%s856 + $0x1c8] sm:$0xff]
                %973 = vst [vmem:[%s857 + $0x1c8] sm:$0xff] %v972
                %v974 = vld [vmem:[%s856 + $0x1d0] sm:$0xff]
                %975 = vst [vmem:[%s857 + $0x1d0] sm:$0xff] %v974
                %v976 = vld [vmem:[%s856 + $0x1d8] sm:$0xff]
                %977 = vst [vmem:[%s857 + $0x1d8] sm:$0xff] %v976
                %v978 = vld [vmem:[%s856 + $0x1e0] sm:$0xff]
                %979 = vst [vmem:[%s857 + $0x1e0] sm:$0xff] %v978
                %v980 = vld [vmem:[%s856 + $0x1e8] sm:$0xff]
                %981 = vst [vmem:[%s857 + $0x1e8] sm:$0xff] %v980
                %v982 = vld [vmem:[%s856 + $0x1f0] sm:$0xff]
                %983 = vst [vmem:[%s857 + $0x1f0] sm:$0xff] %v982
                %v984 = vld [vmem:[%s856 + $0x1f8] sm:$0xff]
                %985 = vst [vmem:[%s857 + $0x1f8] sm:$0xff] %v984
                %s986 = sadd.s32 1, %s855
                %p987 = scmp.ge.s32.totalorder %s986, %s848
                %s988 = scalar_select %p987, 0, %s986
                %s989 = smul.u32 %s988, 512
                %s990 = smul.u32 %s988, 512
                %s991 = scalar_lea.vmem %s828, %s989 [#allocation2]
                %s992 = scalar_lea.vmem %s839, %s990
              $region53: #{interfaced_model_forward.5} parent=47 // loop_footer
                %s852 = sadd.s32 %s850, 1
              $region54: #{interfaced_model_forward.5} parent=47 // loop_footer_branch
                %849 = sbr.rel target = $region50
              $region55: #{interfaced_model_forward.5} parent=47 // loop_exit
                _
              %s993 = sshrl.u32 %s835, 6
              %s994 = sand.u32 %s835, 63
              %s995 = smul.u32 %s993, 64
              %s996 = smul.u32 8, %s995
              %s997 = scalar_lea.vmem %s828, %s996 [#allocation2]
              %s998 = smul.u32 8, %s995
              %s999 = scalar_lea.vmem %s839, %s998
              // While loop
              $region56: #{interfaced_model_forward.5} parent=47 // loop_pre_header
                _
              $region57: #{interfaced_model_forward.5} parent=47 // loop_header
                %s1001 = sphi 0, %s1003
                %p1002 = scmp.ge.s32.totalorder %s1001, %s994
                %s1006 = sphi 0, %s1013
                %s1007 = sphi %s997, %s1016
                %s1008 = sphi %s999, %s1017
              $region58: #{interfaced_model_forward.5} parent=47 // loop_header_branch
                %1005 = sbr.rel (%p1002) target = $region62
              $region59: #{interfaced_model_forward.5} parent=47 // loop_body
                %v1009 = vld [vmem:[%s1007] sm:$0xff]
                %1010 = vst [vmem:[%s1008] sm:$0xff] %v1009
                %s1011 = sadd.s32 1, %s1006
                %p1012 = scmp.ge.s32.totalorder %s1011, %s994
                %s1013 = scalar_select %p1012, 0, %s1011
                %s1014 = smul.u32 %s1013, 8
                %s1015 = smul.u32 %s1013, 8
                %s1016 = scalar_lea.vmem %s997, %s1014 [#allocation2]
                %s1017 = scalar_lea.vmem %s999, %s1015
              $region60: #{interfaced_model_forward.5} parent=47 // loop_footer
                %s1003 = sadd.s32 %s1001, 1
              $region61: #{interfaced_model_forward.5} parent=47 // loop_footer_branch
                %1000 = sbr.rel target = $region57
              $region62: #{interfaced_model_forward.5} parent=47 // loop_exit
                _
            $region48: #{interfaced_model_forward.5} parent=39 // pred_fallthru
              _
          $region40: #{interfaced_model_forward.5} parent=35 // pred_fallthru
            _
          %1192 = vnop
        $region36: #{interfaced_model_forward.5} parent=31 // pred_fallthru
          _
      $region32: #{interfaced_model_forward.5} parent=5 // pred_fallthru
        _
      %p1193 = scmp.le.s32.totalorder 2, %s9
      // Predicated region
      $region85: #{interfaced_model_forward.5} parent=5 // pred_check
        %p1194 = pneg %p1193
      $region86: #{interfaced_model_forward.5} parent=5 // pred_check_branch
        %1196 = sbr.rel (%p1194) target = $region88
      $region87: #{interfaced_model_forward.5} parent=5 // pred_region
        %s1197 = ssub.s32 %s9, 2
        // Predicated region
        $region89: #{interfaced_model_forward.5} parent=87 // pred_check
          %p1198 = pneg %p106
        $region90: #{interfaced_model_forward.5} parent=87 // pred_check_branch
          %1200 = sbr.rel (%p1198) target = $region92
        $region91: #{interfaced_model_forward.5} parent=87 // pred_region
          %s1201 = sand.u32 %s91, 1
          %s1202 = sand.u32 %s91, 1
          %s1203 = smul.addr %s1202, 512
          %s1204 = scalar_lea.vmem [#allocation2], %s1203
        $region92: #{interfaced_model_forward.5} parent=87 // pred_fallthru
          _
      $region88: #{interfaced_model_forward.5} parent=5 // pred_fallthru
        _
    $region6: #{interfaced_model_forward.5} parent=1 // loop_footer
      %s13 = sadd.s32 1, %s9
    $region7: #{interfaced_model_forward.5} parent=1 // loop_footer_branch
      %8 = sbr.rel target = $region3
    $region8: #{interfaced_model_forward.5} parent=1 // loop_exit
      _

// kernel: interfaced_model_forward.6
$region0: #{interfaced_model_forward.6}
  #allocation0 [shape = 'u32[]', space=smem, size = 0x4, offset = 0x4, fixed_abs, tag = 'smem constant byte address 0x4 - core index']
  #allocation1 [shape = 'u32[144,128]{1,0:T(1,128)}', space=vmem, size = 0x12000, scoped, tag = 'internal scratch']
  %s0 = inlined_call_operand.vmem [shape: f32[392,72], index: 0, kind: input, shape index: {}]
  %s1 = inlined_call_operand.vmem [shape: bf16[72,16], index: 1, kind: input, shape index: {}]
  %s2 = inlined_call_operand.vmem [shape: f32[1,16], index: 2, kind: input, shape index: {}]
  %s3 = inlined_call_operand.vmem [shape: f32[392,16], index: 3, kind: output, shape index: {}]
  %s4 = sld [smem:[#allocation0]]
  $region22: #{interfaced_model_forward.6} parent=0
    _
  %s6 = ssub.s32 1, %s4
  %s7 = scalar_select 0, %s6, %s4
  // Predicated region
  $region2: #{interfaced_model_forward.6} parent=0 // pred_check
    _
  $region3: #{interfaced_model_forward.6} parent=0 // pred_check_branch
    %9 = sbr.rel (0) target = $region5
  $region4: #{interfaced_model_forward.6} parent=0 // pred_region
    _
  $region5: #{interfaced_model_forward.6} parent=0 // pred_fallthru
    _
  // Predicated region
  $region6: #{interfaced_model_forward.6} parent=0 // pred_check
    _
  $region7: #{interfaced_model_forward.6} parent=0 // pred_check_branch
    %11 = sbr.rel (0) target = $region9
  $region8: #{interfaced_model_forward.6} parent=0 // pred_region
    _
  $region9: #{interfaced_model_forward.6} parent=0 // pred_fallthru
    _
  // Predicated region
  $region10: #{interfaced_model_forward.6} parent=0 // pred_check
    _
  $region11: #{interfaced_model_forward.6} parent=0 // pred_check_branch
    %13 = sbr.rel (0) target = $region13
  $region12: #{interfaced_model_forward.6} parent=0 // pred_region
    _
  $region13: #{interfaced_model_forward.6} parent=0 // pred_fallthru
    _
  %v15 = vld [vmem:[%s0] sm:$0xff]
  %v16 = vld [vmem:[%s0 + $0x8] sm:$0xff]
  %v17 = vld [vmem:[%s0 + $0x10] sm:$0xff]
  %v18 = vld [vmem:[%s0 + $0x18] sm:$0xff]
  %v19 = vld [vmem:[%s0 + $0x20] sm:$0xff]
  %v20 = vld [vmem:[%s0 + $0x28] sm:$0xff]
  %v21 = vld [vmem:[%s0 + $0x30] sm:$0xff]
  %v22 = vld [vmem:[%s0 + $0x38] sm:$0xff]
  %v23 = vld [vmem:[%s0 + $0x40] sm:$0xff]
  %v24 = vld [vmem:[%s0 + $0x48] sm:$0xff]
  %v25 = vld [vmem:[%s0 + $0x50] sm:$0xff]
  %v26 = vld [vmem:[%s0 + $0x58] sm:$0xff]
  %v27 = vld [vmem:[%s0 + $0x60] sm:$0xff]
  %v28 = vld [vmem:[%s0 + $0x68] sm:$0xff]
  %v29 = vld [vmem:[%s0 + $0x70] sm:$0xff]
  %v30 = vld [vmem:[%s0 + $0x78] sm:$0xff]
  %v31 = vld [vmem:[%s0 + $0x80] sm:$0xff]
  %v32 = vld [vmem:[%s0 + $0x88] sm:$0xff]
  %v33 = vld [vmem:[%s0 + $0x90] sm:$0xff]
  %v34 = vld [vmem:[%s0 + $0x98] sm:$0xff]
  %v35 = vld [vmem:[%s0 + $0xa0] sm:$0xff]
  %v36 = vld [vmem:[%s0 + $0xa8] sm:$0xff]
  %v37 = vld [vmem:[%s0 + $0xb0] sm:$0xff]
  %v38 = vld [vmem:[%s0 + $0xb8] sm:$0xff]
  %v39 = vld [vmem:[%s0 + $0xc0] sm:$0xff]
  %v40 = vld [vmem:[%s0 + $0xc8] sm:$0xff]
  %v41 = vld [vmem:[%s0 + $0xd0] sm:$0xff]
  %v42 = vld [vmem:[%s0 + $0xd8] sm:$0xff]
  %v43 = vld [vmem:[%s0 + $0xe0] sm:$0xff]
  %v44 = vld [vmem:[%s0 + $0xe8] sm:$0xff]
  %v45 = vld [vmem:[%s0 + $0xf0] sm:$0xff]
  %v46 = vld [vmem:[%s0 + $0xf8] sm:$0xff]
  %v47 = vld [vmem:[%s0 + $0x100] sm:$0xff]
  %v48 = vld [vmem:[%s0 + $0x108] sm:$0xff]
  %v49 = vld [vmem:[%s0 + $0x110] sm:$0xff]
  %v50 = vld [vmem:[%s0 + $0x118] sm:$0xff]
  %v51 = vld [vmem:[%s0 + $0x120] sm:$0xff]
  %v52 = vld [vmem:[%s0 + $0x128] sm:$0xff]
  %v53 = vld [vmem:[%s0 + $0x130] sm:$0xff]
  %v54 = vld [vmem:[%s0 + $0x138] sm:$0xff]
  %v55 = vld [vmem:[%s0 + $0x140] sm:$0xff]
  %v56 = vld [vmem:[%s0 + $0x148] sm:$0xff]
  %v57 = vld [vmem:[%s0 + $0x150] sm:$0xff]
  %v58 = vld [vmem:[%s0 + $0x158] sm:$0xff]
  %v59 = vld [vmem:[%s0 + $0x160] sm:$0xff]
  %v60 = vld [vmem:[%s0 + $0x168] sm:$0xff]
  %v61 = vld [vmem:[%s0 + $0x170] sm:$0xff]
  %v62 = vld [vmem:[%s0 + $0x178] sm:$0xff]
  %v63 = vld [vmem:[%s0 + $0x180] sm:$0xff]
  %v64 = vpack.c.bf16 %v16, %v15
  %v65 = vpack.c.bf16 %v18, %v17
  %v66 = vpack.c.bf16 %v20, %v19
  %v67 = vpack.c.bf16 %v22, %v21
  %v68 = vpack.c.bf16 %v24, %v23
  %v69 = vpack.c.bf16 %v26, %v25
  %v70 = vpack.c.bf16 %v28, %v27
  %v71 = vpack.c.bf16 %v30, %v29
  %v72 = vpack.c.bf16 %v32, %v31
  %v73 = vpack.c.bf16 %v34, %v33
  %v74 = vpack.c.bf16 %v36, %v35
  %v75 = vpack.c.bf16 %v38, %v37
  %v76 = vpack.c.bf16 %v40, %v39
  %v77 = vpack.c.bf16 %v42, %v41
  %v78 = vpack.c.bf16 %v44, %v43
  %v79 = vpack.c.bf16 %v46, %v45
  %v80 = vpack.c.bf16 %v48, %v47
  %v81 = vpack.c.bf16 %v50, %v49
  %v82 = vpack.c.bf16 %v52, %v51
  %v83 = vpack.c.bf16 %v54, %v53
  %v84 = vpack.c.bf16 %v56, %v55
  %v85 = vpack.c.bf16 %v58, %v57
  %v86 = vpack.c.bf16 %v60, %v59
  %v87 = vpack.c.bf16 %v62, %v61
  %v88 = vpack.c.bf16 %v63, %v63
  %v89 = vld [vmem:[%s1] sm:$0xf]
  %v90 = vld [vmem:[%s1 + $0x4] sm:$0xf]
  %v91 = vld [vmem:[%s1 + $0x8] sm:$0xf]
  %v92 = vld [vmem:[%s1 + $0xc] sm:$0xf]
  %v93 = vld [vmem:[%s1 + $0x10] sm:$0xf]
  %v94 = vld [vmem:[%s1 + $0x14] sm:$0xf]
  %v95 = vld [vmem:[%s1 + $0x18] sm:$0xf]
  %v96 = vld [vmem:[%s1 + $0x1c] sm:$0xf]
  %v97 = vld [vmem:[%s1 + $0x20] sm:$0xf]
  %v98 = vld [vmem:[%s2] sm:$0x1]
  %v100 = vlaneseq
  %v101 = vshrl.u32 %v100, 7
  %v102 = vsub.s32 0, %v101
  %v103 = vrot.slane %v98, %v102
  %v114 = vunpack.c.l.b16 %v89
  %v115 = vunpack.c.l.b16 %v90
  %v116 = vunpack.c.l.b16 %v91
  %v117 = vunpack.c.l.b16 %v92
  %v118 = vunpack.c.l.b16 %v93
  %v119 = vunpack.c.l.b16 %v94
  %v120 = vunpack.c.l.b16 %v95
  %v121 = vunpack.c.l.b16 %v96
  %v122 = vunpack.c.l.b16 %v97
  %v123 = vpack.c.b16 %v115, %v114
  %v124 = vpack.c.b16 %v117, %v116
  %v125 = vpack.c.b16 %v119, %v118
  %v126 = vpack.c.b16 %v121, %v120
  %v127 = vpack.c.b16 %v122, %v122
  %vm132 = vcmask 588800
  %v134 = vsel %vm132, %v64, 0
  %v137 = vsel %vm132, %v65, 0
  %v140 = vsel %vm132, %v66, 0
  %v143 = vsel %vm132, %v67, 0
  %v146 = vsel %vm132, %v68, 0
  %v149 = vsel %vm132, %v69, 0
  %v152 = vsel %vm132, %v70, 0
  %v155 = vsel %vm132, %v71, 0
  %v158 = vsel %vm132, %v72, 0
  %v161 = vsel %vm132, %v73, 0
  %v164 = vsel %vm132, %v74, 0
  %v167 = vsel %vm132, %v75, 0
  %v170 = vsel %vm132, %v76, 0
  %v173 = vsel %vm132, %v77, 0
  %v176 = vsel %vm132, %v78, 0
  %v179 = vsel %vm132, %v79, 0
  %v182 = vsel %vm132, %v80, 0
  %v185 = vsel %vm132, %v81, 0
  %v188 = vsel %vm132, %v82, 0
  %v191 = vsel %vm132, %v83, 0
  %v194 = vsel %vm132, %v84, 0
  %v197 = vsel %vm132, %v85, 0
  %v200 = vsel %vm132, %v86, 0
  %v203 = vsel %vm132, %v87, 0
  %v206 = vsel %vm132, %v88, 0
  %vm208 = vcmask 1043456
  %v210 = vsel %vm208, %v127, 0
  %212 = vmatprep.subr.bf16.mxu0 0
  %213 = vmatpush1.bf16.msra.mxu0 %v123
  %214 = vmatprep.subr.bf16.mxu0 0
  %215 = vmatpush1.bf16.msra.mxu0 %v124
  %216 = vmatprep.subr.bf16.mxu0 0
  %217 = vmatpush1.bf16.msra.mxu0 %v125
  %218 = vmatprep.subr.bf16.mxu0 0
  %219 = vmatpush1.bf16.msra.mxu0 %v126
  %220 = vmatprep.subr.bf16.mxu0 0
  %221 = vmatpush1.bf16.msra.mxu0 %v210
  %222 = vmatprep.subr.bf16.mxu0 0
  %223 = vmatpush1.bf16.msra.mxu0 0
  %224 = vmatprep.subr.bf16.mxu0 0
  %225 = vmatpush1.bf16.msra.mxu0 0
  %226 = vmatprep.subr.bf16.mxu0 0
  %227 = vmatpush1.bf16.msra.mxu0 0
  %228 = vmatprep.subr.bf16.mxu0 0
  %229 = vmatpush1.bf16.msra.mxu0 0
  %230 = vmatprep.subr.bf16.mxu0 0
  %231 = vmatpush1.bf16.msra.mxu0 0
  %232 = vmatprep.subr.bf16.mxu0 0
  %233 = vmatpush1.bf16.msra.mxu0 0
  %234 = vmatprep.subr.bf16.mxu0 0
  %235 = vmatpush1.bf16.msra.mxu0 0
  %236 = vmatprep.subr.bf16.mxu0 0
  %237 = vmatpush1.bf16.msra.mxu0 0
  %238 = vmatprep.subr.bf16.mxu0 0
  %239 = vmatpush1.bf16.msra.mxu0 0
  %240 = vmatprep.subr.bf16.mxu0 0
  %241 = vmatpush1.bf16.msra.mxu0 0
  %242 = vmatprep.subr.bf16.mxu0 0
  %243 = vmatpush1.bf16.msra.mxu0 0
  %244 = vmatprep.mubr.bf16.mxu0 0
  %245 = vmatmul.mubr.bf16.gmra.mrb[0].mxu0 %v134
  %v246 = vpop.f32.mrb[0].mxu0
  %v247 = vadd.f32 %v103, %v246
  %v248 = vpop.f32.mrb[0].mxu0
  %v249 = vpop.f32.mrb[0].mxu0
  %v250 = vadd.f32 %v103, %v249
  %v251 = vpop.f32.mrb[0].mxu0
  %252 = vmatprep.mubr.bf16.mxu0 0
  %253 = vmatmul.mubr.bf16.gmra.mrb[0].mxu0 %v137
  %v254 = vpop.f32.mrb[0].mxu0
  %v255 = vadd.f32 %v103, %v254
  %v256 = vpop.f32.mrb[0].mxu0
  %v257 = vpop.f32.mrb[0].mxu0
  %v258 = vadd.f32 %v103, %v257
  %v259 = vpop.f32.mrb[0].mxu0
  %260 = vmatprep.mubr.bf16.mxu0 0
  %261 = vmatmul.mubr.bf16.gmra.mrb[0].mxu0 %v140
  %v262 = vpop.f32.mrb[0].mxu0
  %v263 = vadd.f32 %v103, %v262
  %v264 = vpop.f32.mrb[0].mxu0
  %v265 = vpop.f32.mrb[0].mxu0
  %v266 = vadd.f32 %v103, %v265
  %v267 = vpop.f32.mrb[0].mxu0
  %268 = vmatprep.mubr.bf16.mxu0 0
  %269 = vmatmul.mubr.bf16.gmra.mrb[0].mxu0 %v143
  %v270 = vpop.f32.mrb[0].mxu0
  %v271 = vadd.f32 %v103, %v270
  %v272 = vpop.f32.mrb[0].mxu0
  %v273 = vpop.f32.mrb[0].mxu0
  %v274 = vadd.f32 %v103, %v273
  %v275 = vpop.f32.mrb[0].mxu0
  %276 = vmatprep.mubr.bf16.mxu0 0
  %277 = vmatmul.mubr.bf16.gmra.mrb[0].mxu0 %v146
  %v278 = vpop.f32.mrb[0].mxu0
  %v279 = vadd.f32 %v103, %v278
  %v280 = vpop.f32.mrb[0].mxu0
  %v281 = vpop.f32.mrb[0].mxu0
  %v282 = vadd.f32 %v103, %v281
  %v283 = vpop.f32.mrb[0].mxu0
  %284 = vmatprep.mubr.bf16.mxu0 0
  %285 = vmatmul.mubr.bf16.gmra.mrb[0].mxu0 %v149
  %v286 = vpop.f32.mrb[0].mxu0
  %v287 = vadd.f32 %v103, %v286
  %v288 = vpop.f32.mrb[0].mxu0
  %v289 = vpop.f32.mrb[0].mxu0
  %v290 = vadd.f32 %v103, %v289
  %v291 = vpop.f32.mrb[0].mxu0
  %292 = vmatprep.mubr.bf16.mxu0 0
  %293 = vmatmul.mubr.bf16.gmra.mrb[0].mxu0 %v152
  %v294 = vpop.f32.mrb[0].mxu0
  %v295 = vadd.f32 %v103, %v294
  %v296 = vpop.f32.mrb[0].mxu0
  %v297 = vpop.f32.mrb[0].mxu0
  %v298 = vadd.f32 %v103, %v297
  %v299 = vpop.f32.mrb[0].mxu0
  %300 = vmatprep.mubr.bf16.mxu0 0
  %301 = vmatmul.mubr.bf16.gmra.mrb[0].mxu0 %v155
  %v302 = vpop.f32.mrb[0].mxu0
  %v303 = vadd.f32 %v103, %v302
  %v304 = vpop.f32.mrb[0].mxu0
  %v305 = vpop.f32.mrb[0].mxu0
  %v306 = vadd.f32 %v103, %v305
  %v307 = vpop.f32.mrb[0].mxu0
  %308 = vmatprep.mubr.bf16.mxu0 0
  %309 = vmatmul.mubr.bf16.gmra.mrb[0].mxu0 %v158
  %v310 = vpop.f32.mrb[0].mxu0
  %v311 = vadd.f32 %v103, %v310
  %v312 = vpop.f32.mrb[0].mxu0
  %v313 = vpop.f32.mrb[0].mxu0
  %v314 = vadd.f32 %v103, %v313
  %v315 = vpop.f32.mrb[0].mxu0
  %316 = vmatprep.mubr.bf16.mxu0 0
  %317 = vmatmul.mubr.bf16.gmra.mrb[0].mxu0 %v161
  %v318 = vpop.f32.mrb[0].mxu0
  %v319 = vadd.f32 %v103, %v318
  %v320 = vpop.f32.mrb[0].mxu0
  %v321 = vpop.f32.mrb[0].mxu0
  %v322 = vadd.f32 %v103, %v321
  %v323 = vpop.f32.mrb[0].mxu0
  %324 = vmatprep.mubr.bf16.mxu0 0
  %325 = vmatmul.mubr.bf16.gmra.mrb[0].mxu0 %v164
  %v326 = vpop.f32.mrb[0].mxu0
  %v327 = vadd.f32 %v103, %v326
  %v328 = vpop.f32.mrb[0].mxu0
  %v329 = vpop.f32.mrb[0].mxu0
  %v330 = vadd.f32 %v103, %v329
  %v331 = vpop.f32.mrb[0].mxu0
  %332 = vmatprep.mubr.bf16.mxu0 0
  %333 = vmatmul.mubr.bf16.gmra.mrb[0].mxu0 %v167
  %v334 = vpop.f32.mrb[0].mxu0
  %v335 = vadd.f32 %v103, %v334
  %v336 = vpop.f32.mrb[0].mxu0
  %v337 = vpop.f32.mrb[0].mxu0
  %v338 = vadd.f32 %v103, %v337
  %v339 = vpop.f32.mrb[0].mxu0
  %340 = vmatprep.mubr.bf16.mxu0 0
  %341 = vmatmul.mubr.bf16.gmra.mrb[0].mxu0 %v170
  %v342 = vpop.f32.mrb[0].mxu0
  %v343 = vadd.f32 %v103, %v342
  %v344 = vpop.f32.mrb[0].mxu0
  %v345 = vpop.f32.mrb[0].mxu0
  %v346 = vadd.f32 %v103, %v345
  %v347 = vpop.f32.mrb[0].mxu0
  %348 = vmatprep.mubr.bf16.mxu0 0
  %349 = vmatmul.mubr.bf16.gmra.mrb[0].mxu0 %v173
  %v350 = vpop.f32.mrb[0].mxu0
  %v351 = vadd.f32 %v103, %v350
  %v352 = vpop.f32.mrb[0].mxu0
  %v353 = vpop.f32.mrb[0].mxu0
  %v354 = vadd.f32 %v103, %v353
  %v355 = vpop.f32.mrb[0].mxu0
  %356 = vmatprep.mubr.bf16.mxu0 0
  %357 = vmatmul.mubr.bf16.gmra.mrb[0].mxu0 %v176
  %v358 = vpop.f32.mrb[0].mxu0
  %v359 = vadd.f32 %v103, %v358
  %v360 = vpop.f32.mrb[0].mxu0
  %v361 = vpop.f32.mrb[0].mxu0
  %v362 = vadd.f32 %v103, %v361
  %v363 = vpop.f32.mrb[0].mxu0
  %364 = vmatprep.mubr.bf16.mxu0 0
  %365 = vmatmul.mubr.bf16.gmra.mrb[0].mxu0 %v179
  %v366 = vpop.f32.mrb[0].mxu0
  %v367 = vadd.f32 %v103, %v366
  %v368 = vpop.f32.mrb[0].mxu0
  %v369 = vpop.f32.mrb[0].mxu0
  %v370 = vadd.f32 %v103, %v369
  %v371 = vpop.f32.mrb[0].mxu0
  %372 = vmatprep.mubr.bf16.mxu0 0
  %373 = vmatmul.mubr.bf16.gmra.mrb[0].mxu0 %v182
  %v374 = vpop.f32.mrb[0].mxu0
  %v375 = vadd.f32 %v103, %v374
  %v376 = vpop.f32.mrb[0].mxu0
  %v377 = vpop.f32.mrb[0].mxu0
  %v378 = vadd.f32 %v103, %v377
  %v379 = vpop.f32.mrb[0].mxu0
  %380 = vmatprep.mubr.bf16.mxu0 0
  %381 = vmatmul.mubr.bf16.gmra.mrb[0].mxu0 %v185
  %v382 = vpop.f32.mrb[0].mxu0
  %v383 = vadd.f32 %v103, %v382
  %v384 = vpop.f32.mrb[0].mxu0
  %v385 = vpop.f32.mrb[0].mxu0
  %v386 = vadd.f32 %v103, %v385
  %v387 = vpop.f32.mrb[0].mxu0
  %388 = vmatprep.mubr.bf16.mxu0 0
  %389 = vmatmul.mubr.bf16.gmra.mrb[0].mxu0 %v188
  %v390 = vpop.f32.mrb[0].mxu0
  %v391 = vadd.f32 %v103, %v390
  %v392 = vpop.f32.mrb[0].mxu0
  %v393 = vpop.f32.mrb[0].mxu0
  %v394 = vadd.f32 %v103, %v393
  %v395 = vpop.f32.mrb[0].mxu0
  %396 = vmatprep.mubr.bf16.mxu0 0
  %397 = vmatmul.mubr.bf16.gmra.mrb[0].mxu0 %v191
  %v398 = vpop.f32.mrb[0].mxu0
  %v399 = vadd.f32 %v103, %v398
  %v400 = vpop.f32.mrb[0].mxu0
  %v401 = vpop.f32.mrb[0].mxu0
  %v402 = vadd.f32 %v103, %v401
  %v403 = vpop.f32.mrb[0].mxu0
  %404 = vmatprep.mubr.bf16.mxu0 0
  %405 = vmatmul.mubr.bf16.gmra.mrb[0].mxu0 %v194
  %v406 = vpop.f32.mrb[0].mxu0
  %v407 = vadd.f32 %v103, %v406
  %v408 = vpop.f32.mrb[0].mxu0
  %v409 = vpop.f32.mrb[0].mxu0
  %v410 = vadd.f32 %v103, %v409
  %v411 = vpop.f32.mrb[0].mxu0
  %412 = vmatprep.mubr.bf16.mxu0 0
  %413 = vmatmul.mubr.bf16.gmra.mrb[0].mxu0 %v197
  %v414 = vpop.f32.mrb[0].mxu0
  %v415 = vadd.f32 %v103, %v414
  %v416 = vpop.f32.mrb[0].mxu0
  %v417 = vpop.f32.mrb[0].mxu0
  %v418 = vadd.f32 %v103, %v417
  %v419 = vpop.f32.mrb[0].mxu0
  %420 = vmatprep.mubr.bf16.mxu0 0
  %421 = vmatmul.mubr.bf16.gmra.mrb[0].mxu0 %v200
  %v422 = vpop.f32.mrb[0].mxu0
  %v423 = vadd.f32 %v103, %v422
  %v424 = vpop.f32.mrb[0].mxu0
  %v425 = vpop.f32.mrb[0].mxu0
  %v426 = vadd.f32 %v103, %v425
  %v427 = vpop.f32.mrb[0].mxu0
  %428 = vmatprep.mubr.bf16.mxu0 0
  %429 = vmatmul.mubr.bf16.gmra.mrb[0].mxu0 %v203
  %v430 = vpop.f32.mrb[0].mxu0
  %v431 = vadd.f32 %v103, %v430
  %v432 = vpop.f32.mrb[0].mxu0
  %v433 = vpop.f32.mrb[0].mxu0
  %v434 = vadd.f32 %v103, %v433
  %v435 = vpop.f32.mrb[0].mxu0
  %436 = vmatprep.mubr.bf16.mxu0 0
  %437 = vmatmul.mubr.bf16.gmra.mrb[0].mxu0 %v206
  %v438 = vpop.f32.mrb[0].mxu0
  %v439 = vadd.f32 %v103, %v438
  %v440 = vpop.f32.mrb[0].mxu0
  %v441 = vpop.f32.mrb[0].mxu0
  %v442 = vpop.f32.mrb[0].mxu0
  %443 = vdwg.mxu0
  %v444 = vmax.f32 %v247, 0.0
  %v445 = vmax.f32 %v250, 0.0
  %v446 = vmax.f32 %v255, 0.0
  %v447 = vmax.f32 %v258, 0.0
  %v448 = vmax.f32 %v263, 0.0
  %v449 = vmax.f32 %v266, 0.0
  %v450 = vmax.f32 %v271, 0.0
  %v451 = vmax.f32 %v274, 0.0
  %v452 = vmax.f32 %v279, 0.0
  %v453 = vmax.f32 %v282, 0.0
  %v454 = vmax.f32 %v287, 0.0
  %v455 = vmax.f32 %v290, 0.0
  %v456 = vmax.f32 %v295, 0.0
  %v457 = vmax.f32 %v298, 0.0
  %v458 = vmax.f32 %v303, 0.0
  %v459 = vmax.f32 %v306, 0.0
  %v460 = vmax.f32 %v311, 0.0
  %v461 = vmax.f32 %v314, 0.0
  %v462 = vmax.f32 %v319, 0.0
  %v463 = vmax.f32 %v322, 0.0
  %v464 = vmax.f32 %v327, 0.0
  %v465 = vmax.f32 %v330, 0.0
  %v466 = vmax.f32 %v335, 0.0
  %v467 = vmax.f32 %v338, 0.0
  %v468 = vmax.f32 %v343, 0.0
  %v469 = vmax.f32 %v346, 0.0
  %v470 = vmax.f32 %v351, 0.0
  %v471 = vmax.f32 %v354, 0.0
  %v472 = vmax.f32 %v359, 0.0
  %v473 = vmax.f32 %v362, 0.0
  %v474 = vmax.f32 %v367, 0.0
  %v475 = vmax.f32 %v370, 0.0
  %v476 = vmax.f32 %v375, 0.0
  %v477 = vmax.f32 %v378, 0.0
  %v478 = vmax.f32 %v383, 0.0
  %v479 = vmax.f32 %v386, 0.0
  %v480 = vmax.f32 %v391, 0.0
  %v481 = vmax.f32 %v394, 0.0
  %v482 = vmax.f32 %v399, 0.0
  %v483 = vmax.f32 %v402, 0.0
  %v484 = vmax.f32 %v407, 0.0
  %v485 = vmax.f32 %v410, 0.0
  %v486 = vmax.f32 %v415, 0.0
  %v487 = vmax.f32 %v418, 0.0
  %v488 = vmax.f32 %v423, 0.0
  %v489 = vmax.f32 %v426, 0.0
  %v490 = vmax.f32 %v431, 0.0
  %v491 = vmax.f32 %v434, 0.0
  %v492 = vmax.f32 %v439, 0.0
  %vm493 = vcmask 130048
  %494 = vst.msk [vmem:[%s3] sm:$0xff] %vm493, %v444
  %495 = vst.msk [vmem:[%s3 + $0x8] sm:$0xff] %vm493, %v445
  %496 = vst.msk [vmem:[%s3 + $0x10] sm:$0xff] %vm493, %v446
  %497 = vst.msk [vmem:[%s3 + $0x18] sm:$0xff] %vm493, %v447
  %498 = vst.msk [vmem:[%s3 + $0x20] sm:$0xff] %vm493, %v448
  %499 = vst.msk [vmem:[%s3 + $0x28] sm:$0xff] %vm493, %v449
  %500 = vst.msk [vmem:[%s3 + $0x30] sm:$0xff] %vm493, %v450
  %501 = vst.msk [vmem:[%s3 + $0x38] sm:$0xff] %vm493, %v451
  %502 = vst.msk [vmem:[%s3 + $0x40] sm:$0xff] %vm493, %v452
  %503 = vst.msk [vmem:[%s3 + $0x48] sm:$0xff] %vm493, %v453
  %504 = vst.msk [vmem:[%s3 + $0x50] sm:$0xff] %vm493, %v454
  %505 = vst.msk [vmem:[%s3 + $0x58] sm:$0xff] %vm493, %v455
  %506 = vst.msk [vmem:[%s3 + $0x60] sm:$0xff] %vm493, %v456
  %507 = vst.msk [vmem:[%s3 + $0x68] sm:$0xff] %vm493, %v457
  %508 = vst.msk [vmem:[%s3 + $0x70] sm:$0xff] %vm493, %v458
  %509 = vst.msk [vmem:[%s3 + $0x78] sm:$0xff] %vm493, %v459
  %510 = vst.msk [vmem:[%s3 + $0x80] sm:$0xff] %vm493, %v460
  %511 = vst.msk [vmem:[%s3 + $0x88] sm:$0xff] %vm493, %v461
  %512 = vst.msk [vmem:[%s3 + $0x90] sm:$0xff] %vm493, %v462
  %513 = vst.msk [vmem:[%s3 + $0x98] sm:$0xff] %vm493, %v463
  %514 = vst.msk [vmem:[%s3 + $0xa0] sm:$0xff] %vm493, %v464
  %515 = vst.msk [vmem:[%s3 + $0xa8] sm:$0xff] %vm493, %v465
  %516 = vst.msk [vmem:[%s3 + $0xb0] sm:$0xff] %vm493, %v466
  %517 = vst.msk [vmem:[%s3 + $0xb8] sm:$0xff] %vm493, %v467
  %518 = vst.msk [vmem:[%s3 + $0xc0] sm:$0xff] %vm493, %v468
  %519 = vst.msk [vmem:[%s3 + $0xc8] sm:$0xff] %vm493, %v469
  %520 = vst.msk [vmem:[%s3 + $0xd0] sm:$0xff] %vm493, %v470
  %521 = vst.msk [vmem:[%s3 + $0xd8] sm:$0xff] %vm493, %v471
  %522 = vst.msk [vmem:[%s3 + $0xe0] sm:$0xff] %vm493, %v472
  %523 = vst.msk [vmem:[%s3 + $0xe8] sm:$0xff] %vm493, %v473
  %524 = vst.msk [vmem:[%s3 + $0xf0] sm:$0xff] %vm493, %v474
  %525 = vst.msk [vmem:[%s3 + $0xf8] sm:$0xff] %vm493, %v475
  %526 = vst.msk [vmem:[%s3 + $0x100] sm:$0xff] %vm493, %v476
  %527 = vst.msk [vmem:[%s3 + $0x108] sm:$0xff] %vm493, %v477
  %528 = vst.msk [vmem:[%s3 + $0x110] sm:$0xff] %vm493, %v478
  %529 = vst.msk [vmem:[%s3 + $0x118] sm:$0xff] %vm493, %v479
  %530 = vst.msk [vmem:[%s3 + $0x120] sm:$0xff] %vm493, %v480
  %531 = vst.msk [vmem:[%s3 + $0x128] sm:$0xff] %vm493, %v481
  %532 = vst.msk [vmem:[%s3 + $0x130] sm:$0xff] %vm493, %v482
  %533 = vst.msk [vmem:[%s3 + $0x138] sm:$0xff] %vm493, %v483
  %534 = vst.msk [vmem:[%s3 + $0x140] sm:$0xff] %vm493, %v484
  %535 = vst.msk [vmem:[%s3 + $0x148] sm:$0xff] %vm493, %v485
  %536 = vst.msk [vmem:[%s3 + $0x150] sm:$0xff] %vm493, %v486
  %537 = vst.msk [vmem:[%s3 + $0x158] sm:$0xff] %vm493, %v487
  %538 = vst.msk [vmem:[%s3 + $0x160] sm:$0xff] %vm493, %v488
  %539 = vst.msk [vmem:[%s3 + $0x168] sm:$0xff] %vm493, %v489
  %540 = vst.msk [vmem:[%s3 + $0x170] sm:$0xff] %vm493, %v490
  %541 = vst.msk [vmem:[%s3 + $0x178] sm:$0xff] %vm493, %v491
  %542 = vst.msk [vmem:[%s3 + $0x180] sm:$0xff] %vm493, %v492
  // Predicated region
  $region14: #{interfaced_model_forward.6} parent=0 // pred_check
    _
  $region15: #{interfaced_model_forward.6} parent=0 // pred_check_branch
    %544 = sbr.rel (0) target = $region17
  $region16: #{interfaced_model_forward.6} parent=0 // pred_region
    _
  $region17: #{interfaced_model_forward.6} parent=0 // pred_fallthru
    _
  // Predicated region
  $region18: #{interfaced_model_forward.6} parent=0 // pred_check
    _
  $region19: #{interfaced_model_forward.6} parent=0 // pred_check_branch
    %546 = sbr.rel (0) target = $region21
  $region20: #{interfaced_model_forward.6} parent=0 // pred_region
    _
  $region21: #{interfaced_model_forward.6} parent=0 // pred_fallthru
    _

// kernel: interfaced_model_forward.7
$region0: #{interfaced_model_forward.7}
  #allocation0 [shape = 'u32[]', space=smem, size = 0x4, offset = 0x4, fixed_abs, tag = 'smem constant byte address 0x4 - core index']
  #allocation1 [shape = 'u32[144,128]{1,0:T(1,128)}', space=vmem, size = 0x12000, scoped, tag = 'internal scratch']
  %s0 = inlined_call_operand.vmem [shape: f32[2,784], index: 0, kind: input, shape index: {}]
  %s1 = inlined_call_operand.vmem [shape: bf16[784,64], index: 1, kind: input, shape index: {}]
  %s2 = inlined_call_operand.vmem [shape: f32[1,64], index: 2, kind: input, shape index: {}]
  %s3 = inlined_call_operand.vmem [shape: bf16[64,10], index: 3, kind: input, shape index: {}]
  %s4 = inlined_call_operand.vmem [shape: f32[1,10], index: 4, kind: input, shape index: {}]
  %s5 = inlined_call_operand.hbm [shape: f32[2,10], index: 5, kind: output, shape index: {}]
  %s6 = sld [smem:[#allocation0]]
  $region30: #{interfaced_model_forward.7} parent=0
    _
  %s8 = ssub.s32 1, %s6
  %s9 = scalar_select 0, %s8, %s6
  $region1: #{interfaced_model_forward.7} parent=0
    #allocation2 [shape = 'u8[1024]{0}', space=vmem, size = 0x400, scoped, tag = 'output window, operand 0, single buffered']
    #allocation3 [shape = 's32[1]{0}', space=sflag, size = 0x4, scoped, tag = 'scoped memory for interfaced_model_forward.7']
    %10 = vsyncpa [#allocation3], 0
    // Predicated region
    $region2: #{interfaced_model_forward.7} parent=1 // pred_check
      _
    $region3: #{interfaced_model_forward.7} parent=1 // pred_check_branch
      %12 = sbr.rel (0) target = $region5
    $region4: #{interfaced_model_forward.7} parent=1 // pred_region
      _
    $region5: #{interfaced_model_forward.7} parent=1 // pred_fallthru
      _
    // Predicated region
    $region6: #{interfaced_model_forward.7} parent=1 // pred_check
      _
    $region7: #{interfaced_model_forward.7} parent=1 // pred_check_branch
      %14 = sbr.rel (0) target = $region9
    $region8: #{interfaced_model_forward.7} parent=1 // pred_region
      _
    $region9: #{interfaced_model_forward.7} parent=1 // pred_fallthru
      _
    // Predicated region
    $region10: #{interfaced_model_forward.7} parent=1 // pred_check
      _
    $region11: #{interfaced_model_forward.7} parent=1 // pred_check_branch
      %16 = sbr.rel (0) target = $region13
    $region12: #{interfaced_model_forward.7} parent=1 // pred_region
      _
    $region13: #{interfaced_model_forward.7} parent=1 // pred_fallthru
      _
    // Predicated region
    $region14: #{interfaced_model_forward.7} parent=1 // pred_check
      _
    $region15: #{interfaced_model_forward.7} parent=1 // pred_check_branch
      %18 = sbr.rel (0) target = $region17
    $region16: #{interfaced_model_forward.7} parent=1 // pred_region
      _
    $region17: #{interfaced_model_forward.7} parent=1 // pred_fallthru
      _
    // Predicated region
    $region18: #{interfaced_model_forward.7} parent=1 // pred_check
      _
    $region19: #{interfaced_model_forward.7} parent=1 // pred_check_branch
      %20 = sbr.rel (0) target = $region21
    $region20: #{interfaced_model_forward.7} parent=1 // pred_region
      _
    $region21: #{interfaced_model_forward.7} parent=1 // pred_fallthru
      _
    %v22 = vld [vmem:[%s0] sm:$0xff]
    %v23 = vld [vmem:[%s0 + $0x8] sm:$0x3f]
    %v26 = vcombine.high %v22, %v22
    %v28 = vunpack.c.l.s4 1983009808
    %v29 = vunpack.c.0.s8 %v28
    %v30 = vlaneseq
    %v31 = vshrl.u32 %v30, 7
    %v32 = vsub.s32 %v29, %v31
    %v33 = vrot.slane %v22, %v32
    %v35 = vunpack.c.l.s4 1983009808
    %v36 = vunpack.c.0.s8 %v35
    %v37 = vlaneseq
    %v38 = vshrl.u32 %v37, 7
    %v39 = vsub.s32 %v36, %v38
    %v40 = vrot.slane %v26, %v39
    %v41 = vcombine.high %v33, %v33
    %v42 = vcombine.high %v40, %v40
    %v43 = vcombine.high %v23, %v23
    %v45 = vunpack.c.l.s4 1983009808
    %v46 = vunpack.c.0.s8 %v45
    %v47 = vlaneseq
    %v48 = vshrl.u32 %v47, 7
    %v49 = vsub.s32 %v46, %v48
    %v50 = vrot.slane %v23, %v49
    %v52 = vunpack.c.l.s4 1983009808
    %v53 = vunpack.c.0.s8 %v52
    %v54 = vlaneseq
    %v55 = vshrl.u32 %v54, 7
    %v56 = vsub.s32 %v53, %v55
    %v57 = vrot.slane %v43, %v56
    %v58 = vcombine.high %v50, %v50
    %v66 = vpack.c.bf16 %v33, %v33
    %v67 = vpack.c.bf16 %v41, %v41
    %v68 = vpack.c.bf16 %v40, %v40
    %v69 = vpack.c.bf16 %v42, %v42
    %v70 = vpack.c.bf16 %v50, %v50
    %v71 = vpack.c.bf16 %v58, %v58
    %v72 = vpack.c.bf16 %v57, %v57
    %v73 = vld [vmem:[%s1] sm:$0xf]
    %v74 = vld [vmem:[%s1 + $0x4] sm:$0xf]
    %v75 = vld [vmem:[%s1 + $0x8] sm:$0xf]
    %v76 = vld [vmem:[%s1 + $0xc] sm:$0xf]
    %v77 = vld [vmem:[%s1 + $0x10] sm:$0xf]
    %v78 = vld [vmem:[%s1 + $0x14] sm:$0xf]
    %v79 = vld [vmem:[%s1 + $0x18] sm:$0xf]
    %v80 = vld [vmem:[%s1 + $0x1c] sm:$0xf]
    %v81 = vld [vmem:[%s1 + $0x20] sm:$0xf]
    %v82 = vld [vmem:[%s1 + $0x24] sm:$0xf]
    %v83 = vld [vmem:[%s1 + $0x28] sm:$0xf]
    %v84 = vld [vmem:[%s1 + $0x2c] sm:$0xf]
    %v85 = vld [vmem:[%s1 + $0x30] sm:$0xf]
    %v86 = vld [vmem:[%s1 + $0x34] sm:$0xf]
    %v87 = vld [vmem:[%s1 + $0x38] sm:$0xf]
    %v88 = vld [vmem:[%s1 + $0x3c] sm:$0xf]
    %v89 = vld [vmem:[%s1 + $0x40] sm:$0xf]
    %v90 = vld [vmem:[%s1 + $0x44] sm:$0xf]
    %v91 = vld [vmem:[%s1 + $0x48] sm:$0xf]
    %v92 = vld [vmem:[%s1 + $0x4c] sm:$0xf]
    %v93 = vld [vmem:[%s1 + $0x50] sm:$0xf]
    %v94 = vld [vmem:[%s1 + $0x54] sm:$0xf]
    %v95 = vld [vmem:[%s1 + $0x58] sm:$0xf]
    %v96 = vld [vmem:[%s1 + $0x5c] sm:$0xf]
    %v97 = vld [vmem:[%s1 + $0x60] sm:$0xf]
    %v98 = vld [vmem:[%s1 + $0x64] sm:$0xf]
    %v99 = vld [vmem:[%s1 + $0x68] sm:$0xf]
    %v100 = vld [vmem:[%s1 + $0x6c] sm:$0xf]
    %v101 = vld [vmem:[%s1 + $0x70] sm:$0xf]
    %v102 = vld [vmem:[%s1 + $0x74] sm:$0xf]
    %v103 = vld [vmem:[%s1 + $0x78] sm:$0xf]
    %v104 = vld [vmem:[%s1 + $0x7c] sm:$0xf]
    %v105 = vld [vmem:[%s1 + $0x80] sm:$0xf]
    %v106 = vld [vmem:[%s1 + $0x84] sm:$0xf]
    %v107 = vld [vmem:[%s1 + $0x88] sm:$0xf]
    %v108 = vld [vmem:[%s1 + $0x8c] sm:$0xf]
    %v109 = vld [vmem:[%s1 + $0x90] sm:$0xf]
    %v110 = vld [vmem:[%s1 + $0x94] sm:$0xf]
    %v111 = vld [vmem:[%s1 + $0x98] sm:$0xf]
    %v112 = vld [vmem:[%s1 + $0x9c] sm:$0xf]
    %v113 = vld [vmem:[%s1 + $0xa0] sm:$0xf]
    %v114 = vld [vmem:[%s1 + $0xa4] sm:$0xf]
    %v115 = vld [vmem:[%s1 + $0xa8] sm:$0xf]
    %v116 = vld [vmem:[%s1 + $0xac] sm:$0xf]
    %v117 = vld [vmem:[%s1 + $0xb0] sm:$0xf]
    %v118 = vld [vmem:[%s1 + $0xb4] sm:$0xf]
    %v119 = vld [vmem:[%s1 + $0xb8] sm:$0xf]
    %v120 = vld [vmem:[%s1 + $0xbc] sm:$0xf]
    %v121 = vld [vmem:[%s1 + $0xc0] sm:$0xf]
    %v122 = vld [vmem:[%s1 + $0xc4] sm:$0xf]
    %v123 = vld [vmem:[%s1 + $0xc8] sm:$0xf]
    %v124 = vld [vmem:[%s1 + $0xcc] sm:$0xf]
    %v125 = vld [vmem:[%s1 + $0xd0] sm:$0xf]
    %v126 = vld [vmem:[%s1 + $0xd4] sm:$0xf]
    %v127 = vld [vmem:[%s1 + $0xd8] sm:$0xf]
    %v128 = vld [vmem:[%s1 + $0xdc] sm:$0xf]
    %v129 = vld [vmem:[%s1 + $0xe0] sm:$0xf]
    %v130 = vld [vmem:[%s1 + $0xe4] sm:$0xf]
    %v131 = vld [vmem:[%s1 + $0xe8] sm:$0xf]
    %v132 = vld [vmem:[%s1 + $0xec] sm:$0xf]
    %v133 = vld [vmem:[%s1 + $0xf0] sm:$0xf]
    %v134 = vld [vmem:[%s1 + $0xf4] sm:$0xf]
    %v135 = vld [vmem:[%s1 + $0xf8] sm:$0xf]
    %v136 = vld [vmem:[%s1 + $0xfc] sm:$0xf]
    %v137 = vld [vmem:[%s1 + $0x100] sm:$0xf]
    %v138 = vld [vmem:[%s1 + $0x104] sm:$0xf]
    %v139 = vld [vmem:[%s1 + $0x108] sm:$0xf]
    %v140 = vld [vmem:[%s1 + $0x10c] sm:$0xf]
    %v141 = vld [vmem:[%s1 + $0x110] sm:$0xf]
    %v142 = vld [vmem:[%s1 + $0x114] sm:$0xf]
    %v143 = vld [vmem:[%s1 + $0x118] sm:$0xf]
    %v144 = vld [vmem:[%s1 + $0x11c] sm:$0xf]
    %v145 = vld [vmem:[%s1 + $0x120] sm:$0xf]
    %v146 = vld [vmem:[%s1 + $0x124] sm:$0xf]
    %v147 = vld [vmem:[%s1 + $0x128] sm:$0xf]
    %v148 = vld [vmem:[%s1 + $0x12c] sm:$0xf]
    %v149 = vld [vmem:[%s1 + $0x130] sm:$0xf]
    %v150 = vld [vmem:[%s1 + $0x134] sm:$0xf]
    %v151 = vld [vmem:[%s1 + $0x138] sm:$0xf]
    %v152 = vld [vmem:[%s1 + $0x13c] sm:$0xf]
    %v153 = vld [vmem:[%s1 + $0x140] sm:$0xf]
    %v154 = vld [vmem:[%s1 + $0x144] sm:$0xf]
    %v155 = vld [vmem:[%s1 + $0x148] sm:$0xf]
    %v156 = vld [vmem:[%s1 + $0x14c] sm:$0xf]
    %v157 = vld [vmem:[%s1 + $0x150] sm:$0xf]
    %v158 = vld [vmem:[%s1 + $0x154] sm:$0xf]
    %v159 = vld [vmem:[%s1 + $0x158] sm:$0xf]
    %v160 = vld [vmem:[%s1 + $0x15c] sm:$0xf]
    %v161 = vld [vmem:[%s1 + $0x160] sm:$0xf]
    %v162 = vld [vmem:[%s1 + $0x164] sm:$0xf]
    %v163 = vld [vmem:[%s1 + $0x168] sm:$0xf]
    %v164 = vld [vmem:[%s1 + $0x16c] sm:$0xf]
    %v165 = vld [vmem:[%s1 + $0x170] sm:$0xf]
    %v166 = vld [vmem:[%s1 + $0x174] sm:$0xf]
    %v167 = vld [vmem:[%s1 + $0x178] sm:$0xf]
    %v168 = vld [vmem:[%s1 + $0x17c] sm:$0xf]
    %v169 = vld [vmem:[%s1 + $0x180] sm:$0xf]
    %v170 = vld [vmem:[%s1 + $0x184] sm:$0xf]
    %v171 = vld [vmem:[%s2] sm:$0x1]
    %v173 = vlaneseq
    %v174 = vshrl.u32 %v173, 7
    %v175 = vsub.s32 0, %v174
    %v176 = vrot.slane %v171, %v175
    %v276 = vunpack.c.l.b16 %v73
    %v277 = vunpack.c.l.b16 %v74
    %v278 = vunpack.c.l.b16 %v75
    %v279 = vunpack.c.l.b16 %v76
    %v280 = vunpack.c.l.b16 %v77
    %v281 = vunpack.c.l.b16 %v78
    %v282 = vunpack.c.l.b16 %v79
    %v283 = vunpack.c.l.b16 %v80
    %v284 = vunpack.c.l.b16 %v81
    %v285 = vunpack.c.l.b16 %v82
    %v286 = vunpack.c.l.b16 %v83
    %v287 = vunpack.c.l.b16 %v84
    %v288 = vunpack.c.l.b16 %v85
    %v289 = vunpack.c.l.b16 %v86
    %v290 = vunpack.c.l.b16 %v87
    %v291 = vunpack.c.l.b16 %v88
    %v292 = vunpack.c.l.b16 %v89
    %v293 = vunpack.c.l.b16 %v90
    %v294 = vunpack.c.l.b16 %v91
    %v295 = vunpack.c.l.b16 %v92
    %v296 = vunpack.c.l.b16 %v93
    %v297 = vunpack.c.l.b16 %v94
    %v298 = vunpack.c.l.b16 %v95
    %v299 = vunpack.c.l.b16 %v96
    %v300 = vunpack.c.l.b16 %v97
    %v301 = vunpack.c.l.b16 %v98
    %v302 = vunpack.c.l.b16 %v99
    %v303 = vunpack.c.l.b16 %v100
    %v304 = vunpack.c.l.b16 %v101
    %v305 = vunpack.c.l.b16 %v102
    %v306 = vunpack.c.l.b16 %v103
    %v307 = vunpack.c.l.b16 %v104
    %v308 = vunpack.c.l.b16 %v105
    %v309 = vunpack.c.l.b16 %v106
    %v310 = vunpack.c.l.b16 %v107
    %v311 = vunpack.c.l.b16 %v108
    %v312 = vunpack.c.l.b16 %v109
    %v313 = vunpack.c.l.b16 %v110
    %v314 = vunpack.c.l.b16 %v111
    %v315 = vunpack.c.l.b16 %v112
    %v316 = vunpack.c.l.b16 %v113
    %v317 = vunpack.c.l.b16 %v114
    %v318 = vunpack.c.l.b16 %v115
    %v319 = vunpack.c.l.b16 %v116
    %v320 = vunpack.c.l.b16 %v117
    %v321 = vunpack.c.l.b16 %v118
    %v322 = vunpack.c.l.b16 %v119
    %v323 = vunpack.c.l.b16 %v120
    %v324 = vunpack.c.l.b16 %v121
    %v325 = vunpack.c.l.b16 %v122
    %v326 = vunpack.c.l.b16 %v123
    %v327 = vunpack.c.l.b16 %v124
    %v328 = vunpack.c.l.b16 %v125
    %v329 = vunpack.c.l.b16 %v126
    %v330 = vunpack.c.l.b16 %v127
    %v331 = vunpack.c.l.b16 %v128
    %v332 = vunpack.c.l.b16 %v129
    %v333 = vunpack.c.l.b16 %v130
    %v334 = vunpack.c.l.b16 %v131
    %v335 = vunpack.c.l.b16 %v132
    %v336 = vunpack.c.l.b16 %v133
    %v337 = vunpack.c.l.b16 %v134
    %v338 = vunpack.c.l.b16 %v135
    %v339 = vunpack.c.l.b16 %v136
    %v340 = vunpack.c.l.b16 %v137
    %v341 = vunpack.c.l.b16 %v138
    %v342 = vunpack.c.l.b16 %v139
    %v343 = vunpack.c.l.b16 %v140
    %v344 = vunpack.c.l.b16 %v141
    %v345 = vunpack.c.l.b16 %v142
    %v346 = vunpack.c.l.b16 %v143
    %v347 = vunpack.c.l.b16 %v144
    %v348 = vunpack.c.l.b16 %v145
    %v349 = vunpack.c.l.b16 %v146
    %v350 = vunpack.c.l.b16 %v147
    %v351 = vunpack.c.l.b16 %v148
    %v352 = vunpack.c.l.b16 %v149
    %v353 = vunpack.c.l.b16 %v150
    %v354 = vunpack.c.l.b16 %v151
    %v355 = vunpack.c.l.b16 %v152
    %v356 = vunpack.c.l.b16 %v153
    %v357 = vunpack.c.l.b16 %v154
    %v358 = vunpack.c.l.b16 %v155
    %v359 = vunpack.c.l.b16 %v156
    %v360 = vunpack.c.l.b16 %v157
    %v361 = vunpack.c.l.b16 %v158
    %v362 = vunpack.c.l.b16 %v159
    %v363 = vunpack.c.l.b16 %v160
    %v364 = vunpack.c.l.b16 %v161
    %v365 = vunpack.c.l.b16 %v162
    %v366 = vunpack.c.l.b16 %v163
    %v367 = vunpack.c.l.b16 %v164
    %v368 = vunpack.c.l.b16 %v165
    %v369 = vunpack.c.l.b16 %v166
    %v370 = vunpack.c.l.b16 %v167
    %v371 = vunpack.c.l.b16 %v168
    %v372 = vunpack.c.l.b16 %v169
    %v373 = vunpack.c.l.b16 %v170
    %v374 = vpack.c.b16 %v277, %v276
    %v375 = vpack.c.b16 %v279, %v278
    %v376 = vpack.c.b16 %v281, %v280
    %v377 = vpack.c.b16 %v283, %v282
    %v378 = vpack.c.b16 %v285, %v284
    %v379 = vpack.c.b16 %v287, %v286
    %v380 = vpack.c.b16 %v289, %v288
    %v381 = vpack.c.b16 %v291, %v290
    %v382 = vpack.c.b16 %v293, %v292
    %v383 = vpack.c.b16 %v295, %v294
    %v384 = vpack.c.b16 %v297, %v296
    %v385 = vpack.c.b16 %v299, %v298
    %v386 = vpack.c.b16 %v301, %v300
    %v387 = vpack.c.b16 %v303, %v302
    %v388 = vpack.c.b16 %v305, %v304
    %v389 = vpack.c.b16 %v307, %v306
    %v390 = vpack.c.b16 %v309, %v308
    %v391 = vpack.c.b16 %v311, %v310
    %v392 = vpack.c.b16 %v313, %v312
    %v393 = vpack.c.b16 %v315, %v314
    %v394 = vpack.c.b16 %v317, %v316
    %v395 = vpack.c.b16 %v319, %v318
    %v396 = vpack.c.b16 %v321, %v320
    %v397 = vpack.c.b16 %v323, %v322
    %v398 = vpack.c.b16 %v325, %v324
    %v399 = vpack.c.b16 %v327, %v326
    %v400 = vpack.c.b16 %v329, %v328
    %v401 = vpack.c.b16 %v331, %v330
    %v402 = vpack.c.b16 %v333, %v332
    %v403 = vpack.c.b16 %v335, %v334
    %v404 = vpack.c.b16 %v337, %v336
    %v405 = vpack.c.b16 %v339, %v338
    %v406 = vpack.c.b16 %v341, %v340
    %v407 = vpack.c.b16 %v343, %v342
    %v408 = vpack.c.b16 %v345, %v344
    %v409 = vpack.c.b16 %v347, %v346
    %v410 = vpack.c.b16 %v349, %v348
    %v411 = vpack.c.b16 %v351, %v350
    %v412 = vpack.c.b16 %v353, %v352
    %v413 = vpack.c.b16 %v355, %v354
    %v414 = vpack.c.b16 %v357, %v356
    %v415 = vpack.c.b16 %v359, %v358
    %v416 = vpack.c.b16 %v361, %v360
    %v417 = vpack.c.b16 %v363, %v362
    %v418 = vpack.c.b16 %v365, %v364
    %v419 = vpack.c.b16 %v367, %v366
    %v420 = vpack.c.b16 %v369, %v368
    %v421 = vpack.c.b16 %v371, %v370
    %v422 = vpack.c.b16 %v373, %v372
    %vm472 = vcmask 130048
    %v474 = vsel %vm472, %v72, 0
    %476 = vmatprep.subr.bf16.mxu0 0
    %477 = vmatpush1.bf16.msra.mxu0 %v374
    %478 = vmatprep.subr.bf16.mxu0 0
    %479 = vmatpush1.bf16.msra.mxu0 %v375
    %480 = vmatprep.subr.bf16.mxu0 0
    %481 = vmatpush1.bf16.msra.mxu0 %v376
    %482 = vmatprep.subr.bf16.mxu0 0
    %483 = vmatpush1.bf16.msra.mxu0 %v377
    %484 = vmatprep.subr.bf16.mxu0 0
    %485 = vmatpush1.bf16.msra.mxu0 %v378
    %486 = vmatprep.subr.bf16.mxu0 0
    %487 = vmatpush1.bf16.msra.mxu0 %v379
    %488 = vmatprep.subr.bf16.mxu0 0
    %489 = vmatpush1.bf16.msra.mxu0 %v380
    %490 = vmatprep.subr.bf16.mxu0 0
    %491 = vmatpush1.bf16.msra.mxu0 %v381
    %492 = vmatprep.subr.bf16.mxu0 0
    %493 = vmatpush1.bf16.msra.mxu0 %v382
    %494 = vmatprep.subr.bf16.mxu0 0
    %495 = vmatpush1.bf16.msra.mxu0 %v383
    %496 = vmatprep.subr.bf16.mxu0 0
    %497 = vmatpush1.bf16.msra.mxu0 %v384
    %498 = vmatprep.subr.bf16.mxu0 0
    %499 = vmatpush1.bf16.msra.mxu0 %v385
    %500 = vmatprep.subr.bf16.mxu0 0
    %501 = vmatpush1.bf16.msra.mxu0 %v386
    %502 = vmatprep.subr.bf16.mxu0 0
    %503 = vmatpush1.bf16.msra.mxu0 %v387
    %504 = vmatprep.subr.bf16.mxu0 0
    %505 = vmatpush1.bf16.msra.mxu0 %v388
    %506 = vmatprep.subr.bf16.mxu0 0
    %507 = vmatpush1.bf16.msra.mxu0 %v389
    %508 = vmatprep.mubr.bf16.mxu0 %v67
    %509 = vmatmul.mubr.bf16.gmra.mrb[0].mxu0 %v66
    %v510 = vpop.f32.mrb[0].mxu0
    %v511 = vadd.f32 %v176, %v510
    %v512 = vpop.f32.mrb[0].mxu0
    %v513 = vpop.f32.mrb[0].mxu0
    %v514 = vpop.f32.mrb[0].mxu0
    %515 = vdwg.mxu0
    %516 = vmatprep.subr.bf16.mxu0 0
    %517 = vmatpush1.bf16.msra.mxu0 %v390
    %518 = vmatprep.subr.bf16.mxu0 0
    %519 = vmatpush1.bf16.msra.mxu0 %v391
    %520 = vmatprep.subr.bf16.mxu0 0
    %521 = vmatpush1.bf16.msra.mxu0 %v392
    %522 = vmatprep.subr.bf16.mxu0 0
    %523 = vmatpush1.bf16.msra.mxu0 %v393
    %524 = vmatprep.subr.bf16.mxu0 0
    %525 = vmatpush1.bf16.msra.mxu0 %v394
    %526 = vmatprep.subr.bf16.mxu0 0
    %527 = vmatpush1.bf16.msra.mxu0 %v395
    %528 = vmatprep.subr.bf16.mxu0 0
    %529 = vmatpush1.bf16.msra.mxu0 %v396
    %530 = vmatprep.subr.bf16.mxu0 0
    %531 = vmatpush1.bf16.msra.mxu0 %v397
    %532 = vmatprep.subr.bf16.mxu0 0
    %533 = vmatpush1.bf16.msra.mxu0 %v398
    %534 = vmatprep.subr.bf16.mxu0 0
    %535 = vmatpush1.bf16.msra.mxu0 %v399
    %536 = vmatprep.subr.bf16.mxu0 0
    %537 = vmatpush1.bf16.msra.mxu0 %v400
    %538 = vmatprep.subr.bf16.mxu0 0
    %539 = vmatpush1.bf16.msra.mxu0 %v401
    %540 = vmatprep.subr.bf16.mxu0 0
    %541 = vmatpush1.bf16.msra.mxu0 %v402
    %542 = vmatprep.subr.bf16.mxu0 0
    %543 = vmatpush1.bf16.msra.mxu0 %v403
    %544 = vmatprep.subr.bf16.mxu0 0
    %545 = vmatpush1.bf16.msra.mxu0 %v404
    %546 = vmatprep.subr.bf16.mxu0 0
    %547 = vmatpush1.bf16.msra.mxu0 %v405
    %548 = vmatprep.mubr.bf16.mxu0 %v69
    %549 = vmatmul.mubr.bf16.gmra.mrb[0].mxu0 %v68
    %v550 = vpop.f32.mrb[0].mxu0
    %v551 = vadd.f32 %v511, %v550
    %v552 = vpop.f32.mrb[0].mxu0
    %v553 = vpop.f32.mrb[0].mxu0
    %v554 = vpop.f32.mrb[0].mxu0
    %555 = vdwg.mxu0
    %556 = vmatprep.subr.bf16.mxu0 0
    %557 = vmatpush1.bf16.msra.mxu0 %v406
    %558 = vmatprep.subr.bf16.mxu0 0
    %559 = vmatpush1.bf16.msra.mxu0 %v407
    %560 = vmatprep.subr.bf16.mxu0 0
    %561 = vmatpush1.bf16.msra.mxu0 %v408
    %562 = vmatprep.subr.bf16.mxu0 0
    %563 = vmatpush1.bf16.msra.mxu0 %v409
    %564 = vmatprep.subr.bf16.mxu0 0
    %565 = vmatpush1.bf16.msra.mxu0 %v410
    %566 = vmatprep.subr.bf16.mxu0 0
    %567 = vmatpush1.bf16.msra.mxu0 %v411
    %568 = vmatprep.subr.bf16.mxu0 0
    %569 = vmatpush1.bf16.msra.mxu0 %v412
    %570 = vmatprep.subr.bf16.mxu0 0
    %571 = vmatpush1.bf16.msra.mxu0 %v413
    %572 = vmatprep.subr.bf16.mxu0 0
    %573 = vmatpush1.bf16.msra.mxu0 %v414
    %574 = vmatprep.subr.bf16.mxu0 0
    %575 = vmatpush1.bf16.msra.mxu0 %v415
    %576 = vmatprep.subr.bf16.mxu0 0
    %577 = vmatpush1.bf16.msra.mxu0 %v416
    %578 = vmatprep.subr.bf16.mxu0 0
    %579 = vmatpush1.bf16.msra.mxu0 %v417
    %580 = vmatprep.subr.bf16.mxu0 0
    %581 = vmatpush1.bf16.msra.mxu0 %v418
    %582 = vmatprep.subr.bf16.mxu0 0
    %583 = vmatpush1.bf16.msra.mxu0 %v419
    %584 = vmatprep.subr.bf16.mxu0 0
    %585 = vmatpush1.bf16.msra.mxu0 %v420
    %586 = vmatprep.subr.bf16.mxu0 0
    %587 = vmatpush1.bf16.msra.mxu0 %v421
    %588 = vmatprep.mubr.bf16.mxu0 %v71
    %589 = vmatmul.mubr.bf16.gmra.mrb[0].mxu0 %v70
    %v590 = vpop.f32.mrb[0].mxu0
    %v591 = vadd.f32 %v551, %v590
    %v592 = vpop.f32.mrb[0].mxu0
    %v593 = vpop.f32.mrb[0].mxu0
    %v594 = vpop.f32.mrb[0].mxu0
    %595 = vdwg.mxu0
    %596 = vmatprep.subr.bf16.mxu0 0
    %597 = vmatpush1.bf16.msra.mxu0 %v422
    %598 = vmatprep.subr.bf16.mxu0 0
    %599 = vmatpush1.bf16.msra.mxu0 0
    %600 = vmatprep.subr.bf16.mxu0 0
    %601 = vmatpush1.bf16.msra.mxu0 0
    %602 = vmatprep.subr.bf16.mxu0 0
    %603 = vmatpush1.bf16.msra.mxu0 0
    %604 = vmatprep.subr.bf16.mxu0 0
    %605 = vmatpush1.bf16.msra.mxu0 0
    %606 = vmatprep.subr.bf16.mxu0 0
    %607 = vmatpush1.bf16.msra.mxu0 0
    %608 = vmatprep.subr.bf16.mxu0 0
    %609 = vmatpush1.bf16.msra.mxu0 0
    %610 = vmatprep.subr.bf16.mxu0 0
    %611 = vmatpush1.bf16.msra.mxu0 0
    %612 = vmatprep.subr.bf16.mxu0 0
    %613 = vmatpush1.bf16.msra.mxu0 0
    %614 = vmatprep.subr.bf16.mxu0 0
    %615 = vmatpush1.bf16.msra.mxu0 0
    %616 = vmatprep.subr.bf16.mxu0 0
    %617 = vmatpush1.bf16.msra.mxu0 0
    %618 = vmatprep.subr.bf16.mxu0 0
    %619 = vmatpush1.bf16.msra.mxu0 0
    %620 = vmatprep.subr.bf16.mxu0 0
    %621 = vmatpush1.bf16.msra.mxu0 0
    %622 = vmatprep.subr.bf16.mxu0 0
    %623 = vmatpush1.bf16.msra.mxu0 0
    %624 = vmatprep.subr.bf16.mxu0 0
    %625 = vmatpush1.bf16.msra.mxu0 0
    %626 = vmatprep.subr.bf16.mxu0 0
    %627 = vmatpush1.bf16.msra.mxu0 0
    %628 = vmatprep.mubr.bf16.mxu0 0
    %629 = vmatmul.mubr.bf16.gmra.mrb[0].mxu0 %v474
    %v630 = vpop.f32.mrb[0].mxu0
    %v631 = vadd.f32 %v591, %v630
    %v632 = vpop.f32.mrb[0].mxu0
    %v633 = vpop.f32.mrb[0].mxu0
    %v634 = vpop.f32.mrb[0].mxu0
    %635 = vdwg.mxu0
    %v636 = vmax.f32 %v631, 0.0
    %v637 = vpack.c.bf16 %v636, %v636
    %v638 = vld [vmem:[%s3] sm:$0xf]
    %v639 = vld [vmem:[%s3 + $0x4] sm:$0xf]
    %v640 = vld [vmem:[%s3 + $0x8] sm:$0xf]
    %v641 = vld [vmem:[%s3 + $0xc] sm:$0xf]
    %v642 = vld [vmem:[%s3 + $0x10] sm:$0xf]
    %v643 = vld [vmem:[%s3 + $0x14] sm:$0xf]
    %v644 = vld [vmem:[%s3 + $0x18] sm:$0xf]
    %v645 = vld [vmem:[%s3 + $0x1c] sm:$0xf]
    %v646 = vld [vmem:[%s4] sm:$0x1]
    %v648 = vlaneseq
    %v649 = vshrl.u32 %v648, 7
    %v650 = vsub.s32 0, %v649
    %v651 = vrot.slane %v646, %v650
    %v661 = vunpack.c.l.b16 %v638
    %v662 = vunpack.c.l.b16 %v639
    %v663 = vunpack.c.l.b16 %v640
    %v664 = vunpack.c.l.b16 %v641
    %v665 = vunpack.c.l.b16 %v642
    %v666 = vunpack.c.l.b16 %v643
    %v667 = vunpack.c.l.b16 %v644
    %v668 = vunpack.c.l.b16 %v645
    %v669 = vpack.c.b16 %v662, %v661
    %v670 = vpack.c.b16 %v664, %v663
    %v671 = vpack.c.b16 %v666, %v665
    %v672 = vpack.c.b16 %v668, %v667
    %vm677 = vcmask 523264
    %v679 = vsel %vm677, %v637, 0
    %681 = vmatprep.subr.bf16.mxu0 0
    %682 = vmatpush1.bf16.msra.mxu0 %v669
    %683 = vmatprep.subr.bf16.mxu0 0
    %684 = vmatpush1.bf16.msra.mxu0 %v670
    %685 = vmatprep.subr.bf16.mxu0 0
    %686 = vmatpush1.bf16.msra.mxu0 %v671
    %687 = vmatprep.subr.bf16.mxu0 0
    %688 = vmatpush1.bf16.msra.mxu0 %v672
    %689 = vmatprep.subr.bf16.mxu0 0
    %690 = vmatpush1.bf16.msra.mxu0 0
    %691 = vmatprep.subr.bf16.mxu0 0
    %692 = vmatpush1.bf16.msra.mxu0 0
    %693 = vmatprep.subr.bf16.mxu0 0
    %694 = vmatpush1.bf16.msra.mxu0 0
    %695 = vmatprep.subr.bf16.mxu0 0
    %696 = vmatpush1.bf16.msra.mxu0 0
    %697 = vmatprep.subr.bf16.mxu0 0
    %698 = vmatpush1.bf16.msra.mxu0 0
    %699 = vmatprep.subr.bf16.mxu0 0
    %700 = vmatpush1.bf16.msra.mxu0 0
    %701 = vmatprep.subr.bf16.mxu0 0
    %702 = vmatpush1.bf16.msra.mxu0 0
    %703 = vmatprep.subr.bf16.mxu0 0
    %704 = vmatpush1.bf16.msra.mxu0 0
    %705 = vmatprep.subr.bf16.mxu0 0
    %706 = vmatpush1.bf16.msra.mxu0 0
    %707 = vmatprep.subr.bf16.mxu0 0
    %708 = vmatpush1.bf16.msra.mxu0 0
    %709 = vmatprep.subr.bf16.mxu0 0
    %710 = vmatpush1.bf16.msra.mxu0 0
    %711 = vmatprep.subr.bf16.mxu0 0
    %712 = vmatpush1.bf16.msra.mxu0 0
    %713 = vmatprep.mubr.bf16.mxu0 0
    %714 = vmatmul.mubr.bf16.gmra.mrb[0].mxu0 %v679
    %v715 = vpop.f32.mrb[0].mxu0
    %v716 = vadd.f32 %v651, %v715
    %v717 = vpop.f32.mrb[0].mxu0
    %v718 = vpop.f32.mrb[0].mxu0
    %v719 = vpop.f32.mrb[0].mxu0
    %720 = vdwg.mxu0
    %vm721 = vcmask 74752
    %722 = vst.msk [vmem:[#allocation2] sm:$0x3] %vm721, %v716
    // Predicated region
    $region22: #{interfaced_model_forward.7} parent=1 // pred_check
      _
    $region23: #{interfaced_model_forward.7} parent=1 // pred_check_branch
      %724 = sbr.rel (0) target = $region25
    $region24: #{interfaced_model_forward.7} parent=1 // pred_region
      %s726 = ssub.s32 32, 32
      %727 = vsyncadd [#allocation3], %s726
      %s729 = sshll.u32 [#allocation2], 4
      %s730 = int_to_ptr.vmem [resolvable:$true] %s729
      %732 = dma.vmem_to_hbm [thread:$0]  %s730, 32, %s5, [#allocation3]
    $region25: #{interfaced_model_forward.7} parent=1 // pred_fallthru
      _
    // Predicated region
    $region26: #{interfaced_model_forward.7} parent=1 // pred_check
      _
    $region27: #{interfaced_model_forward.7} parent=1 // pred_check_branch
      %734 = sbr.rel (0) target = $region29
    $region28: #{interfaced_model_forward.7} parent=1 // pred_region
      %735 = dma.done [#allocation3], 32
    $region29: #{interfaced_model_forward.7} parent=1 // pred_fallthru
      _
    %736 = vsyncpa [#allocation3], 1

</llo_original>
